<compile_context>
chip_gen: v7x
topology: tpu7x:2x2x1
jax: 0.10.0
libtpu: 0.0.40
codegen_flags: <defaults>
</compile_context>

<pallas_src>
import jax
import jax.numpy as jnp
from jax.experimental import pallas as pl
from jax.experimental.pallas import tpu as pltpu

# ---- module hyper-parameters (mirrors nn.Module __init__) ----
VOCAB = 20
HIDDEN = 32
LATENT = 16
PAD_IDX = 0
NUM_LAYERS = 2
DROPOUT = 0.0  # eval-mode forward; inter-layer GRU dropout inactive


# ---------------- fused Pallas kernel ----------------

def _make_encoder_kernel(T, B, H, L, num_layers):
    G3 = 3 * H
    G6 = 6 * H

    def kernel(*refs):
        x_ref, lens_ref = refs[0], refs[1]               # (T*B, H), (B, 1)
        layer_refs = refs[2:2 + 4 * num_layers]
        wh_ref, bh_ref = refs[2 + 4 * num_layers:4 + 4 * num_layers]
        mean_ref, logvar_ref = refs[4 + 4 * num_layers:6 + 4 * num_layers]
        gi_ref, seq_ref = refs[6 + 4 * num_layers:8 + 4 * num_layers]

        lens = lens_ref[...]                             # (B, 1) int32

        finals = []
        for l in range(num_layers):
            w_in_ref, b_in_ref, whh_ref, bhn_ref = layer_refs[4 * l:4 * l + 4]
            src = x_ref if l == 0 else seq_ref           # (T*B, Din)

            # --- hoisted sequence-wide input projection: one MXU matmul for
            #     the whole sequence, both directions, r/z biases pre-added ---
            gi_ref[...] = (jnp.dot(src[...], w_in_ref[...],
                                   preferred_element_type=jnp.float32)
                           + b_in_ref[...])              # (T*B, 6H)

            whh = whh_ref[...]                           # (2H, 6H) block-diag
            bhn = jnp.broadcast_to(bhn_ref[...], (B, 2 * H))  # hoisted broadcast
            bhn_f = bhn[:, 0:H]
            bhn_b = bhn[:, H:2 * H]

            h = jnp.zeros((B, 2 * H), jnp.float32)       # [h_fwd | h_bwd]
            write_seq = (l + 1) < num_layers

            # fully unrolled time loop: only h @ W_hh sits on the serial path
            for i in range(T):
                tf = i
                tb = T - 1 - i
                gh = jnp.dot(h, whh,
                             preferred_element_type=jnp.float32)   # (B, 6H)
                gif = gi_ref[tf * B:(tf + 1) * B, 0:G3]  # (B, 3H) fwd gate inputs
                gib = gi_ref[tb * B:(tb + 1) * B, G3:G6]  # (B, 3H) bwd gate inputs

                # forward direction (time tf)
                r_f = jax.nn.sigmoid(gif[:, 0:H] + gh[:, 0:H])
                z_f = jax.nn.sigmoid(gif[:, H:2 * H] + gh[:, H:2 * H])
                n_f = jnp.tanh(gif[:, 2 * H:3 * H]
                               + r_f * (gh[:, 2 * H:3 * H] + bhn_f))
                h_f = h[:, 0:H]
                h_f = jnp.where(tf < lens, (1.0 - z_f) * n_f + z_f * h_f, h_f)

                # backward direction (time tb)
                r_b = jax.nn.sigmoid(gib[:, 0:H] + gh[:, G3:G3 + H])
                z_b = jax.nn.sigmoid(gib[:, H:2 * H] + gh[:, G3 + H:G3 + 2 * H])
                n_b = jnp.tanh(gib[:, 2 * H:3 * H]
                               + r_b * (gh[:, G3 + 2 * H:G6] + bhn_b))
                h_b = h[:, H:2 * H]
                h_b = jnp.where(tb < lens, (1.0 - z_b) * n_b + z_b * h_b, h_b)

                h = jnp.concatenate([h_f, h_b], axis=-1)

                if write_seq:
                    # layer output sequence stays in VMEM scratch (no HBM trip).
                    # NOTE: fwd half holds the carried state at padded steps
                    # (torch pad_packed would give zeros); next-layer masking
                    # makes this irrelevant for the returned mean/logvar.
                    seq_ref[tf * B:(tf + 1) * B, 0:H] = h_f
                    seq_ref[tb * B:(tb + 1) * B, H:2 * H] = h_b

            finals.append(h)                             # (B, 2H) = [fwd | bwd]

        # heads fused into the same kernel: one (B, 4H) x (4H, 2L) matmul
        hiddens = jnp.concatenate(finals, axis=-1)       # (B, num_layers*2*H)
        heads = (jnp.dot(hiddens, wh_ref[...],
                         preferred_element_type=jnp.float32) + bh_ref[...])
        mean_ref[...] = heads[:, 0:L]
        logvar_ref[...] = heads[:, L:2 * L]

    return kernel


# ---------------- wrapper ----------------

def smiles_encoder_forward(packed, inps, lens):
    B, T = inps.shape
    H, L = HIDDEN, LATENT

    # token ids -> embeddings, time-major and flattened to (T*B, H) so the
    # per-layer input projection is a single 2-D matmul inside the kernel.
    x2d = jnp.take(packed["emb"], jnp.transpose(inps).reshape(-1), axis=0)
    x2d = x2d.astype(jnp.float32)                        # (T*B, H)
    lens2d = lens.reshape(B, 1).astype(jnp.int32)

    flat_weights = []
    for (w_in, b_in, whh, bhn) in packed["layers"]:
        flat_weights += [w_in, b_in, whh, bhn]
    flat_weights += [packed["w_heads"], packed["b_heads"]]

    kernel = _make_encoder_kernel(T, B, H, L, NUM_LAYERS)
    mean, logvar = pl.pallas_call(
        kernel,
        out_shape=(jax.ShapeDtypeStruct((B, L), jnp.float32),
                   jax.ShapeDtypeStruct((B, L), jnp.float32)),
        scratch_shapes=[
            pltpu.VMEM((T * B, 6 * HIDDEN), jnp.float32),  # hoisted gate inputs
            pltpu.VMEM((T * B, 2 * HIDDEN), jnp.float32),  # layer output sequence
        ],
    )(x2d, lens2d, *flat_weights)
    return mean, logvar


# ---------------- parameter init & packing ----------------

def init_params(key):
    keys = jax.random.split(key, 6)
    emb = jax.random.normal(keys[0], (VOCAB, HIDDEN), jnp.float32)
    emb = emb.at[PAD_IDX].set(0.0)                       # padding_idx row = 0

    k = 1.0 / (HIDDEN ** 0.5)
    sub = jax.random.split(keys[1], NUM_LAYERS * 2 * 4)
    gru, i = [], 0
    for l in range(NUM_LAYERS):
        din = HIDDEN if l == 0 else 2 * HIDDEN
        dirs = []
        for _d in range(2):                              # fwd, bwd
            wih = jax.random.uniform(sub[i], (din, 3 * HIDDEN), jnp.float32, -k, k); i += 1
            whh = jax.random.uniform(sub[i], (HIDDEN, 3 * HIDDEN), jnp.float32, -k, k); i += 1
            bih = jax.random.uniform(sub[i], (1, 3 * HIDDEN), jnp.float32, -k, k); i += 1
            bhh = jax.random.uniform(sub[i], (1, 3 * HIDDEN), jnp.float32, -k, k); i += 1
            dirs.append(dict(wih=wih, whh=whh, bih=bih, bhh=bhh))
        gru.append(dirs)

    in_dim = NUM_LAYERS * 2 * HIDDEN
    k2 = 1.0 / (in_dim ** 0.5)
    wm = jax.random.uniform(keys[2], (in_dim, LATENT), jnp.float32, -k2, k2)
    bm = jax.random.uniform(keys[3], (1, LATENT), jnp.float32, -k2, k2)
    wl = jax.random.uniform(keys[4], (in_dim, LATENT), jnp.float32, -k2, k2)
    bl = jax.random.uniform(keys[5], (1, LATENT), jnp.float32, -k2, k2)
    return dict(emb=emb, gru=gru, wm=wm, bm=bm, wl=wl, bl=bl)


def pack_params(params):
    """One-time repacking for the fused kernel (done outside jit)."""
    H = HIDDEN
    layers = []
    for l in range(NUM_LAYERS):
        wf, wb = params["gru"][l][0], params["gru"][l][1]
        # input projection weights for both directions: (Din, 6H)
        w_in = jnp.concatenate([wf["wih"], wb["wih"]], axis=1)

        def _bias(d):  # b_ih with b_hh pre-added for r/z gates (n kept separate)
            bih, bhh = d["bih"][0], d["bhh"][0]
            return jnp.concatenate([bih[0:2 * H] + bhh[0:2 * H], bih[2 * H:3 * H]])
        b_in = jnp.concatenate([_bias(wf), _bias(wb)])[None, :]       # (1, 6H)

        # block-diagonal recurrent weight: single 192-lane dot per step
        whh = jnp.zeros((2 * H, 6 * H), jnp.float32)
        whh = whh.at[0:H, 0:3 * H].set(wf["whh"])
        whh = whh.at[H:2 * H, 3 * H:6 * H].set(wb["whh"])

        b_hn = jnp.concatenate([wf["bhh"][0, 2 * H:3 * H],
                                wb["bhh"][0, 2 * H:3 * H]])[None, :]  # (1, 2H)
        layers.append((w_in, b_in, whh, b_hn))

    w_heads = jnp.concatenate([params["wm"], params["wl"]], axis=1)   # (4H, 2L)
    b_heads = jnp.concatenate([params["bm"], params["bl"]], axis=1)   # (1, 2L)
    return dict(emb=params["emb"], layers=layers, w_heads=w_heads, b_heads=b_heads)


if __name__ == "__main__":
    key = jax.random.PRNGKey(0)
    pkey, ikey = jax.random.split(key)
    params = init_params(pkey)
    packed = pack_params(params)

    B, T = 2, 8
    lens = jnp.array([8, 5], dtype=jnp.int32)
    toks = jax.random.randint(ikey, (B, T), 1, VOCAB, dtype=jnp.int32)
    pos = jnp.arange(T)[None, :]
    inps = jnp.where(pos < lens[:, None], toks, PAD_IDX).astype(jnp.int32)

    fwd = jax.jit(smiles_encoder_forward)
    mean, logvar = fwd(packed, inps, lens)
    jax.block_until_ready((mean, logvar))

    assert mean.shape == (B, LATENT) and logvar.shape == (B, LATENT)
    assert bool(jnp.all(jnp.isfinite(mean))) and bool(jnp.all(jnp.isfinite(logvar)))
    print("KERNEL_OK")
</pallas_src>

<mosaic_0001>
module attributes {stable_mosaic.version = 11 : i64} {
  func.func @kernel(%arg0: memref<16x32xf32, #tpu.memory_space<vmem>>, %arg1: memref<2x1xi32, #tpu.memory_space<vmem>>, %arg2: memref<32x192xf32, #tpu.memory_space<vmem>>, %arg3: memref<1x192xf32, #tpu.memory_space<vmem>>, %arg4: memref<64x192xf32, #tpu.memory_space<vmem>>, %arg5: memref<1x64xf32, #tpu.memory_space<vmem>>, %arg6: memref<64x192xf32, #tpu.memory_space<vmem>>, %arg7: memref<1x192xf32, #tpu.memory_space<vmem>>, %arg8: memref<64x192xf32, #tpu.memory_space<vmem>>, %arg9: memref<1x64xf32, #tpu.memory_space<vmem>>, %arg10: memref<128x32xf32, #tpu.memory_space<vmem>>, %arg11: memref<1x32xf32, #tpu.memory_space<vmem>>, %arg12: memref<2x16xf32, #tpu.memory_space<vmem>>, %arg13: memref<2x16xf32, #tpu.memory_space<vmem>>, %arg14: memref<16x192xf32, #tpu.memory_space<vmem>>, %arg15: memref<16x64xf32, #tpu.memory_space<vmem>>) attributes {dimension_semantics = [], scalar_prefetch = 0 : i64, scratch_operands = 2 : i64, tpu.core_type = #tpu.core_type<tc>} {
    %c0 = arith.constant 0 : index
    %c0_0 = arith.constant 0 : index
    %0 = vector.load %arg1[%c0, %c0_0] : memref<2x1xi32, #tpu.memory_space<vmem>>, vector<2x1xi32>
    %c0_1 = arith.constant 0 : index
    %c0_2 = arith.constant 0 : index
    %1 = vector.load %arg0[%c0_1, %c0_2] : memref<16x32xf32, #tpu.memory_space<vmem>>, vector<16x32xf32>
    %c0_3 = arith.constant 0 : index
    %c0_4 = arith.constant 0 : index
    %2 = vector.load %arg2[%c0_3, %c0_4] : memref<32x192xf32, #tpu.memory_space<vmem>>, vector<32x192xf32>
    %cst = arith.constant dense<0.000000e+00> : vector<16x192xf32>
    %3 = tpu.matmul %1, %2, %cst {dimension_numbers = #tpu.dot_dimension_numbers<[1], [0], [0], [1], [0, 0, 1, 1], [], []>} : vector<16x32xf32>, vector<32x192xf32>, vector<16x192xf32> -> vector<16x192xf32>
    %c0_5 = arith.constant 0 : index
    %c0_6 = arith.constant 0 : index
    %4 = vector.load %arg3[%c0_5, %c0_6] : memref<1x192xf32, #tpu.memory_space<vmem>>, vector<1x192xf32>
    %5 = vector.broadcast %4 : vector<1x192xf32> to vector<16x192xf32>
    %6 = arith.addf %3, %5 : vector<16x192xf32>
    %c0_7 = arith.constant 0 : index
    %c0_8 = arith.constant 0 : index
    %7 = vector.load %arg14[%c0_7, %c0_8] : memref<16x192xf32, #tpu.memory_space<vmem>>, vector<16x192xf32>
    tpu.vector_store %arg14[%c0_7, %c0_8], %6 {strides = array<i32>} : memref<16x192xf32, #tpu.memory_space<vmem>>, vector<16x192xf32>,
    %c0_9 = arith.constant 0 : index
    %c0_10 = arith.constant 0 : index
    %8 = vector.load %arg4[%c0_9, %c0_10] : memref<64x192xf32, #tpu.memory_space<vmem>>, vector<64x192xf32>
    %c0_11 = arith.constant 0 : index
    %c0_12 = arith.constant 0 : index
    %9 = vector.load %arg5[%c0_11, %c0_12] : memref<1x64xf32, #tpu.memory_space<vmem>>, vector<1x64xf32>
    %10 = vector.shape_cast %9 : vector<1x64xf32> to vector<1x64xf32>
    %11 = vector.broadcast %10 : vector<1x64xf32> to vector<2x64xf32>
    %12 = vector.extract_strided_slice %11 {offsets = [0, 0], sizes = [2, 32], strides = [1, 1]} : vector<2x64xf32> to vector<2x32xf32>
    %13 = vector.extract_strided_slice %11 {offsets = [0, 32], sizes = [2, 32], strides = [1, 1]} : vector<2x64xf32> to vector<2x32xf32>
    %cst_13 = arith.constant 0.000000e+00 : f32
    %14 = vector.broadcast %cst_13 : f32 to vector<2x64xf32>
    %cst_14 = arith.constant dense<0.000000e+00> : vector<2x192xf32>
    %15 = tpu.matmul %14, %8, %cst_14 {dimension_numbers = #tpu.dot_dimension_numbers<[1], [0], [0], [1], [0, 0, 1, 1], [], []>} : vector<2x64xf32>, vector<64x192xf32>, vector<2x192xf32> -> vector<2x192xf32>
    %c0_15 = arith.constant 0 : index
    %c0_16 = arith.constant 0 : index
    %16 = vector.load %arg14[%c0_15, %c0_16] : memref<16x192xf32, #tpu.memory_space<vmem>>, vector<2x96xf32>
    %c14 = arith.constant 14 : index
    %c96 = arith.constant 96 : index
    %17 = vector.load %arg14[%c14, %c96] : memref<16x192xf32, #tpu.memory_space<vmem>>, vector<2x96xf32>
    %18 = vector.extract_strided_slice %16 {offsets = [0, 0], sizes = [2, 32], strides = [1, 1]} : vector<2x96xf32> to vector<2x32xf32>
    %19 = vector.extract_strided_slice %15 {offsets = [0, 0], sizes = [2, 32], strides = [1, 1]} : vector<2x192xf32> to vector<2x32xf32>
    %20 = arith.addf %18, %19 : vector<2x32xf32>
    %21 = arith.negf %20 : vector<2x32xf32>
    %22 = math.exp %21 : vector<2x32xf32>
    %cst_17 = arith.constant 1.000000e+00 : f32
    %23 = vector.broadcast %cst_17 : f32 to vector<2x32xf32>
    %24 = arith.addf %23, %22 : vector<2x32xf32>
    %25 = arith.divf %23, %24 : vector<2x32xf32>
    %26 = vector.extract_strided_slice %16 {offsets = [0, 32], sizes = [2, 32], strides = [1, 1]} : vector<2x96xf32> to vector<2x32xf32>
    %27 = vector.extract_strided_slice %15 {offsets = [0, 32], sizes = [2, 32], strides = [1, 1]} : vector<2x192xf32> to vector<2x32xf32>
    %28 = arith.addf %26, %27 : vector<2x32xf32>
    %29 = arith.negf %28 : vector<2x32xf32>
    %30 = math.exp %29 : vector<2x32xf32>
    %cst_18 = arith.constant 1.000000e+00 : f32
    %31 = vector.broadcast %cst_18 : f32 to vector<2x32xf32>
    %32 = arith.addf %31, %30 : vector<2x32xf32>
    %33 = arith.divf %31, %32 : vector<2x32xf32>
    %34 = vector.extract_strided_slice %16 {offsets = [0, 64], sizes = [2, 32], strides = [1, 1]} : vector<2x96xf32> to vector<2x32xf32>
    %35 = vector.extract_strided_slice %15 {offsets = [0, 64], sizes = [2, 32], strides = [1, 1]} : vector<2x192xf32> to vector<2x32xf32>
    %36 = arith.addf %35, %12 : vector<2x32xf32>
    %37 = arith.mulf %25, %36 : vector<2x32xf32>
    %38 = arith.addf %34, %37 : vector<2x32xf32>
    %39 = math.tanh %38 : vector<2x32xf32>
    %40 = vector.extract_strided_slice %14 {offsets = [0, 0], sizes = [2, 32], strides = [1, 1]} : vector<2x64xf32> to vector<2x32xf32>
    %c0_i32 = arith.constant 0 : i32
    %41 = vector.broadcast %c0_i32 : i32 to vector<2x1xi32>
    %42 = arith.cmpi sgt, %0, %41 : vector<2x1xi32>
    %cst_19 = arith.constant 1.000000e+00 : f32
    %43 = vector.broadcast %cst_19 : f32 to vector<2x32xf32>
    %44 = arith.subf %43, %33 : vector<2x32xf32>
    %45 = arith.mulf %44, %39 : vector<2x32xf32>
    %46 = arith.mulf %33, %40 : vector<2x32xf32>
    %47 = arith.addf %45, %46 : vector<2x32xf32>
    %48 = vector.shape_cast %42 : vector<2x1xi1> to vector<2x1xi1>
    %49 = vector.broadcast %48 : vector<2x1xi1> to vector<2x32xi1>
    %50 = arith.select %49, %47, %40 : vector<2x32xi1>, vector<2x32xf32>
    %51 = vector.extract_strided_slice %17 {offsets = [0, 0], sizes = [2, 32], strides = [1, 1]} : vector<2x96xf32> to vector<2x32xf32>
    %52 = vector.extract_strided_slice %15 {offsets = [0, 96], sizes = [2, 32], strides = [1, 1]} : vector<2x192xf32> to vector<2x32xf32>
    %53 = arith.addf %51, %52 : vector<2x32xf32>
    %54 = arith.negf %53 : vector<2x32xf32>
    %55 = math.exp %54 : vector<2x32xf32>
    %cst_20 = arith.constant 1.000000e+00 : f32
    %56 = vector.broadcast %cst_20 : f32 to vector<2x32xf32>
    %57 = arith.addf %56, %55 : vector<2x32xf32>
    %58 = arith.divf %56, %57 : vector<2x32xf32>
    %59 = vector.extract_strided_slice %17 {offsets = [0, 32], sizes = [2, 32], strides = [1, 1]} : vector<2x96xf32> to vector<2x32xf32>
    %60 = vector.extract_strided_slice %15 {offsets = [0, 128], sizes = [2, 32], strides = [1, 1]} : vector<2x192xf32> to vector<2x32xf32>
    %61 = arith.addf %59, %60 : vector<2x32xf32>
    %62 = arith.negf %61 : vector<2x32xf32>
    %63 = math.exp %62 : vector<2x32xf32>
    %cst_21 = arith.constant 1.000000e+00 : f32
    %64 = vector.broadcast %cst_21 : f32 to vector<2x32xf32>
    %65 = arith.addf %64, %63 : vector<2x32xf32>
    %66 = arith.divf %64, %65 : vector<2x32xf32>
    %67 = vector.extract_strided_slice %17 {offsets = [0, 64], sizes = [2, 32], strides = [1, 1]} : vector<2x96xf32> to vector<2x32xf32>
    %68 = vector.extract_strided_slice %15 {offsets = [0, 160], sizes = [2, 32], strides = [1, 1]} : vector<2x192xf32> to vector<2x32xf32>
    %69 = arith.addf %68, %13 : vector<2x32xf32>
    %70 = arith.mulf %58, %69 : vector<2x32xf32>
    %71 = arith.addf %67, %70 : vector<2x32xf32>
    %72 = math.tanh %71 : vector<2x32xf32>
    %73 = vector.extract_strided_slice %14 {offsets = [0, 32], sizes = [2, 32], strides = [1, 1]} : vector<2x64xf32> to vector<2x32xf32>
    %c7_i32 = arith.constant 7 : i32
    %74 = vector.broadcast %c7_i32 : i32 to vector<2x1xi32>
    %75 = arith.cmpi sgt, %0, %74 : vector<2x1xi32>
    %cst_22 = arith.constant 1.000000e+00 : f32
    %76 = vector.broadcast %cst_22 : f32 to vector<2x32xf32>
    %77 = arith.subf %76, %66 : vector<2x32xf32>
    %78 = arith.mulf %77, %72 : vector<2x32xf32>
    %79 = arith.mulf %66, %73 : vector<2x32xf32>
    %80 = arith.addf %78, %79 : vector<2x32xf32>
    %81 = vector.shape_cast %75 : vector<2x1xi1> to vector<2x1xi1>
    %82 = vector.broadcast %81 : vector<2x1xi1> to vector<2x32xi1>
    %83 = arith.select %82, %80, %73 : vector<2x32xi1>, vector<2x32xf32>
    %84 = tpu.concatenate %50, %83 in 1 : vector<2x32xf32>, vector<2x32xf32> -> vector<2x64xf32>
    %c0_23 = arith.constant 0 : index
    %c0_24 = arith.constant 0 : index
    %85 = vector.load %arg15[%c0_23, %c0_24] : memref<16x64xf32, #tpu.memory_space<vmem>>, vector<2x32xf32>
    tpu.vector_store %arg15[%c0_23, %c0_24], %50 {strides = array<i32>} : memref<16x64xf32, #tpu.memory_space<vmem>>, vector<2x32xf32>,
    %c14_25 = arith.constant 14 : index
    %c32 = arith.constant 32 : index
    %86 = vector.load %arg15[%c14_25, %c32] : memref<16x64xf32, #tpu.memory_space<vmem>>, vector<2x32xf32>
    tpu.vector_store %arg15[%c14_25, %c32], %83 {strides = array<i32>} : memref<16x64xf32, #tpu.memory_space<vmem>>, vector<2x32xf32>,
    %cst_26 = arith.constant dense<0.000000e+00> : vector<2x192xf32>
    %87 = tpu.matmul %84, %8, %cst_26 {dimension_numbers = #tpu.dot_dimension_numbers<[1], [0], [0], [1], [0, 0, 1, 1], [], []>} : vector<2x64xf32>, vector<64x192xf32>, vector<2x192xf32> -> vector<2x192xf32>
    %c2 = arith.constant 2 : index
    %c0_27 = arith.constant 0 : index
    %88 = vector.load %arg14[%c2, %c0_27] : memref<16x192xf32, #tpu.memory_space<vmem>>, vector<2x96xf32>
    %c12 = arith.constant 12 : index
    %c96_28 = arith.constant 96 : index
    %89 = vector.load %arg14[%c12, %c96_28] : memref<16x192xf32, #tpu.memory_space<vmem>>, vector<2x96xf32>
    %90 = vector.extract_strided_slice %88 {offsets = [0, 0], sizes = [2, 32], strides = [1, 1]} : vector<2x96xf32> to vector<2x32xf32>
    %91 = vector.extract_strided_slice %87 {offsets = [0, 0], sizes = [2, 32], strides = [1, 1]} : vector<2x192xf32> to vector<2x32xf32>
    %92 = arith.addf %90, %91 : vector<2x32xf32>
    %93 = arith.negf %92 : vector<2x32xf32>
    %94 = math.exp %93 : vector<2x32xf32>
    %cst_29 = arith.constant 1.000000e+00 : f32
    %95 = vector.broadcast %cst_29 : f32 to vector<2x32xf32>
    %96 = arith.addf %95, %94 : vector<2x32xf32>
    %97 = arith.divf %95, %96 : vector<2x32xf32>
    %98 = vector.extract_strided_slice %88 {offsets = [0, 32], sizes = [2, 32], strides = [1, 1]} : vector<2x96xf32> to vector<2x32xf32>
    %99 = vector.extract_strided_slice %87 {offsets = [0, 32], sizes = [2, 32], strides = [1, 1]} : vector<2x192xf32> to vector<2x32xf32>
    %100 = arith.addf %98, %99 : vector<2x32xf32>
    %101 = arith.negf %100 : vector<2x32xf32>
    %102 = math.exp %101 : vector<2x32xf32>
    %cst_30 = arith.constant 1.000000e+00 : f32
    %103 = vector.broadcast %cst_30 : f32 to vector<2x32xf32>
    %104 = arith.addf %103, %102 : vector<2x32xf32>
    %105 = arith.divf %103, %104 : vector<2x32xf32>
    %106 = vector.extract_strided_slice %88 {offsets = [0, 64], sizes = [2, 32], strides = [1, 1]} : vector<2x96xf32> to vector<2x32xf32>
    %107 = vector.extract_strided_slice %87 {offsets = [0, 64], sizes = [2, 32], strides = [1, 1]} : vector<2x192xf32> to vector<2x32xf32>
    %108 = arith.addf %107, %12 : vector<2x32xf32>
    %109 = arith.mulf %97, %108 : vector<2x32xf32>
    %110 = arith.addf %106, %109 : vector<2x32xf32>
    %111 = math.tanh %110 : vector<2x32xf32>
    %112 = vector.extract_strided_slice %84 {offsets = [0, 0], sizes = [2, 32], strides = [1, 1]} : vector<2x64xf32> to vector<2x32xf32>
    %c1_i32 = arith.constant 1 : i32
    %113 = vector.broadcast %c1_i32 : i32 to vector<2x1xi32>
    %114 = arith.cmpi sgt, %0, %113 : vector<2x1xi32>
    %cst_31 = arith.constant 1.000000e+00 : f32
    %115 = vector.broadcast %cst_31 : f32 to vector<2x32xf32>
    %116 = arith.subf %115, %105 : vector<2x32xf32>
    %117 = arith.mulf %116, %111 : vector<2x32xf32>
    %118 = arith.mulf %105, %112 : vector<2x32xf32>
    %119 = arith.addf %117, %118 : vector<2x32xf32>
    %120 = vector.shape_cast %114 : vector<2x1xi1> to vector<2x1xi1>
    %121 = vector.broadcast %120 : vector<2x1xi1> to vector<2x32xi1>
    %122 = arith.select %121, %119, %112 : vector<2x32xi1>, vector<2x32xf32>
    %123 = vector.extract_strided_slice %89 {offsets = [0, 0], sizes = [2, 32], strides = [1, 1]} : vector<2x96xf32> to vector<2x32xf32>
    %124 = vector.extract_strided_slice %87 {offsets = [0, 96], sizes = [2, 32], strides = [1, 1]} : vector<2x192xf32> to vector<2x32xf32>
    %125 = arith.addf %123, %124 : vector<2x32xf32>
    %126 = arith.negf %125 : vector<2x32xf32>
    %127 = math.exp %126 : vector<2x32xf32>
    %cst_32 = arith.constant 1.000000e+00 : f32
    %128 = vector.broadcast %cst_32 : f32 to vector<2x32xf32>
    %129 = arith.addf %128, %127 : vector<2x32xf32>
    %130 = arith.divf %128, %129 : vector<2x32xf32>
    %131 = vector.extract_strided_slice %89 {offsets = [0, 32], sizes = [2, 32], strides = [1, 1]} : vector<2x96xf32> to vector<2x32xf32>
    %132 = vector.extract_strided_slice %87 {offsets = [0, 128], sizes = [2, 32], strides = [1, 1]} : vector<2x192xf32> to vector<2x32xf32>
    %133 = arith.addf %131, %132 : vector<2x32xf32>
    %134 = arith.negf %133 : vector<2x32xf32>
    %135 = math.exp %134 : vector<2x32xf32>
    %cst_33 = arith.constant 1.000000e+00 : f32
    %136 = vector.broadcast %cst_33 : f32 to vector<2x32xf32>
    %137 = arith.addf %136, %135 : vector<2x32xf32>
    %138 = arith.divf %136, %137 : vector<2x32xf32>
    %139 = vector.extract_strided_slice %89 {offsets = [0, 64], sizes = [2, 32], strides = [1, 1]} : vector<2x96xf32> to vector<2x32xf32>
    %140 = vector.extract_strided_slice %87 {offsets = [0, 160], sizes = [2, 32], strides = [1, 1]} : vector<2x192xf32> to vector<2x32xf32>
    %141 = arith.addf %140, %13 : vector<2x32xf32>
    %142 = arith.mulf %130, %141 : vector<2x32xf32>
    %143 = arith.addf %139, %142 : vector<2x32xf32>
    %144 = math.tanh %143 : vector<2x32xf32>
    %145 = vector.extract_strided_slice %84 {offsets = [0, 32], sizes = [2, 32], strides = [1, 1]} : vector<2x64xf32> to vector<2x32xf32>
    %c6_i32 = arith.constant 6 : i32
    %146 = vector.broadcast %c6_i32 : i32 to vector<2x1xi32>
    %147 = arith.cmpi sgt, %0, %146 : vector<2x1xi32>
    %cst_34 = arith.constant 1.000000e+00 : f32
    %148 = vector.broadcast %cst_34 : f32 to vector<2x32xf32>
    %149 = arith.subf %148, %138 : vector<2x32xf32>
    %150 = arith.mulf %149, %144 : vector<2x32xf32>
    %151 = arith.mulf %138, %145 : vector<2x32xf32>
    %152 = arith.addf %150, %151 : vector<2x32xf32>
    %153 = vector.shape_cast %147 : vector<2x1xi1> to vector<2x1xi1>
    %154 = vector.broadcast %153 : vector<2x1xi1> to vector<2x32xi1>
    %155 = arith.select %154, %152, %145 : vector<2x32xi1>, vector<2x32xf32>
    %156 = tpu.concatenate %122, %155 in 1 : vector<2x32xf32>, vector<2x32xf32> -> vector<2x64xf32>
    %c2_35 = arith.constant 2 : index
    %c0_36 = arith.constant 0 : index
    %157 = vector.load %arg15[%c2_35, %c0_36] : memref<16x64xf32, #tpu.memory_space<vmem>>, vector<2x32xf32>
    tpu.vector_store %arg15[%c2_35, %c0_36], %122 {strides = array<i32>} : memref<16x64xf32, #tpu.memory_space<vmem>>, vector<2x32xf32>,
    %c12_37 = arith.constant 12 : index
    %c32_38 = arith.constant 32 : index
    %158 = vector.load %arg15[%c12_37, %c32_38] : memref<16x64xf32, #tpu.memory_space<vmem>>, vector<2x32xf32>
    tpu.vector_store %arg15[%c12_37, %c32_38], %155 {strides = array<i32>} : memref<16x64xf32, #tpu.memory_space<vmem>>, vector<2x32xf32>,
    %cst_39 = arith.constant dense<0.000000e+00> : vector<2x192xf32>
    %159 = tpu.matmul %156, %8, %cst_39 {dimension_numbers = #tpu.dot_dimension_numbers<[1], [0], [0], [1], [0, 0, 1, 1], [], []>} : vector<2x64xf32>, vector<64x192xf32>, vector<2x192xf32> -> vector<2x192xf32>
    %c4 = arith.constant 4 : index
    %c0_40 = arith.constant 0 : index
    %160 = vector.load %arg14[%c4, %c0_40] : memref<16x192xf32, #tpu.memory_space<vmem>>, vector<2x96xf32>
    %c10 = arith.constant 10 : index
    %c96_41 = arith.constant 96 : index
    %161 = vector.load %arg14[%c10, %c96_41] : memref<16x192xf32, #tpu.memory_space<vmem>>, vector<2x96xf32>
    %162 = vector.extract_strided_slice %160 {offsets = [0, 0], sizes = [2, 32], strides = [1, 1]} : vector<2x96xf32> to vector<2x32xf32>
    %163 = vector.extract_strided_slice %159 {offsets = [0, 0], sizes = [2, 32], strides = [1, 1]} : vector<2x192xf32> to vector<2x32xf32>
    %164 = arith.addf %162, %163 : vector<2x32xf32>
    %165 = arith.negf %164 : vector<2x32xf32>
    %166 = math.exp %165 : vector<2x32xf32>
    %cst_42 = arith.constant 1.000000e+00 : f32
    %167 = vector.broadcast %cst_42 : f32 to vector<2x32xf32>
    %168 = arith.addf %167, %166 : vector<2x32xf32>
    %169 = arith.divf %167, %168 : vector<2x32xf32>
    %170 = vector.extract_strided_slice %160 {offsets = [0, 32], sizes = [2, 32], strides = [1, 1]} : vector<2x96xf32> to vector<2x32xf32>
    %171 = vector.extract_strided_slice %159 {offsets = [0, 32], sizes = [2, 32], strides = [1, 1]} : vector<2x192xf32> to vector<2x32xf32>
    %172 = arith.addf %170, %171 : vector<2x32xf32>
    %173 = arith.negf %172 : vector<2x32xf32>
    %174 = math.exp %173 : vector<2x32xf32>
    %cst_43 = arith.constant 1.000000e+00 : f32
    %175 = vector.broadcast %cst_43 : f32 to vector<2x32xf32>
    %176 = arith.addf %175, %174 : vector<2x32xf32>
    %177 = arith.divf %175, %176 : vector<2x32xf32>
    %178 = vector.extract_strided_slice %160 {offsets = [0, 64], sizes = [2, 32], strides = [1, 1]} : vector<2x96xf32> to vector<2x32xf32>
    %179 = vector.extract_strided_slice %159 {offsets = [0, 64], sizes = [2, 32], strides = [1, 1]} : vector<2x192xf32> to vector<2x32xf32>
    %180 = arith.addf %179, %12 : vector<2x32xf32>
    %181 = arith.mulf %169, %180 : vector<2x32xf32>
    %182 = arith.addf %178, %181 : vector<2x32xf32>
    %183 = math.tanh %182 : vector<2x32xf32>
    %184 = vector.extract_strided_slice %156 {offsets = [0, 0], sizes = [2, 32], strides = [1, 1]} : vector<2x64xf32> to vector<2x32xf32>
    %c2_i32 = arith.constant 2 : i32
    %185 = vector.broadcast %c2_i32 : i32 to vector<2x1xi32>
    %186 = arith.cmpi sgt, %0, %185 : vector<2x1xi32>
    %cst_44 = arith.constant 1.000000e+00 : f32
    %187 = vector.broadcast %cst_44 : f32 to vector<2x32xf32>
    %188 = arith.subf %187, %177 : vector<2x32xf32>
    %189 = arith.mulf %188, %183 : vector<2x32xf32>
    %190 = arith.mulf %177, %184 : vector<2x32xf32>
    %191 = arith.addf %189, %190 : vector<2x32xf32>
    %192 = vector.shape_cast %186 : vector<2x1xi1> to vector<2x1xi1>
    %193 = vector.broadcast %192 : vector<2x1xi1> to vector<2x32xi1>
    %194 = arith.select %193, %191, %184 : vector<2x32xi1>, vector<2x32xf32>
    %195 = vector.extract_strided_slice %161 {offsets = [0, 0], sizes = [2, 32], strides = [1, 1]} : vector<2x96xf32> to vector<2x32xf32>
    %196 = vector.extract_strided_slice %159 {offsets = [0, 96], sizes = [2, 32], strides = [1, 1]} : vector<2x192xf32> to vector<2x32xf32>
    %197 = arith.addf %195, %196 : vector<2x32xf32>
    %198 = arith.negf %197 : vector<2x32xf32>
    %199 = math.exp %198 : vector<2x32xf32>
    %cst_45 = arith.constant 1.000000e+00 : f32
    %200 = vector.broadcast %cst_45 : f32 to vector<2x32xf32>
    %201 = arith.addf %200, %199 : vector<2x32xf32>
    %202 = arith.divf %200, %201 : vector<2x32xf32>
    %203 = vector.extract_strided_slice %161 {offsets = [0, 32], sizes = [2, 32], strides = [1, 1]} : vector<2x96xf32> to vector<2x32xf32>
    %204 = vector.extract_strided_slice %159 {offsets = [0, 128], sizes = [2, 32], strides = [1, 1]} : vector<2x192xf32> to vector<2x32xf32>
    %205 = arith.addf %203, %204 : vector<2x32xf32>
    %206 = arith.negf %205 : vector<2x32xf32>
    %207 = math.exp %206 : vector<2x32xf32>
    %cst_46 = arith.constant 1.000000e+00 : f32
    %208 = vector.broadcast %cst_46 : f32 to vector<2x32xf32>
    %209 = arith.addf %208, %207 : vector<2x32xf32>
    %210 = arith.divf %208, %209 : vector<2x32xf32>
    %211 = vector.extract_strided_slice %161 {offsets = [0, 64], sizes = [2, 32], strides = [1, 1]} : vector<2x96xf32> to vector<2x32xf32>
    %212 = vector.extract_strided_slice %159 {offsets = [0, 160], sizes = [2, 32], strides = [1, 1]} : vector<2x192xf32> to vector<2x32xf32>
    %213 = arith.addf %212, %13 : vector<2x32xf32>
    %214 = arith.mulf %202, %213 : vector<2x32xf32>
    %215 = arith.addf %211, %214 : vector<2x32xf32>
    %216 = math.tanh %215 : vector<2x32xf32>
    %217 = vector.extract_strided_slice %156 {offsets = [0, 32], sizes = [2, 32], strides = [1, 1]} : vector<2x64xf32> to vector<2x32xf32>
    %c5_i32 = arith.constant 5 : i32
    %218 = vector.broadcast %c5_i32 : i32 to vector<2x1xi32>
    %219 = arith.cmpi sgt, %0, %218 : vector<2x1xi32>
    %cst_47 = arith.constant 1.000000e+00 : f32
    %220 = vector.broadcast %cst_47 : f32 to vector<2x32xf32>
    %221 = arith.subf %220, %210 : vector<2x32xf32>
    %222 = arith.mulf %221, %216 : vector<2x32xf32>
    %223 = arith.mulf %210, %217 : vector<2x32xf32>
    %224 = arith.addf %222, %223 : vector<2x32xf32>
    %225 = vector.shape_cast %219 : vector<2x1xi1> to vector<2x1xi1>
    %226 = vector.broadcast %225 : vector<2x1xi1> to vector<2x32xi1>
    %227 = arith.select %226, %224, %217 : vector<2x32xi1>, vector<2x32xf32>
    %228 = tpu.concatenate %194, %227 in 1 : vector<2x32xf32>, vector<2x32xf32> -> vector<2x64xf32>
    %c4_48 = arith.constant 4 : index
    %c0_49 = arith.constant 0 : index
    %229 = vector.load %arg15[%c4_48, %c0_49] : memref<16x64xf32, #tpu.memory_space<vmem>>, vector<2x32xf32>
    tpu.vector_store %arg15[%c4_48, %c0_49], %194 {strides = array<i32>} : memref<16x64xf32, #tpu.memory_space<vmem>>, vector<2x32xf32>,
    %c10_50 = arith.constant 10 : index
    %c32_51 = arith.constant 32 : index
    %230 = vector.load %arg15[%c10_50, %c32_51] : memref<16x64xf32, #tpu.memory_space<vmem>>, vector<2x32xf32>
    tpu.vector_store %arg15[%c10_50, %c32_51], %227 {strides = array<i32>} : memref<16x64xf32, #tpu.memory_space<vmem>>, vector<2x32xf32>,
    %cst_52 = arith.constant dense<0.000000e+00> : vector<2x192xf32>
    %231 = tpu.matmul %228, %8, %cst_52 {dimension_numbers = #tpu.dot_dimension_numbers<[1], [0], [0], [1], [0, 0, 1, 1], [], []>} : vector<2x64xf32>, vector<64x192xf32>, vector<2x192xf32> -> vector<2x192xf32>
    %c6 = arith.constant 6 : index
    %c0_53 = arith.constant 0 : index
    %232 = vector.load %arg14[%c6, %c0_53] : memref<16x192xf32, #tpu.memory_space<vmem>>, vector<2x96xf32>
    %c8 = arith.constant 8 : index
    %c96_54 = arith.constant 96 : index
    %233 = vector.load %arg14[%c8, %c96_54] : memref<16x192xf32, #tpu.memory_space<vmem>>, vector<2x96xf32>
    %234 = vector.extract_strided_slice %232 {offsets = [0, 0], sizes = [2, 32], strides = [1, 1]} : vector<2x96xf32> to vector<2x32xf32>
    %235 = vector.extract_strided_slice %231 {offsets = [0, 0], sizes = [2, 32], strides = [1, 1]} : vector<2x192xf32> to vector<2x32xf32>
    %236 = arith.addf %234, %235 : vector<2x32xf32>
    %237 = arith.negf %236 : vector<2x32xf32>
    %238 = math.exp %237 : vector<2x32xf32>
    %cst_55 = arith.constant 1.000000e+00 : f32
    %239 = vector.broadcast %cst_55 : f32 to vector<2x32xf32>
    %240 = arith.addf %239, %238 : vector<2x32xf32>
    %241 = arith.divf %239, %240 : vector<2x32xf32>
    %242 = vector.extract_strided_slice %232 {offsets = [0, 32], sizes = [2, 32], strides = [1, 1]} : vector<2x96xf32> to vector<2x32xf32>
    %243 = vector.extract_strided_slice %231 {offsets = [0, 32], sizes = [2, 32], strides = [1, 1]} : vector<2x192xf32> to vector<2x32xf32>
    %244 = arith.addf %242, %243 : vector<2x32xf32>
    %245 = arith.negf %244 : vector<2x32xf32>
    %246 = math.exp %245 : vector<2x32xf32>
    %cst_56 = arith.constant 1.000000e+00 : f32
    %247 = vector.broadcast %cst_56 : f32 to vector<2x32xf32>
    %248 = arith.addf %247, %246 : vector<2x32xf32>
    %249 = arith.divf %247, %248 : vector<2x32xf32>
    %250 = vector.extract_strided_slice %232 {offsets = [0, 64], sizes = [2, 32], strides = [1, 1]} : vector<2x96xf32> to vector<2x32xf32>
    %251 = vector.extract_strided_slice %231 {offsets = [0, 64], sizes = [2, 32], strides = [1, 1]} : vector<2x192xf32> to vector<2x32xf32>
    %252 = arith.addf %251, %12 : vector<2x32xf32>
    %253 = arith.mulf %241, %252 : vector<2x32xf32>
    %254 = arith.addf %250, %253 : vector<2x32xf32>
    %255 = math.tanh %254 : vector<2x32xf32>
    %256 = vector.extract_strided_slice %228 {offsets = [0, 0], sizes = [2, 32], strides = [1, 1]} : vector<2x64xf32> to vector<2x32xf32>
    %c3_i32 = arith.constant 3 : i32
    %257 = vector.broadcast %c3_i32 : i32 to vector<2x1xi32>
    %258 = arith.cmpi sgt, %0, %257 : vector<2x1xi32>
    %cst_57 = arith.constant 1.000000e+00 : f32
    %259 = vector.broadcast %cst_57 : f32 to vector<2x32xf32>
    %260 = arith.subf %259, %249 : vector<2x32xf32>
    %261 = arith.mulf %260, %255 : vector<2x32xf32>
    %262 = arith.mulf %249, %256 : vector<2x32xf32>
    %263 = arith.addf %261, %262 : vector<2x32xf32>
    %264 = vector.shape_cast %258 : vector<2x1xi1> to vector<2x1xi1>
    %265 = vector.broadcast %264 : vector<2x1xi1> to vector<2x32xi1>
    %266 = arith.select %265, %263, %256 : vector<2x32xi1>, vector<2x32xf32>
    %267 = vector.extract_strided_slice %233 {offsets = [0, 0], sizes = [2, 32], strides = [1, 1]} : vector<2x96xf32> to vector<2x32xf32>
    %268 = vector.extract_strided_slice %231 {offsets = [0, 96], sizes = [2, 32], strides = [1, 1]} : vector<2x192xf32> to vector<2x32xf32>
    %269 = arith.addf %267, %268 : vector<2x32xf32>
    %270 = arith.negf %269 : vector<2x32xf32>
    %271 = math.exp %270 : vector<2x32xf32>
    %cst_58 = arith.constant 1.000000e+00 : f32
    %272 = vector.broadcast %cst_58 : f32 to vector<2x32xf32>
    %273 = arith.addf %272, %271 : vector<2x32xf32>
    %274 = arith.divf %272, %273 : vector<2x32xf32>
    %275 = vector.extract_strided_slice %233 {offsets = [0, 32], sizes = [2, 32], strides = [1, 1]} : vector<2x96xf32> to vector<2x32xf32>
    %276 = vector.extract_strided_slice %231 {offsets = [0, 128], sizes = [2, 32], strides = [1, 1]} : vector<2x192xf32> to vector<2x32xf32>
    %277 = arith.addf %275, %276 : vector<2x32xf32>
    %278 = arith.negf %277 : vector<2x32xf32>
    %279 = math.exp %278 : vector<2x32xf32>
    %cst_59 = arith.constant 1.000000e+00 : f32
    %280 = vector.broadcast %cst_59 : f32 to vector<2x32xf32>
    %281 = arith.addf %280, %279 : vector<2x32xf32>
    %282 = arith.divf %280, %281 : vector<2x32xf32>
    %283 = vector.extract_strided_slice %233 {offsets = [0, 64], sizes = [2, 32], strides = [1, 1]} : vector<2x96xf32> to vector<2x32xf32>
    %284 = vector.extract_strided_slice %231 {offsets = [0, 160], sizes = [2, 32], strides = [1, 1]} : vector<2x192xf32> to vector<2x32xf32>
    %285 = arith.addf %284, %13 : vector<2x32xf32>
    %286 = arith.mulf %274, %285 : vector<2x32xf32>
    %287 = arith.addf %283, %286 : vector<2x32xf32>
    %288 = math.tanh %287 : vector<2x32xf32>
    %289 = vector.extract_strided_slice %228 {offsets = [0, 32], sizes = [2, 32], strides = [1, 1]} : vector<2x64xf32> to vector<2x32xf32>
    %c4_i32 = arith.constant 4 : i32
    %290 = vector.broadcast %c4_i32 : i32 to vector<2x1xi32>
    %291 = arith.cmpi sgt, %0, %290 : vector<2x1xi32>
    %cst_60 = arith.constant 1.000000e+00 : f32
    %292 = vector.broadcast %cst_60 : f32 to vector<2x32xf32>
    %293 = arith.subf %292, %282 : vector<2x32xf32>
    %294 = arith.mulf %293, %288 : vector<2x32xf32>
    %295 = arith.mulf %282, %289 : vector<2x32xf32>
    %296 = arith.addf %294, %295 : vector<2x32xf32>
    %297 = vector.shape_cast %291 : vector<2x1xi1> to vector<2x1xi1>
    %298 = vector.broadcast %297 : vector<2x1xi1> to vector<2x32xi1>
    %299 = arith.select %298, %296, %289 : vector<2x32xi1>, vector<2x32xf32>
    %300 = tpu.concatenate %266, %299 in 1 : vector<2x32xf32>, vector<2x32xf32> -> vector<2x64xf32>
    %c6_61 = arith.constant 6 : index
    %c0_62 = arith.constant 0 : index
    %301 = vector.load %arg15[%c6_61, %c0_62] : memref<16x64xf32, #tpu.memory_space<vmem>>, vector<2x32xf32>
    tpu.vector_store %arg15[%c6_61, %c0_62], %266 {strides = array<i32>} : memref<16x64xf32, #tpu.memory_space<vmem>>, vector<2x32xf32>,
    %c8_63 = arith.constant 8 : index
    %c32_64 = arith.constant 32 : index
    %302 = vector.load %arg15[%c8_63, %c32_64] : memref<16x64xf32, #tpu.memory_space<vmem>>, vector<2x32xf32>
    tpu.vector_store %arg15[%c8_63, %c32_64], %299 {strides = array<i32>} : memref<16x64xf32, #tpu.memory_space<vmem>>, vector<2x32xf32>,
    %cst_65 = arith.constant dense<0.000000e+00> : vector<2x192xf32>
    %303 = tpu.matmul %300, %8, %cst_65 {dimension_numbers = #tpu.dot_dimension_numbers<[1], [0], [0], [1], [0, 0, 1, 1], [], []>} : vector<2x64xf32>, vector<64x192xf32>, vector<2x192xf32> -> vector<2x192xf32>
    %c8_66 = arith.constant 8 : index
    %c0_67 = arith.constant 0 : index
    %304 = vector.load %arg14[%c8_66, %c0_67] : memref<16x192xf32, #tpu.memory_space<vmem>>, vector<2x96xf32>
    %c6_68 = arith.constant 6 : index
    %c96_69 = arith.constant 96 : index
    %305 = vector.load %arg14[%c6_68, %c96_69] : memref<16x192xf32, #tpu.memory_space<vmem>>, vector<2x96xf32>
    %306 = vector.extract_strided_slice %304 {offsets = [0, 0], sizes = [2, 32], strides = [1, 1]} : vector<2x96xf32> to vector<2x32xf32>
    %307 = vector.extract_strided_slice %303 {offsets = [0, 0], sizes = [2, 32], strides = [1, 1]} : vector<2x192xf32> to vector<2x32xf32>
    %308 = arith.addf %306, %307 : vector<2x32xf32>
    %309 = arith.negf %308 : vector<2x32xf32>
    %310 = math.exp %309 : vector<2x32xf32>
    %cst_70 = arith.constant 1.000000e+00 : f32
    %311 = vector.broadcast %cst_70 : f32 to vector<2x32xf32>
    %312 = arith.addf %311, %310 : vector<2x32xf32>
    %313 = arith.divf %311, %312 : vector<2x32xf32>
    %314 = vector.extract_strided_slice %304 {offsets = [0, 32], sizes = [2, 32], strides = [1, 1]} : vector<2x96xf32> to vector<2x32xf32>
    %315 = vector.extract_strided_slice %303 {offsets = [0, 32], sizes = [2, 32], strides = [1, 1]} : vector<2x192xf32> to vector<2x32xf32>
    %316 = arith.addf %314, %315 : vector<2x32xf32>
    %317 = arith.negf %316 : vector<2x32xf32>
    %318 = math.exp %317 : vector<2x32xf32>
    %cst_71 = arith.constant 1.000000e+00 : f32
    %319 = vector.broadcast %cst_71 : f32 to vector<2x32xf32>
    %320 = arith.addf %319, %318 : vector<2x32xf32>
    %321 = arith.divf %319, %320 : vector<2x32xf32>
    %322 = vector.extract_strided_slice %304 {offsets = [0, 64], sizes = [2, 32], strides = [1, 1]} : vector<2x96xf32> to vector<2x32xf32>
    %323 = vector.extract_strided_slice %303 {offsets = [0, 64], sizes = [2, 32], strides = [1, 1]} : vector<2x192xf32> to vector<2x32xf32>
    %324 = arith.addf %323, %12 : vector<2x32xf32>
    %325 = arith.mulf %313, %324 : vector<2x32xf32>
    %326 = arith.addf %322, %325 : vector<2x32xf32>
    %327 = math.tanh %326 : vector<2x32xf32>
    %328 = vector.extract_strided_slice %300 {offsets = [0, 0], sizes = [2, 32], strides = [1, 1]} : vector<2x64xf32> to vector<2x32xf32>
    %c4_i32_72 = arith.constant 4 : i32
    %329 = vector.broadcast %c4_i32_72 : i32 to vector<2x1xi32>
    %330 = arith.cmpi sgt, %0, %329 : vector<2x1xi32>
    %cst_73 = arith.constant 1.000000e+00 : f32
    %331 = vector.broadcast %cst_73 : f32 to vector<2x32xf32>
    %332 = arith.subf %331, %321 : vector<2x32xf32>
    %333 = arith.mulf %332, %327 : vector<2x32xf32>
    %334 = arith.mulf %321, %328 : vector<2x32xf32>
    %335 = arith.addf %333, %334 : vector<2x32xf32>
    %336 = vector.shape_cast %330 : vector<2x1xi1> to vector<2x1xi1>
    %337 = vector.broadcast %336 : vector<2x1xi1> to vector<2x32xi1>
    %338 = arith.select %337, %335, %328 : vector<2x32xi1>, vector<2x32xf32>
    %339 = vector.extract_strided_slice %305 {offsets = [0, 0], sizes = [2, 32], strides = [1, 1]} : vector<2x96xf32> to vector<2x32xf32>
    %340 = vector.extract_strided_slice %303 {offsets = [0, 96], sizes = [2, 32], strides = [1, 1]} : vector<2x192xf32> to vector<2x32xf32>
    %341 = arith.addf %339, %340 : vector<2x32xf32>
    %342 = arith.negf %341 : vector<2x32xf32>
    %343 = math.exp %342 : vector<2x32xf32>
    %cst_74 = arith.constant 1.000000e+00 : f32
    %344 = vector.broadcast %cst_74 : f32 to vector<2x32xf32>
    %345 = arith.addf %344, %343 : vector<2x32xf32>
    %346 = arith.divf %344, %345 : vector<2x32xf32>
    %347 = vector.extract_strided_slice %305 {offsets = [0, 32], sizes = [2, 32], strides = [1, 1]} : vector<2x96xf32> to vector<2x32xf32>
    %348 = vector.extract_strided_slice %303 {offsets = [0, 128], sizes = [2, 32], strides = [1, 1]} : vector<2x192xf32> to vector<2x32xf32>
    %349 = arith.addf %347, %348 : vector<2x32xf32>
    %350 = arith.negf %349 : vector<2x32xf32>
    %351 = math.exp %350 : vector<2x32xf32>
    %cst_75 = arith.constant 1.000000e+00 : f32
    %352 = vector.broadcast %cst_75 : f32 to vector<2x32xf32>
    %353 = arith.addf %352, %351 : vector<2x32xf32>
    %354 = arith.divf %352, %353 : vector<2x32xf32>
    %355 = vector.extract_strided_slice %305 {offsets = [0, 64], sizes = [2, 32], strides = [1, 1]} : vector<2x96xf32> to vector<2x32xf32>
    %356 = vector.extract_strided_slice %303 {offsets = [0, 160], sizes = [2, 32], strides = [1, 1]} : vector<2x192xf32> to vector<2x32xf32>
    %357 = arith.addf %356, %13 : vector<2x32xf32>
    %358 = arith.mulf %346, %357 : vector<2x32xf32>
    %359 = arith.addf %355, %358 : vector<2x32xf32>
    %360 = math.tanh %359 : vector<2x32xf32>
    %361 = vector.extract_strided_slice %300 {offsets = [0, 32], sizes = [2, 32], strides = [1, 1]} : vector<2x64xf32> to vector<2x32xf32>
    %c3_i32_76 = arith.constant 3 : i32
    %362 = vector.broadcast %c3_i32_76 : i32 to vector<2x1xi32>
    %363 = arith.cmpi sgt, %0, %362 : vector<2x1xi32>
    %cst_77 = arith.constant 1.000000e+00 : f32
    %364 = vector.broadcast %cst_77 : f32 to vector<2x32xf32>
    %365 = arith.subf %364, %354 : vector<2x32xf32>
    %366 = arith.mulf %365, %360 : vector<2x32xf32>
    %367 = arith.mulf %354, %361 : vector<2x32xf32>
    %368 = arith.addf %366, %367 : vector<2x32xf32>
    %369 = vector.shape_cast %363 : vector<2x1xi1> to vector<2x1xi1>
    %370 = vector.broadcast %369 : vector<2x1xi1> to vector<2x32xi1>
    %371 = arith.select %370, %368, %361 : vector<2x32xi1>, vector<2x32xf32>
    %372 = tpu.concatenate %338, %371 in 1 : vector<2x32xf32>, vector<2x32xf32> -> vector<2x64xf32>
    %c8_78 = arith.constant 8 : index
    %c0_79 = arith.constant 0 : index
    %373 = vector.load %arg15[%c8_78, %c0_79] : memref<16x64xf32, #tpu.memory_space<vmem>>, vector<2x32xf32>
    tpu.vector_store %arg15[%c8_78, %c0_79], %338 {strides = array<i32>} : memref<16x64xf32, #tpu.memory_space<vmem>>, vector<2x32xf32>,
    %c6_80 = arith.constant 6 : index
    %c32_81 = arith.constant 32 : index
    %374 = vector.load %arg15[%c6_80, %c32_81] : memref<16x64xf32, #tpu.memory_space<vmem>>, vector<2x32xf32>
    tpu.vector_store %arg15[%c6_80, %c32_81], %371 {strides = array<i32>} : memref<16x64xf32, #tpu.memory_space<vmem>>, vector<2x32xf32>,
    %cst_82 = arith.constant dense<0.000000e+00> : vector<2x192xf32>
    %375 = tpu.matmul %372, %8, %cst_82 {dimension_numbers = #tpu.dot_dimension_numbers<[1], [0], [0], [1], [0, 0, 1, 1], [], []>} : vector<2x64xf32>, vector<64x192xf32>, vector<2x192xf32> -> vector<2x192xf32>
    %c10_83 = arith.constant 10 : index
    %c0_84 = arith.constant 0 : index
    %376 = vector.load %arg14[%c10_83, %c0_84] : memref<16x192xf32, #tpu.memory_space<vmem>>, vector<2x96xf32>
    %c4_85 = arith.constant 4 : index
    %c96_86 = arith.constant 96 : index
    %377 = vector.load %arg14[%c4_85, %c96_86] : memref<16x192xf32, #tpu.memory_space<vmem>>, vector<2x96xf32>
    %378 = vector.extract_strided_slice %376 {offsets = [0, 0], sizes = [2, 32], strides = [1, 1]} : vector<2x96xf32> to vector<2x32xf32>
    %379 = vector.extract_strided_slice %375 {offsets = [0, 0], sizes = [2, 32], strides = [1, 1]} : vector<2x192xf32> to vector<2x32xf32>
    %380 = arith.addf %378, %379 : vector<2x32xf32>
    %381 = arith.negf %380 : vector<2x32xf32>
    %382 = math.exp %381 : vector<2x32xf32>
    %cst_87 = arith.constant 1.000000e+00 : f32
    %383 = vector.broadcast %cst_87 : f32 to vector<2x32xf32>
    %384 = arith.addf %383, %382 : vector<2x32xf32>
    %385 = arith.divf %383, %384 : vector<2x32xf32>
    %386 = vector.extract_strided_slice %376 {offsets = [0, 32], sizes = [2, 32], strides = [1, 1]} : vector<2x96xf32> to vector<2x32xf32>
    %387 = vector.extract_strided_slice %375 {offsets = [0, 32], sizes = [2, 32], strides = [1, 1]} : vector<2x192xf32> to vector<2x32xf32>
    %388 = arith.addf %386, %387 : vector<2x32xf32>
    %389 = arith.negf %388 : vector<2x32xf32>
    %390 = math.exp %389 : vector<2x32xf32>
    %cst_88 = arith.constant 1.000000e+00 : f32
    %391 = vector.broadcast %cst_88 : f32 to vector<2x32xf32>
    %392 = arith.addf %391, %390 : vector<2x32xf32>
    %393 = arith.divf %391, %392 : vector<2x32xf32>
    %394 = vector.extract_strided_slice %376 {offsets = [0, 64], sizes = [2, 32], strides = [1, 1]} : vector<2x96xf32> to vector<2x32xf32>
    %395 = vector.extract_strided_slice %375 {offsets = [0, 64], sizes = [2, 32], strides = [1, 1]} : vector<2x192xf32> to vector<2x32xf32>
    %396 = arith.addf %395, %12 : vector<2x32xf32>
    %397 = arith.mulf %385, %396 : vector<2x32xf32>
    %398 = arith.addf %394, %397 : vector<2x32xf32>
    %399 = math.tanh %398 : vector<2x32xf32>
    %400 = vector.extract_strided_slice %372 {offsets = [0, 0], sizes = [2, 32], strides = [1, 1]} : vector<2x64xf32> to vector<2x32xf32>
    %c5_i32_89 = arith.constant 5 : i32
    %401 = vector.broadcast %c5_i32_89 : i32 to vector<2x1xi32>
    %402 = arith.cmpi sgt, %0, %401 : vector<2x1xi32>
    %cst_90 = arith.constant 1.000000e+00 : f32
    %403 = vector.broadcast %cst_90 : f32 to vector<2x32xf32>
    %404 = arith.subf %403, %393 : vector<2x32xf32>
    %405 = arith.mulf %404, %399 : vector<2x32xf32>
    %406 = arith.mulf %393, %400 : vector<2x32xf32>
    %407 = arith.addf %405, %406 : vector<2x32xf32>
    %408 = vector.shape_cast %402 : vector<2x1xi1> to vector<2x1xi1>
    %409 = vector.broadcast %408 : vector<2x1xi1> to vector<2x32xi1>
    %410 = arith.select %409, %407, %400 : vector<2x32xi1>, vector<2x32xf32>
    %411 = vector.extract_strided_slice %377 {offsets = [0, 0], sizes = [2, 32], strides = [1, 1]} : vector<2x96xf32> to vector<2x32xf32>
    %412 = vector.extract_strided_slice %375 {offsets = [0, 96], sizes = [2, 32], strides = [1, 1]} : vector<2x192xf32> to vector<2x32xf32>
    %413 = arith.addf %411, %412 : vector<2x32xf32>
    %414 = arith.negf %413 : vector<2x32xf32>
    %415 = math.exp %414 : vector<2x32xf32>
    %cst_91 = arith.constant 1.000000e+00 : f32
    %416 = vector.broadcast %cst_91 : f32 to vector<2x32xf32>
    %417 = arith.addf %416, %415 : vector<2x32xf32>
    %418 = arith.divf %416, %417 : vector<2x32xf32>
    %419 = vector.extract_strided_slice %377 {offsets = [0, 32], sizes = [2, 32], strides = [1, 1]} : vector<2x96xf32> to vector<2x32xf32>
    %420 = vector.extract_strided_slice %375 {offsets = [0, 128], sizes = [2, 32], strides = [1, 1]} : vector<2x192xf32> to vector<2x32xf32>
    %421 = arith.addf %419, %420 : vector<2x32xf32>
    %422 = arith.negf %421 : vector<2x32xf32>
    %423 = math.exp %422 : vector<2x32xf32>
    %cst_92 = arith.constant 1.000000e+00 : f32
    %424 = vector.broadcast %cst_92 : f32 to vector<2x32xf32>
    %425 = arith.addf %424, %423 : vector<2x32xf32>
    %426 = arith.divf %424, %425 : vector<2x32xf32>
    %427 = vector.extract_strided_slice %377 {offsets = [0, 64], sizes = [2, 32], strides = [1, 1]} : vector<2x96xf32> to vector<2x32xf32>
    %428 = vector.extract_strided_slice %375 {offsets = [0, 160], sizes = [2, 32], strides = [1, 1]} : vector<2x192xf32> to vector<2x32xf32>
    %429 = arith.addf %428, %13 : vector<2x32xf32>
    %430 = arith.mulf %418, %429 : vector<2x32xf32>
    %431 = arith.addf %427, %430 : vector<2x32xf32>
    %432 = math.tanh %431 : vector<2x32xf32>
    %433 = vector.extract_strided_slice %372 {offsets = [0, 32], sizes = [2, 32], strides = [1, 1]} : vector<2x64xf32> to vector<2x32xf32>
    %c2_i32_93 = arith.constant 2 : i32
    %434 = vector.broadcast %c2_i32_93 : i32 to vector<2x1xi32>
    %435 = arith.cmpi sgt, %0, %434 : vector<2x1xi32>
    %cst_94 = arith.constant 1.000000e+00 : f32
    %436 = vector.broadcast %cst_94 : f32 to vector<2x32xf32>
    %437 = arith.subf %436, %426 : vector<2x32xf32>
    %438 = arith.mulf %437, %432 : vector<2x32xf32>
    %439 = arith.mulf %426, %433 : vector<2x32xf32>
    %440 = arith.addf %438, %439 : vector<2x32xf32>
    %441 = vector.shape_cast %435 : vector<2x1xi1> to vector<2x1xi1>
    %442 = vector.broadcast %441 : vector<2x1xi1> to vector<2x32xi1>
    %443 = arith.select %442, %440, %433 : vector<2x32xi1>, vector<2x32xf32>
    %444 = tpu.concatenate %410, %443 in 1 : vector<2x32xf32>, vector<2x32xf32> -> vector<2x64xf32>
    %c10_95 = arith.constant 10 : index
    %c0_96 = arith.constant 0 : index
    %445 = vector.load %arg15[%c10_95, %c0_96] : memref<16x64xf32, #tpu.memory_space<vmem>>, vector<2x32xf32>
    tpu.vector_store %arg15[%c10_95, %c0_96], %410 {strides = array<i32>} : memref<16x64xf32, #tpu.memory_space<vmem>>, vector<2x32xf32>,
    %c4_97 = arith.constant 4 : index
    %c32_98 = arith.constant 32 : index
    %446 = vector.load %arg15[%c4_97, %c32_98] : memref<16x64xf32, #tpu.memory_space<vmem>>, vector<2x32xf32>
    tpu.vector_store %arg15[%c4_97, %c32_98], %443 {strides = array<i32>} : memref<16x64xf32, #tpu.memory_space<vmem>>, vector<2x32xf32>,
    %cst_99 = arith.constant dense<0.000000e+00> : vector<2x192xf32>
    %447 = tpu.matmul %444, %8, %cst_99 {dimension_numbers = #tpu.dot_dimension_numbers<[1], [0], [0], [1], [0, 0, 1, 1], [], []>} : vector<2x64xf32>, vector<64x192xf32>, vector<2x192xf32> -> vector<2x192xf32>
    %c12_100 = arith.constant 12 : index
    %c0_101 = arith.constant 0 : index
    %448 = vector.load %arg14[%c12_100, %c0_101] : memref<16x192xf32, #tpu.memory_space<vmem>>, vector<2x96xf32>
    %c2_102 = arith.constant 2 : index
    %c96_103 = arith.constant 96 : index
    %449 = vector.load %arg14[%c2_102, %c96_103] : memref<16x192xf32, #tpu.memory_space<vmem>>, vector<2x96xf32>
    %450 = vector.extract_strided_slice %448 {offsets = [0, 0], sizes = [2, 32], strides = [1, 1]} : vector<2x96xf32> to vector<2x32xf32>
    %451 = vector.extract_strided_slice %447 {offsets = [0, 0], sizes = [2, 32], strides = [1, 1]} : vector<2x192xf32> to vector<2x32xf32>
    %452 = arith.addf %450, %451 : vector<2x32xf32>
    %453 = arith.negf %452 : vector<2x32xf32>
    %454 = math.exp %453 : vector<2x32xf32>
    %cst_104 = arith.constant 1.000000e+00 : f32
    %455 = vector.broadcast %cst_104 : f32 to vector<2x32xf32>
    %456 = arith.addf %455, %454 : vector<2x32xf32>
    %457 = arith.divf %455, %456 : vector<2x32xf32>
    %458 = vector.extract_strided_slice %448 {offsets = [0, 32], sizes = [2, 32], strides = [1, 1]} : vector<2x96xf32> to vector<2x32xf32>
    %459 = vector.extract_strided_slice %447 {offsets = [0, 32], sizes = [2, 32], strides = [1, 1]} : vector<2x192xf32> to vector<2x32xf32>
    %460 = arith.addf %458, %459 : vector<2x32xf32>
    %461 = arith.negf %460 : vector<2x32xf32>
    %462 = math.exp %461 : vector<2x32xf32>
    %cst_105 = arith.constant 1.000000e+00 : f32
    %463 = vector.broadcast %cst_105 : f32 to vector<2x32xf32>
    %464 = arith.addf %463, %462 : vector<2x32xf32>
    %465 = arith.divf %463, %464 : vector<2x32xf32>
    %466 = vector.extract_strided_slice %448 {offsets = [0, 64], sizes = [2, 32], strides = [1, 1]} : vector<2x96xf32> to vector<2x32xf32>
    %467 = vector.extract_strided_slice %447 {offsets = [0, 64], sizes = [2, 32], strides = [1, 1]} : vector<2x192xf32> to vector<2x32xf32>
    %468 = arith.addf %467, %12 : vector<2x32xf32>
    %469 = arith.mulf %457, %468 : vector<2x32xf32>
    %470 = arith.addf %466, %469 : vector<2x32xf32>
    %471 = math.tanh %470 : vector<2x32xf32>
    %472 = vector.extract_strided_slice %444 {offsets = [0, 0], sizes = [2, 32], strides = [1, 1]} : vector<2x64xf32> to vector<2x32xf32>
    %c6_i32_106 = arith.constant 6 : i32
    %473 = vector.broadcast %c6_i32_106 : i32 to vector<2x1xi32>
    %474 = arith.cmpi sgt, %0, %473 : vector<2x1xi32>
    %cst_107 = arith.constant 1.000000e+00 : f32
    %475 = vector.broadcast %cst_107 : f32 to vector<2x32xf32>
    %476 = arith.subf %475, %465 : vector<2x32xf32>
    %477 = arith.mulf %476, %471 : vector<2x32xf32>
    %478 = arith.mulf %465, %472 : vector<2x32xf32>
    %479 = arith.addf %477, %478 : vector<2x32xf32>
    %480 = vector.shape_cast %474 : vector<2x1xi1> to vector<2x1xi1>
    %481 = vector.broadcast %480 : vector<2x1xi1> to vector<2x32xi1>
    %482 = arith.select %481, %479, %472 : vector<2x32xi1>, vector<2x32xf32>
    %483 = vector.extract_strided_slice %449 {offsets = [0, 0], sizes = [2, 32], strides = [1, 1]} : vector<2x96xf32> to vector<2x32xf32>
    %484 = vector.extract_strided_slice %447 {offsets = [0, 96], sizes = [2, 32], strides = [1, 1]} : vector<2x192xf32> to vector<2x32xf32>
    %485 = arith.addf %483, %484 : vector<2x32xf32>
    %486 = arith.negf %485 : vector<2x32xf32>
    %487 = math.exp %486 : vector<2x32xf32>
    %cst_108 = arith.constant 1.000000e+00 : f32
    %488 = vector.broadcast %cst_108 : f32 to vector<2x32xf32>
    %489 = arith.addf %488, %487 : vector<2x32xf32>
    %490 = arith.divf %488, %489 : vector<2x32xf32>
    %491 = vector.extract_strided_slice %449 {offsets = [0, 32], sizes = [2, 32], strides = [1, 1]} : vector<2x96xf32> to vector<2x32xf32>
    %492 = vector.extract_strided_slice %447 {offsets = [0, 128], sizes = [2, 32], strides = [1, 1]} : vector<2x192xf32> to vector<2x32xf32>
    %493 = arith.addf %491, %492 : vector<2x32xf32>
    %494 = arith.negf %493 : vector<2x32xf32>
    %495 = math.exp %494 : vector<2x32xf32>
    %cst_109 = arith.constant 1.000000e+00 : f32
    %496 = vector.broadcast %cst_109 : f32 to vector<2x32xf32>
    %497 = arith.addf %496, %495 : vector<2x32xf32>
    %498 = arith.divf %496, %497 : vector<2x32xf32>
    %499 = vector.extract_strided_slice %449 {offsets = [0, 64], sizes = [2, 32], strides = [1, 1]} : vector<2x96xf32> to vector<2x32xf32>
    %500 = vector.extract_strided_slice %447 {offsets = [0, 160], sizes = [2, 32], strides = [1, 1]} : vector<2x192xf32> to vector<2x32xf32>
    %501 = arith.addf %500, %13 : vector<2x32xf32>
    %502 = arith.mulf %490, %501 : vector<2x32xf32>
    %503 = arith.addf %499, %502 : vector<2x32xf32>
    %504 = math.tanh %503 : vector<2x32xf32>
    %505 = vector.extract_strided_slice %444 {offsets = [0, 32], sizes = [2, 32], strides = [1, 1]} : vector<2x64xf32> to vector<2x32xf32>
    %c1_i32_110 = arith.constant 1 : i32
    %506 = vector.broadcast %c1_i32_110 : i32 to vector<2x1xi32>
    %507 = arith.cmpi sgt, %0, %506 : vector<2x1xi32>
    %cst_111 = arith.constant 1.000000e+00 : f32
    %508 = vector.broadcast %cst_111 : f32 to vector<2x32xf32>
    %509 = arith.subf %508, %498 : vector<2x32xf32>
    %510 = arith.mulf %509, %504 : vector<2x32xf32>
    %511 = arith.mulf %498, %505 : vector<2x32xf32>
    %512 = arith.addf %510, %511 : vector<2x32xf32>
    %513 = vector.shape_cast %507 : vector<2x1xi1> to vector<2x1xi1>
    %514 = vector.broadcast %513 : vector<2x1xi1> to vector<2x32xi1>
    %515 = arith.select %514, %512, %505 : vector<2x32xi1>, vector<2x32xf32>
    %516 = tpu.concatenate %482, %515 in 1 : vector<2x32xf32>, vector<2x32xf32> -> vector<2x64xf32>
    %c12_112 = arith.constant 12 : index
    %c0_113 = arith.constant 0 : index
    %517 = vector.load %arg15[%c12_112, %c0_113] : memref<16x64xf32, #tpu.memory_space<vmem>>, vector<2x32xf32>
    tpu.vector_store %arg15[%c12_112, %c0_113], %482 {strides = array<i32>} : memref<16x64xf32, #tpu.memory_space<vmem>>, vector<2x32xf32>,
    %c2_114 = arith.constant 2 : index
    %c32_115 = arith.constant 32 : index
    %518 = vector.load %arg15[%c2_114, %c32_115] : memref<16x64xf32, #tpu.memory_space<vmem>>, vector<2x32xf32>
    tpu.vector_store %arg15[%c2_114, %c32_115], %515 {strides = array<i32>} : memref<16x64xf32, #tpu.memory_space<vmem>>, vector<2x32xf32>,
    %cst_116 = arith.constant dense<0.000000e+00> : vector<2x192xf32>
    %519 = tpu.matmul %516, %8, %cst_116 {dimension_numbers = #tpu.dot_dimension_numbers<[1], [0], [0], [1], [0, 0, 1, 1], [], []>} : vector<2x64xf32>, vector<64x192xf32>, vector<2x192xf32> -> vector<2x192xf32>
    %c14_117 = arith.constant 14 : index
    %c0_118 = arith.constant 0 : index
    %520 = vector.load %arg14[%c14_117, %c0_118] : memref<16x192xf32, #tpu.memory_space<vmem>>, vector<2x96xf32>
    %c0_119 = arith.constant 0 : index
    %c96_120 = arith.constant 96 : index
    %521 = vector.load %arg14[%c0_119, %c96_120] : memref<16x192xf32, #tpu.memory_space<vmem>>, vector<2x96xf32>
    %522 = vector.extract_strided_slice %520 {offsets = [0, 0], sizes = [2, 32], strides = [1, 1]} : vector<2x96xf32> to vector<2x32xf32>
    %523 = vector.extract_strided_slice %519 {offsets = [0, 0], sizes = [2, 32], strides = [1, 1]} : vector<2x192xf32> to vector<2x32xf32>
    %524 = arith.addf %522, %523 : vector<2x32xf32>
    %525 = arith.negf %524 : vector<2x32xf32>
    %526 = math.exp %525 : vector<2x32xf32>
    %cst_121 = arith.constant 1.000000e+00 : f32
    %527 = vector.broadcast %cst_121 : f32 to vector<2x32xf32>
    %528 = arith.addf %527, %526 : vector<2x32xf32>
    %529 = arith.divf %527, %528 : vector<2x32xf32>
    %530 = vector.extract_strided_slice %520 {offsets = [0, 32], sizes = [2, 32], strides = [1, 1]} : vector<2x96xf32> to vector<2x32xf32>
    %531 = vector.extract_strided_slice %519 {offsets = [0, 32], sizes = [2, 32], strides = [1, 1]} : vector<2x192xf32> to vector<2x32xf32>
    %532 = arith.addf %530, %531 : vector<2x32xf32>
    %533 = arith.negf %532 : vector<2x32xf32>
    %534 = math.exp %533 : vector<2x32xf32>
    %cst_122 = arith.constant 1.000000e+00 : f32
    %535 = vector.broadcast %cst_122 : f32 to vector<2x32xf32>
    %536 = arith.addf %535, %534 : vector<2x32xf32>
    %537 = arith.divf %535, %536 : vector<2x32xf32>
    %538 = vector.extract_strided_slice %520 {offsets = [0, 64], sizes = [2, 32], strides = [1, 1]} : vector<2x96xf32> to vector<2x32xf32>
    %539 = vector.extract_strided_slice %519 {offsets = [0, 64], sizes = [2, 32], strides = [1, 1]} : vector<2x192xf32> to vector<2x32xf32>
    %540 = arith.addf %539, %12 : vector<2x32xf32>
    %541 = arith.mulf %529, %540 : vector<2x32xf32>
    %542 = arith.addf %538, %541 : vector<2x32xf32>
    %543 = math.tanh %542 : vector<2x32xf32>
    %544 = vector.extract_strided_slice %516 {offsets = [0, 0], sizes = [2, 32], strides = [1, 1]} : vector<2x64xf32> to vector<2x32xf32>
    %c7_i32_123 = arith.constant 7 : i32
    %545 = vector.broadcast %c7_i32_123 : i32 to vector<2x1xi32>
    %546 = arith.cmpi sgt, %0, %545 : vector<2x1xi32>
    %cst_124 = arith.constant 1.000000e+00 : f32
    %547 = vector.broadcast %cst_124 : f32 to vector<2x32xf32>
    %548 = arith.subf %547, %537 : vector<2x32xf32>
    %549 = arith.mulf %548, %543 : vector<2x32xf32>
    %550 = arith.mulf %537, %544 : vector<2x32xf32>
    %551 = arith.addf %549, %550 : vector<2x32xf32>
    %552 = vector.shape_cast %546 : vector<2x1xi1> to vector<2x1xi1>
    %553 = vector.broadcast %552 : vector<2x1xi1> to vector<2x32xi1>
    %554 = arith.select %553, %551, %544 : vector<2x32xi1>, vector<2x32xf32>
    %555 = vector.extract_strided_slice %521 {offsets = [0, 0], sizes = [2, 32], strides = [1, 1]} : vector<2x96xf32> to vector<2x32xf32>
    %556 = vector.extract_strided_slice %519 {offsets = [0, 96], sizes = [2, 32], strides = [1, 1]} : vector<2x192xf32> to vector<2x32xf32>
    %557 = arith.addf %555, %556 : vector<2x32xf32>
    %558 = arith.negf %557 : vector<2x32xf32>
    %559 = math.exp %558 : vector<2x32xf32>
    %cst_125 = arith.constant 1.000000e+00 : f32
    %560 = vector.broadcast %cst_125 : f32 to vector<2x32xf32>
    %561 = arith.addf %560, %559 : vector<2x32xf32>
    %562 = arith.divf %560, %561 : vector<2x32xf32>
    %563 = vector.extract_strided_slice %521 {offsets = [0, 32], sizes = [2, 32], strides = [1, 1]} : vector<2x96xf32> to vector<2x32xf32>
    %564 = vector.extract_strided_slice %519 {offsets = [0, 128], sizes = [2, 32], strides = [1, 1]} : vector<2x192xf32> to vector<2x32xf32>
    %565 = arith.addf %563, %564 : vector<2x32xf32>
    %566 = arith.negf %565 : vector<2x32xf32>
    %567 = math.exp %566 : vector<2x32xf32>
    %cst_126 = arith.constant 1.000000e+00 : f32
    %568 = vector.broadcast %cst_126 : f32 to vector<2x32xf32>
    %569 = arith.addf %568, %567 : vector<2x32xf32>
    %570 = arith.divf %568, %569 : vector<2x32xf32>
    %571 = vector.extract_strided_slice %521 {offsets = [0, 64], sizes = [2, 32], strides = [1, 1]} : vector<2x96xf32> to vector<2x32xf32>
    %572 = vector.extract_strided_slice %519 {offsets = [0, 160], sizes = [2, 32], strides = [1, 1]} : vector<2x192xf32> to vector<2x32xf32>
    %573 = arith.addf %572, %13 : vector<2x32xf32>
    %574 = arith.mulf %562, %573 : vector<2x32xf32>
    %575 = arith.addf %571, %574 : vector<2x32xf32>
    %576 = math.tanh %575 : vector<2x32xf32>
    %577 = vector.extract_strided_slice %516 {offsets = [0, 32], sizes = [2, 32], strides = [1, 1]} : vector<2x64xf32> to vector<2x32xf32>
    %c0_i32_127 = arith.constant 0 : i32
    %578 = vector.broadcast %c0_i32_127 : i32 to vector<2x1xi32>
    %579 = arith.cmpi sgt, %0, %578 : vector<2x1xi32>
    %cst_128 = arith.constant 1.000000e+00 : f32
    %580 = vector.broadcast %cst_128 : f32 to vector<2x32xf32>
    %581 = arith.subf %580, %570 : vector<2x32xf32>
    %582 = arith.mulf %581, %576 : vector<2x32xf32>
    %583 = arith.mulf %570, %577 : vector<2x32xf32>
    %584 = arith.addf %582, %583 : vector<2x32xf32>
    %585 = vector.shape_cast %579 : vector<2x1xi1> to vector<2x1xi1>
    %586 = vector.broadcast %585 : vector<2x1xi1> to vector<2x32xi1>
    %587 = arith.select %586, %584, %577 : vector<2x32xi1>, vector<2x32xf32>
    %588 = tpu.concatenate %554, %587 in 1 : vector<2x32xf32>, vector<2x32xf32> -> vector<2x64xf32>
    %c14_129 = arith.constant 14 : index
    %c0_130 = arith.constant 0 : index
    %589 = vector.load %arg15[%c14_129, %c0_130] : memref<16x64xf32, #tpu.memory_space<vmem>>, vector<2x32xf32>
    tpu.vector_store %arg15[%c14_129, %c0_130], %554 {strides = array<i32>} : memref<16x64xf32, #tpu.memory_space<vmem>>, vector<2x32xf32>,
    %c0_131 = arith.constant 0 : index
    %c32_132 = arith.constant 32 : index
    %590 = vector.load %arg15[%c0_131, %c32_132] : memref<16x64xf32, #tpu.memory_space<vmem>>, vector<2x32xf32>
    tpu.vector_store %arg15[%c0_131, %c32_132], %587 {strides = array<i32>} : memref<16x64xf32, #tpu.memory_space<vmem>>, vector<2x32xf32>,
    %c0_133 = arith.constant 0 : index
    %c0_134 = arith.constant 0 : index
    %591 = vector.load %arg15[%c0_133, %c0_134] : memref<16x64xf32, #tpu.memory_space<vmem>>, vector<16x64xf32>
    %c0_135 = arith.constant 0 : index
    %c0_136 = arith.constant 0 : index
    %592 = vector.load %arg6[%c0_135, %c0_136] : memref<64x192xf32, #tpu.memory_space<vmem>>, vector<64x192xf32>
    %cst_137 = arith.constant dense<0.000000e+00> : vector<16x192xf32>
    %593 = tpu.matmul %591, %592, %cst_137 {dimension_numbers = #tpu.dot_dimension_numbers<[1], [0], [0], [1], [0, 0, 1, 1], [], []>} : vector<16x64xf32>, vector<64x192xf32>, vector<16x192xf32> -> vector<16x192xf32>
    %c0_138 = arith.constant 0 : index
    %c0_139 = arith.constant 0 : index
    %594 = vector.load %arg7[%c0_138, %c0_139] : memref<1x192xf32, #tpu.memory_space<vmem>>, vector<1x192xf32>
    %595 = vector.broadcast %594 : vector<1x192xf32> to vector<16x192xf32>
    %596 = arith.addf %593, %595 : vector<16x192xf32>
    %c0_140 = arith.constant 0 : index
    %c0_141 = arith.constant 0 : index
    %597 = vector.load %arg14[%c0_140, %c0_141] : memref<16x192xf32, #tpu.memory_space<vmem>>, vector<16x192xf32>
    tpu.vector_store %arg14[%c0_140, %c0_141], %596 {strides = array<i32>} : memref<16x192xf32, #tpu.memory_space<vmem>>, vector<16x192xf32>,
    %c0_142 = arith.constant 0 : index
    %c0_143 = arith.constant 0 : index
    %598 = vector.load %arg8[%c0_142, %c0_143] : memref<64x192xf32, #tpu.memory_space<vmem>>, vector<64x192xf32>
    %c0_144 = arith.constant 0 : index
    %c0_145 = arith.constant 0 : index
    %599 = vector.load %arg9[%c0_144, %c0_145] : memref<1x64xf32, #tpu.memory_space<vmem>>, vector<1x64xf32>
    %600 = vector.shape_cast %599 : vector<1x64xf32> to vector<1x64xf32>
    %601 = vector.broadcast %600 : vector<1x64xf32> to vector<2x64xf32>
    %602 = vector.extract_strided_slice %601 {offsets = [0, 0], sizes = [2, 32], strides = [1, 1]} : vector<2x64xf32> to vector<2x32xf32>
    %603 = vector.extract_strided_slice %601 {offsets = [0, 32], sizes = [2, 32], strides = [1, 1]} : vector<2x64xf32> to vector<2x32xf32>
    %cst_146 = arith.constant 0.000000e+00 : f32
    %604 = vector.broadcast %cst_146 : f32 to vector<2x64xf32>
    %cst_147 = arith.constant dense<0.000000e+00> : vector<2x192xf32>
    %605 = tpu.matmul %604, %598, %cst_147 {dimension_numbers = #tpu.dot_dimension_numbers<[1], [0], [0], [1], [0, 0, 1, 1], [], []>} : vector<2x64xf32>, vector<64x192xf32>, vector<2x192xf32> -> vector<2x192xf32>
    %c0_148 = arith.constant 0 : index
    %c0_149 = arith.constant 0 : index
    %606 = vector.load %arg14[%c0_148, %c0_149] : memref<16x192xf32, #tpu.memory_space<vmem>>, vector<2x96xf32>
    %c14_150 = arith.constant 14 : index
    %c96_151 = arith.constant 96 : index
    %607 = vector.load %arg14[%c14_150, %c96_151] : memref<16x192xf32, #tpu.memory_space<vmem>>, vector<2x96xf32>
    %608 = vector.extract_strided_slice %606 {offsets = [0, 0], sizes = [2, 32], strides = [1, 1]} : vector<2x96xf32> to vector<2x32xf32>
    %609 = vector.extract_strided_slice %605 {offsets = [0, 0], sizes = [2, 32], strides = [1, 1]} : vector<2x192xf32> to vector<2x32xf32>
    %610 = arith.addf %608, %609 : vector<2x32xf32>
    %611 = arith.negf %610 : vector<2x32xf32>
    %612 = math.exp %611 : vector<2x32xf32>
    %cst_152 = arith.constant 1.000000e+00 : f32
    %613 = vector.broadcast %cst_152 : f32 to vector<2x32xf32>
    %614 = arith.addf %613, %612 : vector<2x32xf32>
    %615 = arith.divf %613, %614 : vector<2x32xf32>
    %616 = vector.extract_strided_slice %606 {offsets = [0, 32], sizes = [2, 32], strides = [1, 1]} : vector<2x96xf32> to vector<2x32xf32>
    %617 = vector.extract_strided_slice %605 {offsets = [0, 32], sizes = [2, 32], strides = [1, 1]} : vector<2x192xf32> to vector<2x32xf32>
    %618 = arith.addf %616, %617 : vector<2x32xf32>
    %619 = arith.negf %618 : vector<2x32xf32>
    %620 = math.exp %619 : vector<2x32xf32>
    %cst_153 = arith.constant 1.000000e+00 : f32
    %621 = vector.broadcast %cst_153 : f32 to vector<2x32xf32>
    %622 = arith.addf %621, %620 : vector<2x32xf32>
    %623 = arith.divf %621, %622 : vector<2x32xf32>
    %624 = vector.extract_strided_slice %606 {offsets = [0, 64], sizes = [2, 32], strides = [1, 1]} : vector<2x96xf32> to vector<2x32xf32>
    %625 = vector.extract_strided_slice %605 {offsets = [0, 64], sizes = [2, 32], strides = [1, 1]} : vector<2x192xf32> to vector<2x32xf32>
    %626 = arith.addf %625, %602 : vector<2x32xf32>
    %627 = arith.mulf %615, %626 : vector<2x32xf32>
    %628 = arith.addf %624, %627 : vector<2x32xf32>
    %629 = math.tanh %628 : vector<2x32xf32>
    %630 = vector.extract_strided_slice %604 {offsets = [0, 0], sizes = [2, 32], strides = [1, 1]} : vector<2x64xf32> to vector<2x32xf32>
    %c0_i32_154 = arith.constant 0 : i32
    %631 = vector.broadcast %c0_i32_154 : i32 to vector<2x1xi32>
    %632 = arith.cmpi sgt, %0, %631 : vector<2x1xi32>
    %cst_155 = arith.constant 1.000000e+00 : f32
    %633 = vector.broadcast %cst_155 : f32 to vector<2x32xf32>
    %634 = arith.subf %633, %623 : vector<2x32xf32>
    %635 = arith.mulf %634, %629 : vector<2x32xf32>
    %636 = arith.mulf %623, %630 : vector<2x32xf32>
    %637 = arith.addf %635, %636 : vector<2x32xf32>
    %638 = vector.shape_cast %632 : vector<2x1xi1> to vector<2x1xi1>
    %639 = vector.broadcast %638 : vector<2x1xi1> to vector<2x32xi1>
    %640 = arith.select %639, %637, %630 : vector<2x32xi1>, vector<2x32xf32>
    %641 = vector.extract_strided_slice %607 {offsets = [0, 0], sizes = [2, 32], strides = [1, 1]} : vector<2x96xf32> to vector<2x32xf32>
    %642 = vector.extract_strided_slice %605 {offsets = [0, 96], sizes = [2, 32], strides = [1, 1]} : vector<2x192xf32> to vector<2x32xf32>
    %643 = arith.addf %641, %642 : vector<2x32xf32>
    %644 = arith.negf %643 : vector<2x32xf32>
    %645 = math.exp %644 : vector<2x32xf32>
    %cst_156 = arith.constant 1.000000e+00 : f32
    %646 = vector.broadcast %cst_156 : f32 to vector<2x32xf32>
    %647 = arith.addf %646, %645 : vector<2x32xf32>
    %648 = arith.divf %646, %647 : vector<2x32xf32>
    %649 = vector.extract_strided_slice %607 {offsets = [0, 32], sizes = [2, 32], strides = [1, 1]} : vector<2x96xf32> to vector<2x32xf32>
    %650 = vector.extract_strided_slice %605 {offsets = [0, 128], sizes = [2, 32], strides = [1, 1]} : vector<2x192xf32> to vector<2x32xf32>
    %651 = arith.addf %649, %650 : vector<2x32xf32>
    %652 = arith.negf %651 : vector<2x32xf32>
    %653 = math.exp %652 : vector<2x32xf32>
    %cst_157 = arith.constant 1.000000e+00 : f32
    %654 = vector.broadcast %cst_157 : f32 to vector<2x32xf32>
    %655 = arith.addf %654, %653 : vector<2x32xf32>
    %656 = arith.divf %654, %655 : vector<2x32xf32>
    %657 = vector.extract_strided_slice %607 {offsets = [0, 64], sizes = [2, 32], strides = [1, 1]} : vector<2x96xf32> to vector<2x32xf32>
    %658 = vector.extract_strided_slice %605 {offsets = [0, 160], sizes = [2, 32], strides = [1, 1]} : vector<2x192xf32> to vector<2x32xf32>
    %659 = arith.addf %658, %603 : vector<2x32xf32>
    %660 = arith.mulf %648, %659 : vector<2x32xf32>
    %661 = arith.addf %657, %660 : vector<2x32xf32>
    %662 = math.tanh %661 : vector<2x32xf32>
    %663 = vector.extract_strided_slice %604 {offsets = [0, 32], sizes = [2, 32], strides = [1, 1]} : vector<2x64xf32> to vector<2x32xf32>
    %c7_i32_158 = arith.constant 7 : i32
    %664 = vector.broadcast %c7_i32_158 : i32 to vector<2x1xi32>
    %665 = arith.cmpi sgt, %0, %664 : vector<2x1xi32>
    %cst_159 = arith.constant 1.000000e+00 : f32
    %666 = vector.broadcast %cst_159 : f32 to vector<2x32xf32>
    %667 = arith.subf %666, %656 : vector<2x32xf32>
    %668 = arith.mulf %667, %662 : vector<2x32xf32>
    %669 = arith.mulf %656, %663 : vector<2x32xf32>
    %670 = arith.addf %668, %669 : vector<2x32xf32>
    %671 = vector.shape_cast %665 : vector<2x1xi1> to vector<2x1xi1>
    %672 = vector.broadcast %671 : vector<2x1xi1> to vector<2x32xi1>
    %673 = arith.select %672, %670, %663 : vector<2x32xi1>, vector<2x32xf32>
    %674 = tpu.concatenate %640, %673 in 1 : vector<2x32xf32>, vector<2x32xf32> -> vector<2x64xf32>
    %cst_160 = arith.constant dense<0.000000e+00> : vector<2x192xf32>
    %675 = tpu.matmul %674, %598, %cst_160 {dimension_numbers = #tpu.dot_dimension_numbers<[1], [0], [0], [1], [0, 0, 1, 1], [], []>} : vector<2x64xf32>, vector<64x192xf32>, vector<2x192xf32> -> vector<2x192xf32>
    %c2_161 = arith.constant 2 : index
    %c0_162 = arith.constant 0 : index
    %676 = vector.load %arg14[%c2_161, %c0_162] : memref<16x192xf32, #tpu.memory_space<vmem>>, vector<2x96xf32>
    %c12_163 = arith.constant 12 : index
    %c96_164 = arith.constant 96 : index
    %677 = vector.load %arg14[%c12_163, %c96_164] : memref<16x192xf32, #tpu.memory_space<vmem>>, vector<2x96xf32>
    %678 = vector.extract_strided_slice %676 {offsets = [0, 0], sizes = [2, 32], strides = [1, 1]} : vector<2x96xf32> to vector<2x32xf32>
    %679 = vector.extract_strided_slice %675 {offsets = [0, 0], sizes = [2, 32], strides = [1, 1]} : vector<2x192xf32> to vector<2x32xf32>
    %680 = arith.addf %678, %679 : vector<2x32xf32>
    %681 = arith.negf %680 : vector<2x32xf32>
    %682 = math.exp %681 : vector<2x32xf32>
    %cst_165 = arith.constant 1.000000e+00 : f32
    %683 = vector.broadcast %cst_165 : f32 to vector<2x32xf32>
    %684 = arith.addf %683, %682 : vector<2x32xf32>
    %685 = arith.divf %683, %684 : vector<2x32xf32>
    %686 = vector.extract_strided_slice %676 {offsets = [0, 32], sizes = [2, 32], strides = [1, 1]} : vector<2x96xf32> to vector<2x32xf32>
    %687 = vector.extract_strided_slice %675 {offsets = [0, 32], sizes = [2, 32], strides = [1, 1]} : vector<2x192xf32> to vector<2x32xf32>
    %688 = arith.addf %686, %687 : vector<2x32xf32>
    %689 = arith.negf %688 : vector<2x32xf32>
    %690 = math.exp %689 : vector<2x32xf32>
    %cst_166 = arith.constant 1.000000e+00 : f32
    %691 = vector.broadcast %cst_166 : f32 to vector<2x32xf32>
    %692 = arith.addf %691, %690 : vector<2x32xf32>
    %693 = arith.divf %691, %692 : vector<2x32xf32>
    %694 = vector.extract_strided_slice %676 {offsets = [0, 64], sizes = [2, 32], strides = [1, 1]} : vector<2x96xf32> to vector<2x32xf32>
    %695 = vector.extract_strided_slice %675 {offsets = [0, 64], sizes = [2, 32], strides = [1, 1]} : vector<2x192xf32> to vector<2x32xf32>
    %696 = arith.addf %695, %602 : vector<2x32xf32>
    %697 = arith.mulf %685, %696 : vector<2x32xf32>
    %698 = arith.addf %694, %697 : vector<2x32xf32>
    %699 = math.tanh %698 : vector<2x32xf32>
    %700 = vector.extract_strided_slice %674 {offsets = [0, 0], sizes = [2, 32], strides = [1, 1]} : vector<2x64xf32> to vector<2x32xf32>
    %c1_i32_167 = arith.constant 1 : i32
    %701 = vector.broadcast %c1_i32_167 : i32 to vector<2x1xi32>
    %702 = arith.cmpi sgt, %0, %701 : vector<2x1xi32>
    %cst_168 = arith.constant 1.000000e+00 : f32
    %703 = vector.broadcast %cst_168 : f32 to vector<2x32xf32>
    %704 = arith.subf %703, %693 : vector<2x32xf32>
    %705 = arith.mulf %704, %699 : vector<2x32xf32>
    %706 = arith.mulf %693, %700 : vector<2x32xf32>
    %707 = arith.addf %705, %706 : vector<2x32xf32>
    %708 = vector.shape_cast %702 : vector<2x1xi1> to vector<2x1xi1>
    %709 = vector.broadcast %708 : vector<2x1xi1> to vector<2x32xi1>
    %710 = arith.select %709, %707, %700 : vector<2x32xi1>, vector<2x32xf32>
    %711 = vector.extract_strided_slice %677 {offsets = [0, 0], sizes = [2, 32], strides = [1, 1]} : vector<2x96xf32> to vector<2x32xf32>
    %712 = vector.extract_strided_slice %675 {offsets = [0, 96], sizes = [2, 32], strides = [1, 1]} : vector<2x192xf32> to vector<2x32xf32>
    %713 = arith.addf %711, %712 : vector<2x32xf32>
    %714 = arith.negf %713 : vector<2x32xf32>
    %715 = math.exp %714 : vector<2x32xf32>
    %cst_169 = arith.constant 1.000000e+00 : f32
    %716 = vector.broadcast %cst_169 : f32 to vector<2x32xf32>
    %717 = arith.addf %716, %715 : vector<2x32xf32>
    %718 = arith.divf %716, %717 : vector<2x32xf32>
    %719 = vector.extract_strided_slice %677 {offsets = [0, 32], sizes = [2, 32], strides = [1, 1]} : vector<2x96xf32> to vector<2x32xf32>
    %720 = vector.extract_strided_slice %675 {offsets = [0, 128], sizes = [2, 32], strides = [1, 1]} : vector<2x192xf32> to vector<2x32xf32>
    %721 = arith.addf %719, %720 : vector<2x32xf32>
    %722 = arith.negf %721 : vector<2x32xf32>
    %723 = math.exp %722 : vector<2x32xf32>
    %cst_170 = arith.constant 1.000000e+00 : f32
    %724 = vector.broadcast %cst_170 : f32 to vector<2x32xf32>
    %725 = arith.addf %724, %723 : vector<2x32xf32>
    %726 = arith.divf %724, %725 : vector<2x32xf32>
    %727 = vector.extract_strided_slice %677 {offsets = [0, 64], sizes = [2, 32], strides = [1, 1]} : vector<2x96xf32> to vector<2x32xf32>
    %728 = vector.extract_strided_slice %675 {offsets = [0, 160], sizes = [2, 32], strides = [1, 1]} : vector<2x192xf32> to vector<2x32xf32>
    %729 = arith.addf %728, %603 : vector<2x32xf32>
    %730 = arith.mulf %718, %729 : vector<2x32xf32>
    %731 = arith.addf %727, %730 : vector<2x32xf32>
    %732 = math.tanh %731 : vector<2x32xf32>
    %733 = vector.extract_strided_slice %674 {offsets = [0, 32], sizes = [2, 32], strides = [1, 1]} : vector<2x64xf32> to vector<2x32xf32>
    %c6_i32_171 = arith.constant 6 : i32
    %734 = vector.broadcast %c6_i32_171 : i32 to vector<2x1xi32>
    %735 = arith.cmpi sgt, %0, %734 : vector<2x1xi32>
    %cst_172 = arith.constant 1.000000e+00 : f32
    %736 = vector.broadcast %cst_172 : f32 to vector<2x32xf32>
    %737 = arith.subf %736, %726 : vector<2x32xf32>
    %738 = arith.mulf %737, %732 : vector<2x32xf32>
    %739 = arith.mulf %726, %733 : vector<2x32xf32>
    %740 = arith.addf %738, %739 : vector<2x32xf32>
    %741 = vector.shape_cast %735 : vector<2x1xi1> to vector<2x1xi1>
    %742 = vector.broadcast %741 : vector<2x1xi1> to vector<2x32xi1>
    %743 = arith.select %742, %740, %733 : vector<2x32xi1>, vector<2x32xf32>
    %744 = tpu.concatenate %710, %743 in 1 : vector<2x32xf32>, vector<2x32xf32> -> vector<2x64xf32>
    %cst_173 = arith.constant dense<0.000000e+00> : vector<2x192xf32>
    %745 = tpu.matmul %744, %598, %cst_173 {dimension_numbers = #tpu.dot_dimension_numbers<[1], [0], [0], [1], [0, 0, 1, 1], [], []>} : vector<2x64xf32>, vector<64x192xf32>, vector<2x192xf32> -> vector<2x192xf32>
    %c4_174 = arith.constant 4 : index
    %c0_175 = arith.constant 0 : index
    %746 = vector.load %arg14[%c4_174, %c0_175] : memref<16x192xf32, #tpu.memory_space<vmem>>, vector<2x96xf32>
    %c10_176 = arith.constant 10 : index
    %c96_177 = arith.constant 96 : index
    %747 = vector.load %arg14[%c10_176, %c96_177] : memref<16x192xf32, #tpu.memory_space<vmem>>, vector<2x96xf32>
    %748 = vector.extract_strided_slice %746 {offsets = [0, 0], sizes = [2, 32], strides = [1, 1]} : vector<2x96xf32> to vector<2x32xf32>
    %749 = vector.extract_strided_slice %745 {offsets = [0, 0], sizes = [2, 32], strides = [1, 1]} : vector<2x192xf32> to vector<2x32xf32>
    %750 = arith.addf %748, %749 : vector<2x32xf32>
    %751 = arith.negf %750 : vector<2x32xf32>
    %752 = math.exp %751 : vector<2x32xf32>
    %cst_178 = arith.constant 1.000000e+00 : f32
    %753 = vector.broadcast %cst_178 : f32 to vector<2x32xf32>
    %754 = arith.addf %753, %752 : vector<2x32xf32>
    %755 = arith.divf %753, %754 : vector<2x32xf32>
    %756 = vector.extract_strided_slice %746 {offsets = [0, 32], sizes = [2, 32], strides = [1, 1]} : vector<2x96xf32> to vector<2x32xf32>
    %757 = vector.extract_strided_slice %745 {offsets = [0, 32], sizes = [2, 32], strides = [1, 1]} : vector<2x192xf32> to vector<2x32xf32>
    %758 = arith.addf %756, %757 : vector<2x32xf32>
    %759 = arith.negf %758 : vector<2x32xf32>
    %760 = math.exp %759 : vector<2x32xf32>
    %cst_179 = arith.constant 1.000000e+00 : f32
    %761 = vector.broadcast %cst_179 : f32 to vector<2x32xf32>
    %762 = arith.addf %761, %760 : vector<2x32xf32>
    %763 = arith.divf %761, %762 : vector<2x32xf32>
    %764 = vector.extract_strided_slice %746 {offsets = [0, 64], sizes = [2, 32], strides = [1, 1]} : vector<2x96xf32> to vector<2x32xf32>
    %765 = vector.extract_strided_slice %745 {offsets = [0, 64], sizes = [2, 32], strides = [1, 1]} : vector<2x192xf32> to vector<2x32xf32>
    %766 = arith.addf %765, %602 : vector<2x32xf32>
    %767 = arith.mulf %755, %766 : vector<2x32xf32>
    %768 = arith.addf %764, %767 : vector<2x32xf32>
    %769 = math.tanh %768 : vector<2x32xf32>
    %770 = vector.extract_strided_slice %744 {offsets = [0, 0], sizes = [2, 32], strides = [1, 1]} : vector<2x64xf32> to vector<2x32xf32>
    %c2_i32_180 = arith.constant 2 : i32
    %771 = vector.broadcast %c2_i32_180 : i32 to vector<2x1xi32>
    %772 = arith.cmpi sgt, %0, %771 : vector<2x1xi32>
    %cst_181 = arith.constant 1.000000e+00 : f32
    %773 = vector.broadcast %cst_181 : f32 to vector<2x32xf32>
    %774 = arith.subf %773, %763 : vector<2x32xf32>
    %775 = arith.mulf %774, %769 : vector<2x32xf32>
    %776 = arith.mulf %763, %770 : vector<2x32xf32>
    %777 = arith.addf %775, %776 : vector<2x32xf32>
    %778 = vector.shape_cast %772 : vector<2x1xi1> to vector<2x1xi1>
    %779 = vector.broadcast %778 : vector<2x1xi1> to vector<2x32xi1>
    %780 = arith.select %779, %777, %770 : vector<2x32xi1>, vector<2x32xf32>
    %781 = vector.extract_strided_slice %747 {offsets = [0, 0], sizes = [2, 32], strides = [1, 1]} : vector<2x96xf32> to vector<2x32xf32>
    %782 = vector.extract_strided_slice %745 {offsets = [0, 96], sizes = [2, 32], strides = [1, 1]} : vector<2x192xf32> to vector<2x32xf32>
    %783 = arith.addf %781, %782 : vector<2x32xf32>
    %784 = arith.negf %783 : vector<2x32xf32>
    %785 = math.exp %784 : vector<2x32xf32>
    %cst_182 = arith.constant 1.000000e+00 : f32
    %786 = vector.broadcast %cst_182 : f32 to vector<2x32xf32>
    %787 = arith.addf %786, %785 : vector<2x32xf32>
    %788 = arith.divf %786, %787 : vector<2x32xf32>
    %789 = vector.extract_strided_slice %747 {offsets = [0, 32], sizes = [2, 32], strides = [1, 1]} : vector<2x96xf32> to vector<2x32xf32>
    %790 = vector.extract_strided_slice %745 {offsets = [0, 128], sizes = [2, 32], strides = [1, 1]} : vector<2x192xf32> to vector<2x32xf32>
    %791 = arith.addf %789, %790 : vector<2x32xf32>
    %792 = arith.negf %791 : vector<2x32xf32>
    %793 = math.exp %792 : vector<2x32xf32>
    %cst_183 = arith.constant 1.000000e+00 : f32
    %794 = vector.broadcast %cst_183 : f32 to vector<2x32xf32>
    %795 = arith.addf %794, %793 : vector<2x32xf32>
    %796 = arith.divf %794, %795 : vector<2x32xf32>
    %797 = vector.extract_strided_slice %747 {offsets = [0, 64], sizes = [2, 32], strides = [1, 1]} : vector<2x96xf32> to vector<2x32xf32>
    %798 = vector.extract_strided_slice %745 {offsets = [0, 160], sizes = [2, 32], strides = [1, 1]} : vector<2x192xf32> to vector<2x32xf32>
    %799 = arith.addf %798, %603 : vector<2x32xf32>
    %800 = arith.mulf %788, %799 : vector<2x32xf32>
    %801 = arith.addf %797, %800 : vector<2x32xf32>
    %802 = math.tanh %801 : vector<2x32xf32>
    %803 = vector.extract_strided_slice %744 {offsets = [0, 32], sizes = [2, 32], strides = [1, 1]} : vector<2x64xf32> to vector<2x32xf32>
    %c5_i32_184 = arith.constant 5 : i32
    %804 = vector.broadcast %c5_i32_184 : i32 to vector<2x1xi32>
    %805 = arith.cmpi sgt, %0, %804 : vector<2x1xi32>
    %cst_185 = arith.constant 1.000000e+00 : f32
    %806 = vector.broadcast %cst_185 : f32 to vector<2x32xf32>
    %807 = arith.subf %806, %796 : vector<2x32xf32>
    %808 = arith.mulf %807, %802 : vector<2x32xf32>
    %809 = arith.mulf %796, %803 : vector<2x32xf32>
    %810 = arith.addf %808, %809 : vector<2x32xf32>
    %811 = vector.shape_cast %805 : vector<2x1xi1> to vector<2x1xi1>
    %812 = vector.broadcast %811 : vector<2x1xi1> to vector<2x32xi1>
    %813 = arith.select %812, %810, %803 : vector<2x32xi1>, vector<2x32xf32>
    %814 = tpu.concatenate %780, %813 in 1 : vector<2x32xf32>, vector<2x32xf32> -> vector<2x64xf32>
    %cst_186 = arith.constant dense<0.000000e+00> : vector<2x192xf32>
    %815 = tpu.matmul %814, %598, %cst_186 {dimension_numbers = #tpu.dot_dimension_numbers<[1], [0], [0], [1], [0, 0, 1, 1], [], []>} : vector<2x64xf32>, vector<64x192xf32>, vector<2x192xf32> -> vector<2x192xf32>
    %c6_187 = arith.constant 6 : index
    %c0_188 = arith.constant 0 : index
    %816 = vector.load %arg14[%c6_187, %c0_188] : memref<16x192xf32, #tpu.memory_space<vmem>>, vector<2x96xf32>
    %c8_189 = arith.constant 8 : index
    %c96_190 = arith.constant 96 : index
    %817 = vector.load %arg14[%c8_189, %c96_190] : memref<16x192xf32, #tpu.memory_space<vmem>>, vector<2x96xf32>
    %818 = vector.extract_strided_slice %816 {offsets = [0, 0], sizes = [2, 32], strides = [1, 1]} : vector<2x96xf32> to vector<2x32xf32>
    %819 = vector.extract_strided_slice %815 {offsets = [0, 0], sizes = [2, 32], strides = [1, 1]} : vector<2x192xf32> to vector<2x32xf32>
    %820 = arith.addf %818, %819 : vector<2x32xf32>
    %821 = arith.negf %820 : vector<2x32xf32>
    %822 = math.exp %821 : vector<2x32xf32>
    %cst_191 = arith.constant 1.000000e+00 : f32
    %823 = vector.broadcast %cst_191 : f32 to vector<2x32xf32>
    %824 = arith.addf %823, %822 : vector<2x32xf32>
    %825 = arith.divf %823, %824 : vector<2x32xf32>
    %826 = vector.extract_strided_slice %816 {offsets = [0, 32], sizes = [2, 32], strides = [1, 1]} : vector<2x96xf32> to vector<2x32xf32>
    %827 = vector.extract_strided_slice %815 {offsets = [0, 32], sizes = [2, 32], strides = [1, 1]} : vector<2x192xf32> to vector<2x32xf32>
    %828 = arith.addf %826, %827 : vector<2x32xf32>
    %829 = arith.negf %828 : vector<2x32xf32>
    %830 = math.exp %829 : vector<2x32xf32>
    %cst_192 = arith.constant 1.000000e+00 : f32
    %831 = vector.broadcast %cst_192 : f32 to vector<2x32xf32>
    %832 = arith.addf %831, %830 : vector<2x32xf32>
    %833 = arith.divf %831, %832 : vector<2x32xf32>
    %834 = vector.extract_strided_slice %816 {offsets = [0, 64], sizes = [2, 32], strides = [1, 1]} : vector<2x96xf32> to vector<2x32xf32>
    %835 = vector.extract_strided_slice %815 {offsets = [0, 64], sizes = [2, 32], strides = [1, 1]} : vector<2x192xf32> to vector<2x32xf32>
    %836 = arith.addf %835, %602 : vector<2x32xf32>
    %837 = arith.mulf %825, %836 : vector<2x32xf32>
    %838 = arith.addf %834, %837 : vector<2x32xf32>
    %839 = math.tanh %838 : vector<2x32xf32>
    %840 = vector.extract_strided_slice %814 {offsets = [0, 0], sizes = [2, 32], strides = [1, 1]} : vector<2x64xf32> to vector<2x32xf32>
    %c3_i32_193 = arith.constant 3 : i32
    %841 = vector.broadcast %c3_i32_193 : i32 to vector<2x1xi32>
    %842 = arith.cmpi sgt, %0, %841 : vector<2x1xi32>
    %cst_194 = arith.constant 1.000000e+00 : f32
    %843 = vector.broadcast %cst_194 : f32 to vector<2x32xf32>
    %844 = arith.subf %843, %833 : vector<2x32xf32>
    %845 = arith.mulf %844, %839 : vector<2x32xf32>
    %846 = arith.mulf %833, %840 : vector<2x32xf32>
    %847 = arith.addf %845, %846 : vector<2x32xf32>
    %848 = vector.shape_cast %842 : vector<2x1xi1> to vector<2x1xi1>
    %849 = vector.broadcast %848 : vector<2x1xi1> to vector<2x32xi1>
    %850 = arith.select %849, %847, %840 : vector<2x32xi1>, vector<2x32xf32>
    %851 = vector.extract_strided_slice %817 {offsets = [0, 0], sizes = [2, 32], strides = [1, 1]} : vector<2x96xf32> to vector<2x32xf32>
    %852 = vector.extract_strided_slice %815 {offsets = [0, 96], sizes = [2, 32], strides = [1, 1]} : vector<2x192xf32> to vector<2x32xf32>
    %853 = arith.addf %851, %852 : vector<2x32xf32>
    %854 = arith.negf %853 : vector<2x32xf32>
    %855 = math.exp %854 : vector<2x32xf32>
    %cst_195 = arith.constant 1.000000e+00 : f32
    %856 = vector.broadcast %cst_195 : f32 to vector<2x32xf32>
    %857 = arith.addf %856, %855 : vector<2x32xf32>
    %858 = arith.divf %856, %857 : vector<2x32xf32>
    %859 = vector.extract_strided_slice %817 {offsets = [0, 32], sizes = [2, 32], strides = [1, 1]} : vector<2x96xf32> to vector<2x32xf32>
    %860 = vector.extract_strided_slice %815 {offsets = [0, 128], sizes = [2, 32], strides = [1, 1]} : vector<2x192xf32> to vector<2x32xf32>
    %861 = arith.addf %859, %860 : vector<2x32xf32>
    %862 = arith.negf %861 : vector<2x32xf32>
    %863 = math.exp %862 : vector<2x32xf32>
    %cst_196 = arith.constant 1.000000e+00 : f32
    %864 = vector.broadcast %cst_196 : f32 to vector<2x32xf32>
    %865 = arith.addf %864, %863 : vector<2x32xf32>
    %866 = arith.divf %864, %865 : vector<2x32xf32>
    %867 = vector.extract_strided_slice %817 {offsets = [0, 64], sizes = [2, 32], strides = [1, 1]} : vector<2x96xf32> to vector<2x32xf32>
    %868 = vector.extract_strided_slice %815 {offsets = [0, 160], sizes = [2, 32], strides = [1, 1]} : vector<2x192xf32> to vector<2x32xf32>
    %869 = arith.addf %868, %603 : vector<2x32xf32>
    %870 = arith.mulf %858, %869 : vector<2x32xf32>
    %871 = arith.addf %867, %870 : vector<2x32xf32>
    %872 = math.tanh %871 : vector<2x32xf32>
    %873 = vector.extract_strided_slice %814 {offsets = [0, 32], sizes = [2, 32], strides = [1, 1]} : vector<2x64xf32> to vector<2x32xf32>
    %c4_i32_197 = arith.constant 4 : i32
    %874 = vector.broadcast %c4_i32_197 : i32 to vector<2x1xi32>
    %875 = arith.cmpi sgt, %0, %874 : vector<2x1xi32>
    %cst_198 = arith.constant 1.000000e+00 : f32
    %876 = vector.broadcast %cst_198 : f32 to vector<2x32xf32>
    %877 = arith.subf %876, %866 : vector<2x32xf32>
    %878 = arith.mulf %877, %872 : vector<2x32xf32>
    %879 = arith.mulf %866, %873 : vector<2x32xf32>
    %880 = arith.addf %878, %879 : vector<2x32xf32>
    %881 = vector.shape_cast %875 : vector<2x1xi1> to vector<2x1xi1>
    %882 = vector.broadcast %881 : vector<2x1xi1> to vector<2x32xi1>
    %883 = arith.select %882, %880, %873 : vector<2x32xi1>, vector<2x32xf32>
    %884 = tpu.concatenate %850, %883 in 1 : vector<2x32xf32>, vector<2x32xf32> -> vector<2x64xf32>
    %cst_199 = arith.constant dense<0.000000e+00> : vector<2x192xf32>
    %885 = tpu.matmul %884, %598, %cst_199 {dimension_numbers = #tpu.dot_dimension_numbers<[1], [0], [0], [1], [0, 0, 1, 1], [], []>} : vector<2x64xf32>, vector<64x192xf32>, vector<2x192xf32> -> vector<2x192xf32>
    %c8_200 = arith.constant 8 : index
    %c0_201 = arith.constant 0 : index
    %886 = vector.load %arg14[%c8_200, %c0_201] : memref<16x192xf32, #tpu.memory_space<vmem>>, vector<2x96xf32>
    %c6_202 = arith.constant 6 : index
    %c96_203 = arith.constant 96 : index
    %887 = vector.load %arg14[%c6_202, %c96_203] : memref<16x192xf32, #tpu.memory_space<vmem>>, vector<2x96xf32>
    %888 = vector.extract_strided_slice %886 {offsets = [0, 0], sizes = [2, 32], strides = [1, 1]} : vector<2x96xf32> to vector<2x32xf32>
    %889 = vector.extract_strided_slice %885 {offsets = [0, 0], sizes = [2, 32], strides = [1, 1]} : vector<2x192xf32> to vector<2x32xf32>
    %890 = arith.addf %888, %889 : vector<2x32xf32>
    %891 = arith.negf %890 : vector<2x32xf32>
    %892 = math.exp %891 : vector<2x32xf32>
    %cst_204 = arith.constant 1.000000e+00 : f32
    %893 = vector.broadcast %cst_204 : f32 to vector<2x32xf32>
    %894 = arith.addf %893, %892 : vector<2x32xf32>
    %895 = arith.divf %893, %894 : vector<2x32xf32>
    %896 = vector.extract_strided_slice %886 {offsets = [0, 32], sizes = [2, 32], strides = [1, 1]} : vector<2x96xf32> to vector<2x32xf32>
    %897 = vector.extract_strided_slice %885 {offsets = [0, 32], sizes = [2, 32], strides = [1, 1]} : vector<2x192xf32> to vector<2x32xf32>
    %898 = arith.addf %896, %897 : vector<2x32xf32>
    %899 = arith.negf %898 : vector<2x32xf32>
    %900 = math.exp %899 : vector<2x32xf32>
    %cst_205 = arith.constant 1.000000e+00 : f32
    %901 = vector.broadcast %cst_205 : f32 to vector<2x32xf32>
    %902 = arith.addf %901, %900 : vector<2x32xf32>
    %903 = arith.divf %901, %902 : vector<2x32xf32>
    %904 = vector.extract_strided_slice %886 {offsets = [0, 64], sizes = [2, 32], strides = [1, 1]} : vector<2x96xf32> to vector<2x32xf32>
    %905 = vector.extract_strided_slice %885 {offsets = [0, 64], sizes = [2, 32], strides = [1, 1]} : vector<2x192xf32> to vector<2x32xf32>
    %906 = arith.addf %905, %602 : vector<2x32xf32>
    %907 = arith.mulf %895, %906 : vector<2x32xf32>
    %908 = arith.addf %904, %907 : vector<2x32xf32>
    %909 = math.tanh %908 : vector<2x32xf32>
    %910 = vector.extract_strided_slice %884 {offsets = [0, 0], sizes = [2, 32], strides = [1, 1]} : vector<2x64xf32> to vector<2x32xf32>
    %c4_i32_206 = arith.constant 4 : i32
    %911 = vector.broadcast %c4_i32_206 : i32 to vector<2x1xi32>
    %912 = arith.cmpi sgt, %0, %911 : vector<2x1xi32>
    %cst_207 = arith.constant 1.000000e+00 : f32
    %913 = vector.broadcast %cst_207 : f32 to vector<2x32xf32>
    %914 = arith.subf %913, %903 : vector<2x32xf32>
    %915 = arith.mulf %914, %909 : vector<2x32xf32>
    %916 = arith.mulf %903, %910 : vector<2x32xf32>
    %917 = arith.addf %915, %916 : vector<2x32xf32>
    %918 = vector.shape_cast %912 : vector<2x1xi1> to vector<2x1xi1>
    %919 = vector.broadcast %918 : vector<2x1xi1> to vector<2x32xi1>
    %920 = arith.select %919, %917, %910 : vector<2x32xi1>, vector<2x32xf32>
    %921 = vector.extract_strided_slice %887 {offsets = [0, 0], sizes = [2, 32], strides = [1, 1]} : vector<2x96xf32> to vector<2x32xf32>
    %922 = vector.extract_strided_slice %885 {offsets = [0, 96], sizes = [2, 32], strides = [1, 1]} : vector<2x192xf32> to vector<2x32xf32>
    %923 = arith.addf %921, %922 : vector<2x32xf32>
    %924 = arith.negf %923 : vector<2x32xf32>
    %925 = math.exp %924 : vector<2x32xf32>
    %cst_208 = arith.constant 1.000000e+00 : f32
    %926 = vector.broadcast %cst_208 : f32 to vector<2x32xf32>
    %927 = arith.addf %926, %925 : vector<2x32xf32>
    %928 = arith.divf %926, %927 : vector<2x32xf32>
    %929 = vector.extract_strided_slice %887 {offsets = [0, 32], sizes = [2, 32], strides = [1, 1]} : vector<2x96xf32> to vector<2x32xf32>
    %930 = vector.extract_strided_slice %885 {offsets = [0, 128], sizes = [2, 32], strides = [1, 1]} : vector<2x192xf32> to vector<2x32xf32>
    %931 = arith.addf %929, %930 : vector<2x32xf32>
    %932 = arith.negf %931 : vector<2x32xf32>
    %933 = math.exp %932 : vector<2x32xf32>
    %cst_209 = arith.constant 1.000000e+00 : f32
    %934 = vector.broadcast %cst_209 : f32 to vector<2x32xf32>
    %935 = arith.addf %934, %933 : vector<2x32xf32>
    %936 = arith.divf %934, %935 : vector<2x32xf32>
    %937 = vector.extract_strided_slice %887 {offsets = [0, 64], sizes = [2, 32], strides = [1, 1]} : vector<2x96xf32> to vector<2x32xf32>
    %938 = vector.extract_strided_slice %885 {offsets = [0, 160], sizes = [2, 32], strides = [1, 1]} : vector<2x192xf32> to vector<2x32xf32>
    %939 = arith.addf %938, %603 : vector<2x32xf32>
    %940 = arith.mulf %928, %939 : vector<2x32xf32>
    %941 = arith.addf %937, %940 : vector<2x32xf32>
    %942 = math.tanh %941 : vector<2x32xf32>
    %943 = vector.extract_strided_slice %884 {offsets = [0, 32], sizes = [2, 32], strides = [1, 1]} : vector<2x64xf32> to vector<2x32xf32>
    %c3_i32_210 = arith.constant 3 : i32
    %944 = vector.broadcast %c3_i32_210 : i32 to vector<2x1xi32>
    %945 = arith.cmpi sgt, %0, %944 : vector<2x1xi32>
    %cst_211 = arith.constant 1.000000e+00 : f32
    %946 = vector.broadcast %cst_211 : f32 to vector<2x32xf32>
    %947 = arith.subf %946, %936 : vector<2x32xf32>
    %948 = arith.mulf %947, %942 : vector<2x32xf32>
    %949 = arith.mulf %936, %943 : vector<2x32xf32>
    %950 = arith.addf %948, %949 : vector<2x32xf32>
    %951 = vector.shape_cast %945 : vector<2x1xi1> to vector<2x1xi1>
    %952 = vector.broadcast %951 : vector<2x1xi1> to vector<2x32xi1>
    %953 = arith.select %952, %950, %943 : vector<2x32xi1>, vector<2x32xf32>
    %954 = tpu.concatenate %920, %953 in 1 : vector<2x32xf32>, vector<2x32xf32> -> vector<2x64xf32>
    %cst_212 = arith.constant dense<0.000000e+00> : vector<2x192xf32>
    %955 = tpu.matmul %954, %598, %cst_212 {dimension_numbers = #tpu.dot_dimension_numbers<[1], [0], [0], [1], [0, 0, 1, 1], [], []>} : vector<2x64xf32>, vector<64x192xf32>, vector<2x192xf32> -> vector<2x192xf32>
    %c10_213 = arith.constant 10 : index
    %c0_214 = arith.constant 0 : index
    %956 = vector.load %arg14[%c10_213, %c0_214] : memref<16x192xf32, #tpu.memory_space<vmem>>, vector<2x96xf32>
    %c4_215 = arith.constant 4 : index
    %c96_216 = arith.constant 96 : index
    %957 = vector.load %arg14[%c4_215, %c96_216] : memref<16x192xf32, #tpu.memory_space<vmem>>, vector<2x96xf32>
    %958 = vector.extract_strided_slice %956 {offsets = [0, 0], sizes = [2, 32], strides = [1, 1]} : vector<2x96xf32> to vector<2x32xf32>
    %959 = vector.extract_strided_slice %955 {offsets = [0, 0], sizes = [2, 32], strides = [1, 1]} : vector<2x192xf32> to vector<2x32xf32>
    %960 = arith.addf %958, %959 : vector<2x32xf32>
    %961 = arith.negf %960 : vector<2x32xf32>
    %962 = math.exp %961 : vector<2x32xf32>
    %cst_217 = arith.constant 1.000000e+00 : f32
    %963 = vector.broadcast %cst_217 : f32 to vector<2x32xf32>
    %964 = arith.addf %963, %962 : vector<2x32xf32>
    %965 = arith.divf %963, %964 : vector<2x32xf32>
    %966 = vector.extract_strided_slice %956 {offsets = [0, 32], sizes = [2, 32], strides = [1, 1]} : vector<2x96xf32> to vector<2x32xf32>
    %967 = vector.extract_strided_slice %955 {offsets = [0, 32], sizes = [2, 32], strides = [1, 1]} : vector<2x192xf32> to vector<2x32xf32>
    %968 = arith.addf %966, %967 : vector<2x32xf32>
    %969 = arith.negf %968 : vector<2x32xf32>
    %970 = math.exp %969 : vector<2x32xf32>
    %cst_218 = arith.constant 1.000000e+00 : f32
    %971 = vector.broadcast %cst_218 : f32 to vector<2x32xf32>
    %972 = arith.addf %971, %970 : vector<2x32xf32>
    %973 = arith.divf %971, %972 : vector<2x32xf32>
    %974 = vector.extract_strided_slice %956 {offsets = [0, 64], sizes = [2, 32], strides = [1, 1]} : vector<2x96xf32> to vector<2x32xf32>
    %975 = vector.extract_strided_slice %955 {offsets = [0, 64], sizes = [2, 32], strides = [1, 1]} : vector<2x192xf32> to vector<2x32xf32>
    %976 = arith.addf %975, %602 : vector<2x32xf32>
    %977 = arith.mulf %965, %976 : vector<2x32xf32>
    %978 = arith.addf %974, %977 : vector<2x32xf32>
    %979 = math.tanh %978 : vector<2x32xf32>
    %980 = vector.extract_strided_slice %954 {offsets = [0, 0], sizes = [2, 32], strides = [1, 1]} : vector<2x64xf32> to vector<2x32xf32>
    %c5_i32_219 = arith.constant 5 : i32
    %981 = vector.broadcast %c5_i32_219 : i32 to vector<2x1xi32>
    %982 = arith.cmpi sgt, %0, %981 : vector<2x1xi32>
    %cst_220 = arith.constant 1.000000e+00 : f32
    %983 = vector.broadcast %cst_220 : f32 to vector<2x32xf32>
    %984 = arith.subf %983, %973 : vector<2x32xf32>
    %985 = arith.mulf %984, %979 : vector<2x32xf32>
    %986 = arith.mulf %973, %980 : vector<2x32xf32>
    %987 = arith.addf %985, %986 : vector<2x32xf32>
    %988 = vector.shape_cast %982 : vector<2x1xi1> to vector<2x1xi1>
    %989 = vector.broadcast %988 : vector<2x1xi1> to vector<2x32xi1>
    %990 = arith.select %989, %987, %980 : vector<2x32xi1>, vector<2x32xf32>
    %991 = vector.extract_strided_slice %957 {offsets = [0, 0], sizes = [2, 32], strides = [1, 1]} : vector<2x96xf32> to vector<2x32xf32>
    %992 = vector.extract_strided_slice %955 {offsets = [0, 96], sizes = [2, 32], strides = [1, 1]} : vector<2x192xf32> to vector<2x32xf32>
    %993 = arith.addf %991, %992 : vector<2x32xf32>
    %994 = arith.negf %993 : vector<2x32xf32>
    %995 = math.exp %994 : vector<2x32xf32>
    %cst_221 = arith.constant 1.000000e+00 : f32
    %996 = vector.broadcast %cst_221 : f32 to vector<2x32xf32>
    %997 = arith.addf %996, %995 : vector<2x32xf32>
    %998 = arith.divf %996, %997 : vector<2x32xf32>
    %999 = vector.extract_strided_slice %957 {offsets = [0, 32], sizes = [2, 32], strides = [1, 1]} : vector<2x96xf32> to vector<2x32xf32>
    %1000 = vector.extract_strided_slice %955 {offsets = [0, 128], sizes = [2, 32], strides = [1, 1]} : vector<2x192xf32> to vector<2x32xf32>
    %1001 = arith.addf %999, %1000 : vector<2x32xf32>
    %1002 = arith.negf %1001 : vector<2x32xf32>
    %1003 = math.exp %1002 : vector<2x32xf32>
    %cst_222 = arith.constant 1.000000e+00 : f32
    %1004 = vector.broadcast %cst_222 : f32 to vector<2x32xf32>
    %1005 = arith.addf %1004, %1003 : vector<2x32xf32>
    %1006 = arith.divf %1004, %1005 : vector<2x32xf32>
    %1007 = vector.extract_strided_slice %957 {offsets = [0, 64], sizes = [2, 32], strides = [1, 1]} : vector<2x96xf32> to vector<2x32xf32>
    %1008 = vector.extract_strided_slice %955 {offsets = [0, 160], sizes = [2, 32], strides = [1, 1]} : vector<2x192xf32> to vector<2x32xf32>
    %1009 = arith.addf %1008, %603 : vector<2x32xf32>
    %1010 = arith.mulf %998, %1009 : vector<2x32xf32>
    %1011 = arith.addf %1007, %1010 : vector<2x32xf32>
    %1012 = math.tanh %1011 : vector<2x32xf32>
    %1013 = vector.extract_strided_slice %954 {offsets = [0, 32], sizes = [2, 32], strides = [1, 1]} : vector<2x64xf32> to vector<2x32xf32>
    %c2_i32_223 = arith.constant 2 : i32
    %1014 = vector.broadcast %c2_i32_223 : i32 to vector<2x1xi32>
    %1015 = arith.cmpi sgt, %0, %1014 : vector<2x1xi32>
    %cst_224 = arith.constant 1.000000e+00 : f32
    %1016 = vector.broadcast %cst_224 : f32 to vector<2x32xf32>
    %1017 = arith.subf %1016, %1006 : vector<2x32xf32>
    %1018 = arith.mulf %1017, %1012 : vector<2x32xf32>
    %1019 = arith.mulf %1006, %1013 : vector<2x32xf32>
    %1020 = arith.addf %1018, %1019 : vector<2x32xf32>
    %1021 = vector.shape_cast %1015 : vector<2x1xi1> to vector<2x1xi1>
    %1022 = vector.broadcast %1021 : vector<2x1xi1> to vector<2x32xi1>
    %1023 = arith.select %1022, %1020, %1013 : vector<2x32xi1>, vector<2x32xf32>
    %1024 = tpu.concatenate %990, %1023 in 1 : vector<2x32xf32>, vector<2x32xf32> -> vector<2x64xf32>
    %cst_225 = arith.constant dense<0.000000e+00> : vector<2x192xf32>
    %1025 = tpu.matmul %1024, %598, %cst_225 {dimension_numbers = #tpu.dot_dimension_numbers<[1], [0], [0], [1], [0, 0, 1, 1], [], []>} : vector<2x64xf32>, vector<64x192xf32>, vector<2x192xf32> -> vector<2x192xf32>
    %c12_226 = arith.constant 12 : index
    %c0_227 = arith.constant 0 : index
    %1026 = vector.load %arg14[%c12_226, %c0_227] : memref<16x192xf32, #tpu.memory_space<vmem>>, vector<2x96xf32>
    %c2_228 = arith.constant 2 : index
    %c96_229 = arith.constant 96 : index
    %1027 = vector.load %arg14[%c2_228, %c96_229] : memref<16x192xf32, #tpu.memory_space<vmem>>, vector<2x96xf32>
    %1028 = vector.extract_strided_slice %1026 {offsets = [0, 0], sizes = [2, 32], strides = [1, 1]} : vector<2x96xf32> to vector<2x32xf32>
    %1029 = vector.extract_strided_slice %1025 {offsets = [0, 0], sizes = [2, 32], strides = [1, 1]} : vector<2x192xf32> to vector<2x32xf32>
    %1030 = arith.addf %1028, %1029 : vector<2x32xf32>
    %1031 = arith.negf %1030 : vector<2x32xf32>
    %1032 = math.exp %1031 : vector<2x32xf32>
    %cst_230 = arith.constant 1.000000e+00 : f32
    %1033 = vector.broadcast %cst_230 : f32 to vector<2x32xf32>
    %1034 = arith.addf %1033, %1032 : vector<2x32xf32>
    %1035 = arith.divf %1033, %1034 : vector<2x32xf32>
    %1036 = vector.extract_strided_slice %1026 {offsets = [0, 32], sizes = [2, 32], strides = [1, 1]} : vector<2x96xf32> to vector<2x32xf32>
    %1037 = vector.extract_strided_slice %1025 {offsets = [0, 32], sizes = [2, 32], strides = [1, 1]} : vector<2x192xf32> to vector<2x32xf32>
    %1038 = arith.addf %1036, %1037 : vector<2x32xf32>
    %1039 = arith.negf %1038 : vector<2x32xf32>
    %1040 = math.exp %1039 : vector<2x32xf32>
    %cst_231 = arith.constant 1.000000e+00 : f32
    %1041 = vector.broadcast %cst_231 : f32 to vector<2x32xf32>
    %1042 = arith.addf %1041, %1040 : vector<2x32xf32>
    %1043 = arith.divf %1041, %1042 : vector<2x32xf32>
    %1044 = vector.extract_strided_slice %1026 {offsets = [0, 64], sizes = [2, 32], strides = [1, 1]} : vector<2x96xf32> to vector<2x32xf32>
    %1045 = vector.extract_strided_slice %1025 {offsets = [0, 64], sizes = [2, 32], strides = [1, 1]} : vector<2x192xf32> to vector<2x32xf32>
    %1046 = arith.addf %1045, %602 : vector<2x32xf32>
    %1047 = arith.mulf %1035, %1046 : vector<2x32xf32>
    %1048 = arith.addf %1044, %1047 : vector<2x32xf32>
    %1049 = math.tanh %1048 : vector<2x32xf32>
    %1050 = vector.extract_strided_slice %1024 {offsets = [0, 0], sizes = [2, 32], strides = [1, 1]} : vector<2x64xf32> to vector<2x32xf32>
    %c6_i32_232 = arith.constant 6 : i32
    %1051 = vector.broadcast %c6_i32_232 : i32 to vector<2x1xi32>
    %1052 = arith.cmpi sgt, %0, %1051 : vector<2x1xi32>
    %cst_233 = arith.constant 1.000000e+00 : f32
    %1053 = vector.broadcast %cst_233 : f32 to vector<2x32xf32>
    %1054 = arith.subf %1053, %1043 : vector<2x32xf32>
    %1055 = arith.mulf %1054, %1049 : vector<2x32xf32>
    %1056 = arith.mulf %1043, %1050 : vector<2x32xf32>
    %1057 = arith.addf %1055, %1056 : vector<2x32xf32>
    %1058 = vector.shape_cast %1052 : vector<2x1xi1> to vector<2x1xi1>
    %1059 = vector.broadcast %1058 : vector<2x1xi1> to vector<2x32xi1>
    %1060 = arith.select %1059, %1057, %1050 : vector<2x32xi1>, vector<2x32xf32>
    %1061 = vector.extract_strided_slice %1027 {offsets = [0, 0], sizes = [2, 32], strides = [1, 1]} : vector<2x96xf32> to vector<2x32xf32>
    %1062 = vector.extract_strided_slice %1025 {offsets = [0, 96], sizes = [2, 32], strides = [1, 1]} : vector<2x192xf32> to vector<2x32xf32>
    %1063 = arith.addf %1061, %1062 : vector<2x32xf32>
    %1064 = arith.negf %1063 : vector<2x32xf32>
    %1065 = math.exp %1064 : vector<2x32xf32>
    %cst_234 = arith.constant 1.000000e+00 : f32
    %1066 = vector.broadcast %cst_234 : f32 to vector<2x32xf32>
    %1067 = arith.addf %1066, %1065 : vector<2x32xf32>
    %1068 = arith.divf %1066, %1067 : vector<2x32xf32>
    %1069 = vector.extract_strided_slice %1027 {offsets = [0, 32], sizes = [2, 32], strides = [1, 1]} : vector<2x96xf32> to vector<2x32xf32>
    %1070 = vector.extract_strided_slice %1025 {offsets = [0, 128], sizes = [2, 32], strides = [1, 1]} : vector<2x192xf32> to vector<2x32xf32>
    %1071 = arith.addf %1069, %1070 : vector<2x32xf32>
    %1072 = arith.negf %1071 : vector<2x32xf32>
    %1073 = math.exp %1072 : vector<2x32xf32>
    %cst_235 = arith.constant 1.000000e+00 : f32
    %1074 = vector.broadcast %cst_235 : f32 to vector<2x32xf32>
    %1075 = arith.addf %1074, %1073 : vector<2x32xf32>
    %1076 = arith.divf %1074, %1075 : vector<2x32xf32>
    %1077 = vector.extract_strided_slice %1027 {offsets = [0, 64], sizes = [2, 32], strides = [1, 1]} : vector<2x96xf32> to vector<2x32xf32>
    %1078 = vector.extract_strided_slice %1025 {offsets = [0, 160], sizes = [2, 32], strides = [1, 1]} : vector<2x192xf32> to vector<2x32xf32>
    %1079 = arith.addf %1078, %603 : vector<2x32xf32>
    %1080 = arith.mulf %1068, %1079 : vector<2x32xf32>
    %1081 = arith.addf %1077, %1080 : vector<2x32xf32>
    %1082 = math.tanh %1081 : vector<2x32xf32>
    %1083 = vector.extract_strided_slice %1024 {offsets = [0, 32], sizes = [2, 32], strides = [1, 1]} : vector<2x64xf32> to vector<2x32xf32>
    %c1_i32_236 = arith.constant 1 : i32
    %1084 = vector.broadcast %c1_i32_236 : i32 to vector<2x1xi32>
    %1085 = arith.cmpi sgt, %0, %1084 : vector<2x1xi32>
    %cst_237 = arith.constant 1.000000e+00 : f32
    %1086 = vector.broadcast %cst_237 : f32 to vector<2x32xf32>
    %1087 = arith.subf %1086, %1076 : vector<2x32xf32>
    %1088 = arith.mulf %1087, %1082 : vector<2x32xf32>
    %1089 = arith.mulf %1076, %1083 : vector<2x32xf32>
    %1090 = arith.addf %1088, %1089 : vector<2x32xf32>
    %1091 = vector.shape_cast %1085 : vector<2x1xi1> to vector<2x1xi1>
    %1092 = vector.broadcast %1091 : vector<2x1xi1> to vector<2x32xi1>
    %1093 = arith.select %1092, %1090, %1083 : vector<2x32xi1>, vector<2x32xf32>
    %1094 = tpu.concatenate %1060, %1093 in 1 : vector<2x32xf32>, vector<2x32xf32> -> vector<2x64xf32>
    %cst_238 = arith.constant dense<0.000000e+00> : vector<2x192xf32>
    %1095 = tpu.matmul %1094, %598, %cst_238 {dimension_numbers = #tpu.dot_dimension_numbers<[1], [0], [0], [1], [0, 0, 1, 1], [], []>} : vector<2x64xf32>, vector<64x192xf32>, vector<2x192xf32> -> vector<2x192xf32>
    %c14_239 = arith.constant 14 : index
    %c0_240 = arith.constant 0 : index
    %1096 = vector.load %arg14[%c14_239, %c0_240] : memref<16x192xf32, #tpu.memory_space<vmem>>, vector<2x96xf32>
    %c0_241 = arith.constant 0 : index
    %c96_242 = arith.constant 96 : index
    %1097 = vector.load %arg14[%c0_241, %c96_242] : memref<16x192xf32, #tpu.memory_space<vmem>>, vector<2x96xf32>
    %1098 = vector.extract_strided_slice %1096 {offsets = [0, 0], sizes = [2, 32], strides = [1, 1]} : vector<2x96xf32> to vector<2x32xf32>
    %1099 = vector.extract_strided_slice %1095 {offsets = [0, 0], sizes = [2, 32], strides = [1, 1]} : vector<2x192xf32> to vector<2x32xf32>
    %1100 = arith.addf %1098, %1099 : vector<2x32xf32>
    %1101 = arith.negf %1100 : vector<2x32xf32>
    %1102 = math.exp %1101 : vector<2x32xf32>
    %cst_243 = arith.constant 1.000000e+00 : f32
    %1103 = vector.broadcast %cst_243 : f32 to vector<2x32xf32>
    %1104 = arith.addf %1103, %1102 : vector<2x32xf32>
    %1105 = arith.divf %1103, %1104 : vector<2x32xf32>
    %1106 = vector.extract_strided_slice %1096 {offsets = [0, 32], sizes = [2, 32], strides = [1, 1]} : vector<2x96xf32> to vector<2x32xf32>
    %1107 = vector.extract_strided_slice %1095 {offsets = [0, 32], sizes = [2, 32], strides = [1, 1]} : vector<2x192xf32> to vector<2x32xf32>
    %1108 = arith.addf %1106, %1107 : vector<2x32xf32>
    %1109 = arith.negf %1108 : vector<2x32xf32>
    %1110 = math.exp %1109 : vector<2x32xf32>
    %cst_244 = arith.constant 1.000000e+00 : f32
    %1111 = vector.broadcast %cst_244 : f32 to vector<2x32xf32>
    %1112 = arith.addf %1111, %1110 : vector<2x32xf32>
    %1113 = arith.divf %1111, %1112 : vector<2x32xf32>
    %1114 = vector.extract_strided_slice %1096 {offsets = [0, 64], sizes = [2, 32], strides = [1, 1]} : vector<2x96xf32> to vector<2x32xf32>
    %1115 = vector.extract_strided_slice %1095 {offsets = [0, 64], sizes = [2, 32], strides = [1, 1]} : vector<2x192xf32> to vector<2x32xf32>
    %1116 = arith.addf %1115, %602 : vector<2x32xf32>
    %1117 = arith.mulf %1105, %1116 : vector<2x32xf32>
    %1118 = arith.addf %1114, %1117 : vector<2x32xf32>
    %1119 = math.tanh %1118 : vector<2x32xf32>
    %1120 = vector.extract_strided_slice %1094 {offsets = [0, 0], sizes = [2, 32], strides = [1, 1]} : vector<2x64xf32> to vector<2x32xf32>
    %c7_i32_245 = arith.constant 7 : i32
    %1121 = vector.broadcast %c7_i32_245 : i32 to vector<2x1xi32>
    %1122 = arith.cmpi sgt, %0, %1121 : vector<2x1xi32>
    %cst_246 = arith.constant 1.000000e+00 : f32
    %1123 = vector.broadcast %cst_246 : f32 to vector<2x32xf32>
    %1124 = arith.subf %1123, %1113 : vector<2x32xf32>
    %1125 = arith.mulf %1124, %1119 : vector<2x32xf32>
    %1126 = arith.mulf %1113, %1120 : vector<2x32xf32>
    %1127 = arith.addf %1125, %1126 : vector<2x32xf32>
    %1128 = vector.shape_cast %1122 : vector<2x1xi1> to vector<2x1xi1>
    %1129 = vector.broadcast %1128 : vector<2x1xi1> to vector<2x32xi1>
    %1130 = arith.select %1129, %1127, %1120 : vector<2x32xi1>, vector<2x32xf32>
    %1131 = vector.extract_strided_slice %1097 {offsets = [0, 0], sizes = [2, 32], strides = [1, 1]} : vector<2x96xf32> to vector<2x32xf32>
    %1132 = vector.extract_strided_slice %1095 {offsets = [0, 96], sizes = [2, 32], strides = [1, 1]} : vector<2x192xf32> to vector<2x32xf32>
    %1133 = arith.addf %1131, %1132 : vector<2x32xf32>
    %1134 = arith.negf %1133 : vector<2x32xf32>
    %1135 = math.exp %1134 : vector<2x32xf32>
    %cst_247 = arith.constant 1.000000e+00 : f32
    %1136 = vector.broadcast %cst_247 : f32 to vector<2x32xf32>
    %1137 = arith.addf %1136, %1135 : vector<2x32xf32>
    %1138 = arith.divf %1136, %1137 : vector<2x32xf32>
    %1139 = vector.extract_strided_slice %1097 {offsets = [0, 32], sizes = [2, 32], strides = [1, 1]} : vector<2x96xf32> to vector<2x32xf32>
    %1140 = vector.extract_strided_slice %1095 {offsets = [0, 128], sizes = [2, 32], strides = [1, 1]} : vector<2x192xf32> to vector<2x32xf32>
    %1141 = arith.addf %1139, %1140 : vector<2x32xf32>
    %1142 = arith.negf %1141 : vector<2x32xf32>
    %1143 = math.exp %1142 : vector<2x32xf32>
    %cst_248 = arith.constant 1.000000e+00 : f32
    %1144 = vector.broadcast %cst_248 : f32 to vector<2x32xf32>
    %1145 = arith.addf %1144, %1143 : vector<2x32xf32>
    %1146 = arith.divf %1144, %1145 : vector<2x32xf32>
    %1147 = vector.extract_strided_slice %1097 {offsets = [0, 64], sizes = [2, 32], strides = [1, 1]} : vector<2x96xf32> to vector<2x32xf32>
    %1148 = vector.extract_strided_slice %1095 {offsets = [0, 160], sizes = [2, 32], strides = [1, 1]} : vector<2x192xf32> to vector<2x32xf32>
    %1149 = arith.addf %1148, %603 : vector<2x32xf32>
    %1150 = arith.mulf %1138, %1149 : vector<2x32xf32>
    %1151 = arith.addf %1147, %1150 : vector<2x32xf32>
    %1152 = math.tanh %1151 : vector<2x32xf32>
    %1153 = vector.extract_strided_slice %1094 {offsets = [0, 32], sizes = [2, 32], strides = [1, 1]} : vector<2x64xf32> to vector<2x32xf32>
    %c0_i32_249 = arith.constant 0 : i32
    %1154 = vector.broadcast %c0_i32_249 : i32 to vector<2x1xi32>
    %1155 = arith.cmpi sgt, %0, %1154 : vector<2x1xi32>
    %cst_250 = arith.constant 1.000000e+00 : f32
    %1156 = vector.broadcast %cst_250 : f32 to vector<2x32xf32>
    %1157 = arith.subf %1156, %1146 : vector<2x32xf32>
    %1158 = arith.mulf %1157, %1152 : vector<2x32xf32>
    %1159 = arith.mulf %1146, %1153 : vector<2x32xf32>
    %1160 = arith.addf %1158, %1159 : vector<2x32xf32>
    %1161 = vector.shape_cast %1155 : vector<2x1xi1> to vector<2x1xi1>
    %1162 = vector.broadcast %1161 : vector<2x1xi1> to vector<2x32xi1>
    %1163 = arith.select %1162, %1160, %1153 : vector<2x32xi1>, vector<2x32xf32>
    %1164 = tpu.concatenate %1130, %1163 in 1 : vector<2x32xf32>, vector<2x32xf32> -> vector<2x64xf32>
    %1165 = tpu.concatenate %588, %1164 in 1 : vector<2x64xf32>, vector<2x64xf32> -> vector<2x128xf32>
    %c0_251 = arith.constant 0 : index
    %c0_252 = arith.constant 0 : index
    %1166 = vector.load %arg10[%c0_251, %c0_252] : memref<128x32xf32, #tpu.memory_space<vmem>>, vector<128x32xf32>
    %cst_253 = arith.constant dense<0.000000e+00> : vector<2x32xf32>
    %1167 = tpu.matmul %1165, %1166, %cst_253 {dimension_numbers = #tpu.dot_dimension_numbers<[1], [0], [0], [1], [0, 0, 1, 1], [], []>} : vector<2x128xf32>, vector<128x32xf32>, vector<2x32xf32> -> vector<2x32xf32>
    %c0_254 = arith.constant 0 : index
    %c0_255 = arith.constant 0 : index
    %1168 = vector.load %arg11[%c0_254, %c0_255] : memref<1x32xf32, #tpu.memory_space<vmem>>, vector<1x32xf32>
    %1169 = vector.broadcast %1168 : vector<1x32xf32> to vector<2x32xf32>
    %1170 = arith.addf %1167, %1169 : vector<2x32xf32>
    %1171 = vector.extract_strided_slice %1170 {offsets = [0, 0], sizes = [2, 16], strides = [1, 1]} : vector<2x32xf32> to vector<2x16xf32>
    %c0_256 = arith.constant 0 : index
    %c0_257 = arith.constant 0 : index
    %1172 = vector.load %arg12[%c0_256, %c0_257] : memref<2x16xf32, #tpu.memory_space<vmem>>, vector<2x16xf32>
    tpu.vector_store %arg12[%c0_256, %c0_257], %1171 {strides = array<i32>} : memref<2x16xf32, #tpu.memory_space<vmem>>, vector<2x16xf32>,
    %1173 = vector.extract_strided_slice %1170 {offsets = [0, 16], sizes = [2, 16], strides = [1, 1]} : vector<2x32xf32> to vector<2x16xf32>
    %c0_258 = arith.constant 0 : index
    %c0_259 = arith.constant 0 : index
    %1174 = vector.load %arg13[%c0_258, %c0_259] : memref<2x16xf32, #tpu.memory_space<vmem>>, vector<2x16xf32>
    tpu.vector_store %arg13[%c0_258, %c0_259], %1173 {strides = array<i32>} : memref<2x16xf32, #tpu.memory_space<vmem>>, vector<2x16xf32>,
    return
  }
}

</mosaic_0001>

<llo_original>
// kernel: smiles_encoder_forward.1
$region0: #{smiles_encoder_forward.1}
  #allocation0 [shape = 'u32[]', space=smem, size = 0x4, offset = 0x4, fixed_abs, tag = 'smem constant byte address 0x4 - core index']
  #allocation1 [shape = 'u32[144,128]{1,0:T(1,128)}', space=vmem, size = 0x12000, scoped, tag = 'internal scratch']
  #allocation2 [shape = 'f32[16,192]{1,0:T(8,128)}', space=vmem, size = 0x4000, scoped, tag = 'scratch operand']
  #allocation3 [shape = 'f32[16,64]{1,0:T(8,128)}', space=vmem, size = 0x2000, scoped, tag = 'scratch operand']
  %s0 = inlined_call_operand.vmem [shape: f32[16,32], index: 0, kind: input, shape index: {}]
  %s1 = inlined_call_operand.vmem [shape: s32[2,1], index: 1, kind: input, shape index: {}]
  %s2 = inlined_call_operand.hbm [shape: f32[32,192], index: 2, kind: input, shape index: {}]
  %s3 = inlined_call_operand.hbm [shape: f32[1,192], index: 3, kind: input, shape index: {}]
  %s4 = inlined_call_operand.vmem [shape: f32[64,192], index: 4, kind: input, shape index: {}]
  %s5 = inlined_call_operand.hbm [shape: f32[1,64], index: 5, kind: input, shape index: {}]
  %s6 = inlined_call_operand.vmem [shape: f32[64,192], index: 6, kind: input, shape index: {}]
  %s7 = inlined_call_operand.vmem [shape: f32[1,192], index: 7, kind: input, shape index: {}]
  %s8 = inlined_call_operand.vmem [shape: f32[64,192], index: 8, kind: input, shape index: {}]
  %s9 = inlined_call_operand.vmem [shape: f32[1,64], index: 9, kind: input, shape index: {}]
  %s10 = inlined_call_operand.vmem [shape: f32[128,32], index: 10, kind: input, shape index: {}]
  %s11 = inlined_call_operand.hbm [shape: f32[1,32], index: 11, kind: input, shape index: {}]
  %s12 = inlined_call_operand.hbm [shape: f32[2,16], index: 12, kind: output, shape index: {0}]
  %s13 = inlined_call_operand.hbm [shape: f32[2,16], index: 13, kind: output, shape index: {1}]
  %14 = xla_tuple %s12, %s13
  %s15 = sld [smem:[#allocation0]]
  $region82: #{smiles_encoder_forward.1} parent=0
    _
  %s17 = ssub.s32 1, %s15
  %s18 = scalar_select 0, %s17, %s15
  $region1: #{smiles_encoder_forward.1} parent=0
    #allocation4 [shape = 'u8[32768]{0}', space=vmem, size = 0x8000, scoped, tag = 'input window, operand 2, single buffered']
    #allocation5 [shape = 's32[1]{0}', space=sflag, size = 0x4, scoped, tag = 'scoped memory for smiles_encoder_forward.1']
    #allocation6 [shape = 's32[1]{0}', space=sflag, size = 0x4, scoped, tag = 'scoped memory for smiles_encoder_forward.1']
    #allocation7 [shape = 'u8[1024]{0}', space=vmem, size = 0x400, scoped, tag = 'input window, operand 3, single buffered']
    #allocation8 [shape = 's32[1]{0}', space=sflag, size = 0x4, scoped, tag = 'scoped memory for smiles_encoder_forward.1']
    #allocation9 [shape = 'u8[512]{0}', space=vmem, size = 0x400, scoped, tag = 'input window, operand 5, single buffered']
    #allocation10 [shape = 'u8[512]{0}', space=vmem, size = 0x400, scoped, tag = 'input window, operand 11, single buffered']
    #allocation11 [shape = 's32[1]{0}', space=sflag, size = 0x4, scoped, tag = 'scoped memory for smiles_encoder_forward.1']
    #allocation12 [shape = 'u8[1024]{0}', space=vmem, size = 0x400, scoped, tag = 'output window, operand 0, single buffered']
    #allocation13 [shape = 'u8[1024]{0}', space=vmem, size = 0x400, scoped, tag = 'output window, operand 1, single buffered']
    #allocation14 [shape = 's32[1]{0}', space=sflag, size = 0x4, scoped, tag = 'scoped memory for smiles_encoder_forward.1']
    %19 = vsyncpa [#allocation5], 0
    %20 = vsyncpa [#allocation8], 0
    %21 = vsyncpa [#allocation11], 0
    %22 = vsyncpa [#allocation6], 0
    %23 = vsyncpa [#allocation14], 0
    // Predicated region
    $region2: #{smiles_encoder_forward.1} parent=1 // pred_check
      _
    $region3: #{smiles_encoder_forward.1} parent=1 // pred_check_branch
      %25 = sbr.rel (0) target = $region5
    $region4: #{smiles_encoder_forward.1} parent=1 // pred_region
      _
    $region5: #{smiles_encoder_forward.1} parent=1 // pred_fallthru
      _
    // Predicated region
    $region6: #{smiles_encoder_forward.1} parent=1 // pred_check
      _
    $region7: #{smiles_encoder_forward.1} parent=1 // pred_check_branch
      %27 = sbr.rel (0) target = $region9
    $region8: #{smiles_encoder_forward.1} parent=1 // pred_region
      _
    $region9: #{smiles_encoder_forward.1} parent=1 // pred_fallthru
      _
    // Predicated region
    $region10: #{smiles_encoder_forward.1} parent=1 // pred_check
      _
    $region11: #{smiles_encoder_forward.1} parent=1 // pred_check_branch
      %29 = sbr.rel (0) target = $region13
    $region12: #{smiles_encoder_forward.1} parent=1 // pred_region
      %s31 = ssub.s32 1024, 1024
      %32 = vsyncadd [#allocation5], %s31
      %s33 = sshll.u32 [#allocation4], 4
      %s34 = int_to_ptr.vmem [resolvable:$true] %s33
      %39 = dma.hbm_to_vmem [thread:$0]  %s2, 1024, %s34, [#allocation5], 256, 256, 16
    $region13: #{smiles_encoder_forward.1} parent=1 // pred_fallthru
      _
    // Predicated region
    $region14: #{smiles_encoder_forward.1} parent=1 // pred_check
      _
    $region15: #{smiles_encoder_forward.1} parent=1 // pred_check_branch
      %41 = sbr.rel (0) target = $region17
    $region16: #{smiles_encoder_forward.1} parent=1 // pred_region
      %s43 = ssub.s32 32, 32
      %44 = vsyncadd [#allocation8], %s43
      %s46 = sshll.u32 [#allocation7], 4
      %s47 = int_to_ptr.vmem [resolvable:$true] %s46
      %49 = dma.hbm_to_vmem [thread:$0]  %s3, 32, %s47, [#allocation8]
    $region17: #{smiles_encoder_forward.1} parent=1 // pred_fallthru
      _
    // Predicated region
    $region18: #{smiles_encoder_forward.1} parent=1 // pred_check
      _
    $region19: #{smiles_encoder_forward.1} parent=1 // pred_check_branch
      %51 = sbr.rel (0) target = $region21
    $region20: #{smiles_encoder_forward.1} parent=1 // pred_region
      _
    $region21: #{smiles_encoder_forward.1} parent=1 // pred_fallthru
      _
    // Predicated region
    $region22: #{smiles_encoder_forward.1} parent=1 // pred_check
      _
    $region23: #{smiles_encoder_forward.1} parent=1 // pred_check_branch
      %53 = sbr.rel (0) target = $region25
    $region24: #{smiles_encoder_forward.1} parent=1 // pred_region
      %s55 = ssub.s32 16, 16
      %56 = vsyncadd [#allocation8], %s55
      %s58 = sshll.u32 [#allocation9], 4
      %s59 = int_to_ptr.vmem [resolvable:$true] %s58
      %61 = dma.hbm_to_vmem [thread:$0]  %s5, 16, %s59, [#allocation8]
    $region25: #{smiles_encoder_forward.1} parent=1 // pred_fallthru
      _
    // Predicated region
    $region26: #{smiles_encoder_forward.1} parent=1 // pred_check
      _
    $region27: #{smiles_encoder_forward.1} parent=1 // pred_check_branch
      %63 = sbr.rel (0) target = $region29
    $region28: #{smiles_encoder_forward.1} parent=1 // pred_region
      _
    $region29: #{smiles_encoder_forward.1} parent=1 // pred_fallthru
      _
    // Predicated region
    $region30: #{smiles_encoder_forward.1} parent=1 // pred_check
      _
    $region31: #{smiles_encoder_forward.1} parent=1 // pred_check_branch
      %65 = sbr.rel (0) target = $region33
    $region32: #{smiles_encoder_forward.1} parent=1 // pred_region
      _
    $region33: #{smiles_encoder_forward.1} parent=1 // pred_fallthru
      _
    // Predicated region
    $region34: #{smiles_encoder_forward.1} parent=1 // pred_check
      _
    $region35: #{smiles_encoder_forward.1} parent=1 // pred_check_branch
      %67 = sbr.rel (0) target = $region37
    $region36: #{smiles_encoder_forward.1} parent=1 // pred_region
      _
    $region37: #{smiles_encoder_forward.1} parent=1 // pred_fallthru
      _
    // Predicated region
    $region38: #{smiles_encoder_forward.1} parent=1 // pred_check
      _
    $region39: #{smiles_encoder_forward.1} parent=1 // pred_check_branch
      %69 = sbr.rel (0) target = $region41
    $region40: #{smiles_encoder_forward.1} parent=1 // pred_region
      _
    $region41: #{smiles_encoder_forward.1} parent=1 // pred_fallthru
      _
    // Predicated region
    $region42: #{smiles_encoder_forward.1} parent=1 // pred_check
      _
    $region43: #{smiles_encoder_forward.1} parent=1 // pred_check_branch
      %71 = sbr.rel (0) target = $region45
    $region44: #{smiles_encoder_forward.1} parent=1 // pred_region
      _
    $region45: #{smiles_encoder_forward.1} parent=1 // pred_fallthru
      _
    // Predicated region
    $region46: #{smiles_encoder_forward.1} parent=1 // pred_check
      _
    $region47: #{smiles_encoder_forward.1} parent=1 // pred_check_branch
      %73 = sbr.rel (0) target = $region49
    $region48: #{smiles_encoder_forward.1} parent=1 // pred_region
      %s75 = ssub.s32 16, 16
      %76 = vsyncadd [#allocation11], %s75
      %s78 = sshll.u32 [#allocation10], 4
      %s79 = int_to_ptr.vmem [resolvable:$true] %s78
      %81 = dma.hbm_to_vmem [thread:$0]  %s11, 16, %s79, [#allocation11]
    $region49: #{smiles_encoder_forward.1} parent=1 // pred_fallthru
      _
    // Predicated region
    $region50: #{smiles_encoder_forward.1} parent=1 // pred_check
      _
    $region51: #{smiles_encoder_forward.1} parent=1 // pred_check_branch
      %83 = sbr.rel (0) target = $region53
    $region52: #{smiles_encoder_forward.1} parent=1 // pred_region
      %84 = dma.done [#allocation5], 1024
    $region53: #{smiles_encoder_forward.1} parent=1 // pred_fallthru
      _
    // Predicated region
    $region54: #{smiles_encoder_forward.1} parent=1 // pred_check
      _
    $region55: #{smiles_encoder_forward.1} parent=1 // pred_check_branch
      %86 = sbr.rel (0) target = $region57
    $region56: #{smiles_encoder_forward.1} parent=1 // pred_region
      %87 = dma.done [#allocation8], 32
    $region57: #{smiles_encoder_forward.1} parent=1 // pred_fallthru
      _
    // Predicated region
    $region58: #{smiles_encoder_forward.1} parent=1 // pred_check
      _
    $region59: #{smiles_encoder_forward.1} parent=1 // pred_check_branch
      %89 = sbr.rel (0) target = $region61
    $region60: #{smiles_encoder_forward.1} parent=1 // pred_region
      %90 = dma.done [#allocation8], 16
    $region61: #{smiles_encoder_forward.1} parent=1 // pred_fallthru
      _
    // Predicated region
    $region62: #{smiles_encoder_forward.1} parent=1 // pred_check
      _
    $region63: #{smiles_encoder_forward.1} parent=1 // pred_check_branch
      %92 = sbr.rel (0) target = $region65
    $region64: #{smiles_encoder_forward.1} parent=1 // pred_region
      %93 = dma.done [#allocation11], 16
    $region65: #{smiles_encoder_forward.1} parent=1 // pred_fallthru
      _
    %v94 = vld [vmem:[%s1] sm:$0x3]
    %v95 = vld [vmem:[%s0] sm:$0xff]
    %v96 = vld [vmem:[%s0 + $0x8] sm:$0xff]
    %v97 = vld [vmem:[#allocation4] sm:$0xff]
    %v98 = vld [vmem:[#allocation4 + $0x8] sm:$0xff]
    %v99 = vld [vmem:[#allocation4 + $0x10] sm:$0xff]
    %v100 = vld [vmem:[#allocation4 + $0x18] sm:$0xff]
    %v101 = vld [vmem:[#allocation4 + $0x20] sm:$0xff]
    %v102 = vld [vmem:[#allocation4 + $0x28] sm:$0xff]
    %v103 = vld [vmem:[#allocation4 + $0x30] sm:$0xff]
    %v104 = vld [vmem:[#allocation4 + $0x38] sm:$0xff]
    %v105 = vld [vmem:[#allocation7] sm:$0x3]
    %v107 = vlaneseq
    %v108 = vshrl.u32 %v107, 7
    %v109 = vsub.s32 0, %v108
    %v110 = vrot.slane %v105, %v109
    %v111 = vlaneseq
    %v112 = vshrl.u32 %v111, 7
    %v113 = vsub.s32 1, %v112
    %v114 = vrot.slane %v105, %v113
    %vm117 = vcmask 261120
    %v119 = vsel %vm117, %v95, 0
    %v122 = vsel %vm117, %v96, 0
    %124 = vmatprep.subr.mxu0 %v98
    %125 = vmatpush1.msra.mxu0 %v97
    %126 = vmatprep.subr.mxu0 %v100
    %127 = vmatpush1.msra.mxu0 %v99
    %128 = vmatprep.subr.mxu0 %v102
    %129 = vmatpush1.msra.mxu0 %v101
    %130 = vmatprep.subr.mxu0 %v104
    %131 = vmatpush1.msra.mxu0 %v103
    %132 = vmatprep.subr.mxu0 0.0
    %133 = vmatpush1.msra.mxu0 0.0
    %134 = vmatprep.subr.mxu0 0.0
    %135 = vmatpush1.msra.mxu0 0.0
    %136 = vmatprep.subr.mxu0 0.0
    %137 = vmatpush1.msra.mxu0 0.0
    %138 = vmatprep.subr.mxu0 0.0
    %139 = vmatpush1.msra.mxu0 0.0
    %140 = vmatprep.subr.mxu0 0.0
    %141 = vmatpush1.msra.mxu0 0.0
    %142 = vmatprep.subr.mxu0 0.0
    %143 = vmatpush1.msra.mxu0 0.0
    %144 = vmatprep.subr.mxu0 0.0
    %145 = vmatpush1.msra.mxu0 0.0
    %146 = vmatprep.subr.mxu0 0.0
    %147 = vmatpush1.msra.mxu0 0.0
    %148 = vmatprep.subr.mxu0 0.0
    %149 = vmatpush1.msra.mxu0 0.0
    %150 = vmatprep.subr.mxu0 0.0
    %151 = vmatpush1.msra.mxu0 0.0
    %152 = vmatprep.subr.mxu0 0.0
    %153 = vmatpush1.msra.mxu0 0.0
    %154 = vmatprep.subr.mxu0 0.0
    %155 = vmatpush1.msra.mxu0 0.0
    %156 = vmatprep.subr.mxu0 0.0
    %157 = vmatpush1.msra.mxu0 0.0
    %158 = vmatprep.subr.mxu0 0.0
    %159 = vmatpush1.msra.mxu0 0.0
    %160 = vmatprep.subr.mxu0 0.0
    %161 = vmatpush1.msra.mxu0 0.0
    %162 = vmatprep.subr.mxu0 0.0
    %163 = vmatpush1.msra.mxu0 0.0
    %164 = vmatprep.subr.mxu0 0.0
    %165 = vmatpush1.msra.mxu0 0.0
    %166 = vmatprep.subr.mxu0 0.0
    %167 = vmatpush1.msra.mxu0 0.0
    %168 = vmatprep.subr.mxu0 0.0
    %169 = vmatpush1.msra.mxu0 0.0
    %170 = vmatprep.subr.mxu0 0.0
    %171 = vmatpush1.msra.mxu0 0.0
    %172 = vmatprep.subr.mxu0 0.0
    %173 = vmatpush1.msra.mxu0 0.0
    %174 = vmatprep.subr.mxu0 0.0
    %175 = vmatpush1.msra.mxu0 0.0
    %176 = vmatprep.subr.mxu0 0.0
    %177 = vmatpush1.msra.mxu0 0.0
    %178 = vmatprep.subr.mxu0 0.0
    %179 = vmatpush1.msra.mxu0 0.0
    %180 = vmatprep.subr.mxu0 0.0
    %181 = vmatpush1.msra.mxu0 0.0
    %182 = vmatprep.subr.mxu0 0.0
    %183 = vmatpush1.msra.mxu0 0.0
    %184 = vmatprep.subr.mxu0 0.0
    %185 = vmatpush1.msra.mxu0 0.0
    %186 = vmatprep.subr.mxu0 0.0
    %187 = vmatpush1.msra.mxu0 0.0
    %188 = vmatprep.mubr.f32.mxu0 0.0
    %189 = vmatmul.mubr.f32.gmra.mrb[0].mxu0 %v119
    %v190 = vpop.f32.mrb[0].mxu0
    %v191 = vadd.f32 %v110, %v190
    %v192 = vpop.f32.mrb[0].mxu0
    %v193 = vadd.f32 %v114, %v192
    %194 = vmatprep.mubr.f32.mxu0 0.0
    %195 = vmatmul.mubr.f32.gmra.mrb[0].mxu0 %v122
    %v196 = vpop.f32.mrb[0].mxu0
    %v197 = vadd.f32 %v110, %v196
    %v198 = vpop.f32.mrb[0].mxu0
    %v199 = vadd.f32 %v114, %v198
    %200 = vdwg.mxu0
    %201 = vst [vmem:[#allocation2] sm:$0xff] %v191
    %vm202 = vcmask 523264
    %203 = vst.msk [vmem:[#allocation2 + $0x8] sm:$0xff] %vm202, %v193
    %204 = vst [vmem:[#allocation2 + $0x10] sm:$0xff] %v197
    %205 = vst.msk [vmem:[#allocation2 + $0x18] sm:$0xff] %vm202, %v199
    %v206 = vld [vmem:[%s4] sm:$0xff]
    %v207 = vld [vmem:[%s4 + $0x8] sm:$0xff]
    %v208 = vld [vmem:[%s4 + $0x10] sm:$0xff]
    %v209 = vld [vmem:[%s4 + $0x18] sm:$0xff]
    %v210 = vld [vmem:[%s4 + $0x20] sm:$0xff]
    %v211 = vld [vmem:[%s4 + $0x28] sm:$0xff]
    %v212 = vld [vmem:[%s4 + $0x30] sm:$0xff]
    %v213 = vld [vmem:[%s4 + $0x38] sm:$0xff]
    %v214 = vld [vmem:[%s4 + $0x40] sm:$0xff]
    %v215 = vld [vmem:[%s4 + $0x48] sm:$0xff]
    %v216 = vld [vmem:[%s4 + $0x50] sm:$0xff]
    %v217 = vld [vmem:[%s4 + $0x58] sm:$0xff]
    %v218 = vld [vmem:[%s4 + $0x60] sm:$0xff]
    %v219 = vld [vmem:[%s4 + $0x68] sm:$0xff]
    %v220 = vld [vmem:[%s4 + $0x70] sm:$0xff]
    %v221 = vld [vmem:[%s4 + $0x78] sm:$0xff]
    %v222 = vld [vmem:[#allocation9] sm:$0x1]
    %v224 = vlaneseq
    %v225 = vshrl.u32 %v224, 7
    %v226 = vsub.s32 0, %v225
    %v227 = vrot.slane %v222, %v226
    %v230 = vsel %vm202, 0.0, 0
    %232 = vmatprep.subr.mxu0 %v207
    %233 = vmatpush1.msra.mxu0 %v206
    %234 = vmatprep.subr.mxu0 %v209
    %235 = vmatpush1.msra.mxu0 %v208
    %236 = vmatprep.subr.mxu0 %v211
    %237 = vmatpush1.msra.mxu0 %v210
    %238 = vmatprep.subr.mxu0 %v213
    %239 = vmatpush1.msra.mxu0 %v212
    %240 = vmatprep.subr.mxu0 %v215
    %241 = vmatpush1.msra.mxu0 %v214
    %242 = vmatprep.subr.mxu0 %v217
    %243 = vmatpush1.msra.mxu0 %v216
    %244 = vmatprep.subr.mxu0 %v219
    %245 = vmatpush1.msra.mxu0 %v218
    %246 = vmatprep.subr.mxu0 %v221
    %247 = vmatpush1.msra.mxu0 %v220
    %248 = vmatprep.subr.mxu0 0.0
    %249 = vmatpush1.msra.mxu0 0.0
    %250 = vmatprep.subr.mxu0 0.0
    %251 = vmatpush1.msra.mxu0 0.0
    %252 = vmatprep.subr.mxu0 0.0
    %253 = vmatpush1.msra.mxu0 0.0
    %254 = vmatprep.subr.mxu0 0.0
    %255 = vmatpush1.msra.mxu0 0.0
    %256 = vmatprep.subr.mxu0 0.0
    %257 = vmatpush1.msra.mxu0 0.0
    %258 = vmatprep.subr.mxu0 0.0
    %259 = vmatpush1.msra.mxu0 0.0
    %260 = vmatprep.subr.mxu0 0.0
    %261 = vmatpush1.msra.mxu0 0.0
    %262 = vmatprep.subr.mxu0 0.0
    %263 = vmatpush1.msra.mxu0 0.0
    %264 = vmatprep.subr.mxu0 0.0
    %265 = vmatpush1.msra.mxu0 0.0
    %266 = vmatprep.subr.mxu0 0.0
    %267 = vmatpush1.msra.mxu0 0.0
    %268 = vmatprep.subr.mxu0 0.0
    %269 = vmatpush1.msra.mxu0 0.0
    %270 = vmatprep.subr.mxu0 0.0
    %271 = vmatpush1.msra.mxu0 0.0
    %272 = vmatprep.subr.mxu0 0.0
    %273 = vmatpush1.msra.mxu0 0.0
    %274 = vmatprep.subr.mxu0 0.0
    %275 = vmatpush1.msra.mxu0 0.0
    %276 = vmatprep.subr.mxu0 0.0
    %277 = vmatpush1.msra.mxu0 0.0
    %278 = vmatprep.subr.mxu0 0.0
    %279 = vmatpush1.msra.mxu0 0.0
    %280 = vmatprep.subr.mxu0 0.0
    %281 = vmatpush1.msra.mxu0 0.0
    %282 = vmatprep.subr.mxu0 0.0
    %283 = vmatpush1.msra.mxu0 0.0
    %284 = vmatprep.subr.mxu0 0.0
    %285 = vmatpush1.msra.mxu0 0.0
    %286 = vmatprep.subr.mxu0 0.0
    %287 = vmatpush1.msra.mxu0 0.0
    %288 = vmatprep.subr.mxu0 0.0
    %289 = vmatpush1.msra.mxu0 0.0
    %290 = vmatprep.subr.mxu0 0.0
    %291 = vmatpush1.msra.mxu0 0.0
    %292 = vmatprep.subr.mxu0 0.0
    %293 = vmatpush1.msra.mxu0 0.0
    %294 = vmatprep.subr.mxu0 0.0
    %295 = vmatpush1.msra.mxu0 0.0
    %296 = vmatprep.mubr.f32.mxu0 0.0
    %297 = vmatmul.mubr.f32.gmra.mrb[0].mxu0 %v230
    %v298 = vpop.f32.mrb[0].mxu0
    %v299 = vadd.f32 0.0, %v298
    %v300 = vpop.f32.mrb[0].mxu0
    %v301 = vadd.f32 0.0, %v300
    %302 = vdwg.mxu0
    %v303 = vld [vmem:[#allocation2] sm:$0x3]
    %v304 = vld [vmem:[#allocation2 + $0x10] sm:$0xc0]
    %v305 = vld [vmem:[#allocation2 + $0x18] sm:$0xc0]
    %v306 = vadd.f32 %v303, %v299
    %v307 = vxor.u32 %v306, 2147483648
    %v308 = vmul.f32 %v307, 1.442695
    %v309 = vpow.pop %v308
    %v310 = vadd.f32 %v309, 1.0
    %v311 = vrcp.pop %v310
    %v312 = vmul.f32 1.0, %v311
    %313 = vrot.lane.b32.xlu0 %v227, 64
    %v314 = vpop.permute.xlu0 %313
    %v316 = vadd.f32 %v299, %v314
    %318 = vrot.lane.b32.xlu0 %v316, 64
    %v319 = vpop.permute.xlu0 %318
    %v321 = vmul.f32 %v312, %v319
    %323 = vrot.lane.b32.xlu0 %v321, 64
    %v324 = vpop.permute.xlu0 %323
    %v326 = vadd.f32 %v303, %v324
    %v327 = vtanh.pop %v326
    %vm328 = vcmp.gt.s32.totalorder %v94, 0
    %v329 = vsub.f32 1.0, %v312
    %331 = vrot.lane.b32.xlu0 %v327, 96
    %v332 = vpop.permute.xlu0 %331
    %v334 = vmul.f32 %v329, %v332
    %v335 = vmul.f32 %v312, 0.0
    %v336 = vadd.f32 %v334, %v335
    %v337 = vsel %vm328, 1, 0
    %338 = vset.pattern.permute.xlu0 0
    %339 = vperm.xlu0 %338, %v337
    %v340 = vpop.permute.xlu0 %339
    %vm341 = vcmp.eq.s32.totalorder %v340, 1
    %v342 = vsel %vm341, %v336, 0.0
    %v344 = vrot.slane %v299, 2
    %v346 = vadd.f32 %v304, %v344
    %v347 = vxor.u32 %v346, 2147483648
    %v348 = vmul.f32 %v347, 1.442695
    %v349 = vpow.pop %v348
    %v350 = vadd.f32 %v349, 1.0
    %v351 = vrcp.pop %v350
    %v352 = vmul.f32 1.0, %v351
    %v354 = vrot.slane %v301, 2
    %v356 = vadd.f32 %v305, %v354
    %v357 = vxor.u32 %v356, 2147483648
    %v358 = vmul.f32 %v357, 1.442695
    %v359 = vpow.pop %v358
    %v360 = vadd.f32 %v359, 1.0
    %v361 = vrcp.pop %v360
    %v362 = vmul.f32 1.0, %v361
    %v363 = vadd.f32 %v301, %v227
    %v365 = vrot.slane %v363, 2
    %366 = vrot.lane.b32.xlu0 %v365, 64
    %v367 = vpop.permute.xlu0 %366
    %v369 = vmul.f32 %v352, %v367
    %371 = vrot.lane.b32.xlu0 %v369, 64
    %v372 = vpop.permute.xlu0 %371
    %v374 = vadd.f32 %v305, %v372
    %v375 = vtanh.pop %v374
    %vm376 = vcmp.gt.s32.totalorder %v94, 7
    %v377 = vsub.f32 1.0, %v362
    %379 = vrot.lane.b32.xlu0 %v375, 96
    %v380 = vpop.permute.xlu0 %379
    %v382 = vmul.f32 %v377, %v380
    %v383 = vmul.f32 %v362, 0.0
    %v384 = vadd.f32 %v382, %v383
    %v385 = vsel %vm376, 1, 0
    %386 = vset.pattern.permute.xlu0 0
    %387 = vperm.xlu0 %386, %v385
    %v388 = vpop.permute.xlu0 %387
    %vm389 = vcmp.eq.s32.totalorder %v388, 1
    %v391 = vrot.slane %v384, 6
    %v393 = vsel %vm389, %v391, 0.0
    %395 = vrot.lane.b32.xlu0 %v342, 96
    %v396 = vpop.permute.xlu0 %395
    %399 = vrot.lane.b32.xlu0 %v393, 32
    %v400 = vpop.permute.xlu0 %399
    %v402 = vsel %vm117, %v396, %v400
    %vm403 = vcmask 254976
    %404 = vst.msk [vmem:[#allocation3] sm:$0x3] %vm403, %v396
    %vm405 = vcmask 517376
    %406 = vst.msk [vmem:[#allocation3 + $0xe] sm:$0x3] %vm405, %v400
    %v408 = vsel %vm202, %v402, 0
    %410 = vmatprep.subr.mxu0 %v207
    %411 = vmatpush1.msra.mxu0 %v206
    %412 = vmatprep.subr.mxu0 %v209
    %413 = vmatpush1.msra.mxu0 %v208
    %414 = vmatprep.subr.mxu0 %v211
    %415 = vmatpush1.msra.mxu0 %v210
    %416 = vmatprep.subr.mxu0 %v213
    %417 = vmatpush1.msra.mxu0 %v212
    %418 = vmatprep.subr.mxu0 %v215
    %419 = vmatpush1.msra.mxu0 %v214
    %420 = vmatprep.subr.mxu0 %v217
    %421 = vmatpush1.msra.mxu0 %v216
    %422 = vmatprep.subr.mxu0 %v219
    %423 = vmatpush1.msra.mxu0 %v218
    %424 = vmatprep.subr.mxu0 %v221
    %425 = vmatpush1.msra.mxu0 %v220
    %426 = vmatprep.subr.mxu0 0.0
    %427 = vmatpush1.msra.mxu0 0.0
    %428 = vmatprep.subr.mxu0 0.0
    %429 = vmatpush1.msra.mxu0 0.0
    %430 = vmatprep.subr.mxu0 0.0
    %431 = vmatpush1.msra.mxu0 0.0
    %432 = vmatprep.subr.mxu0 0.0
    %433 = vmatpush1.msra.mxu0 0.0
    %434 = vmatprep.subr.mxu0 0.0
    %435 = vmatpush1.msra.mxu0 0.0
    %436 = vmatprep.subr.mxu0 0.0
    %437 = vmatpush1.msra.mxu0 0.0
    %438 = vmatprep.subr.mxu0 0.0
    %439 = vmatpush1.msra.mxu0 0.0
    %440 = vmatprep.subr.mxu0 0.0
    %441 = vmatpush1.msra.mxu0 0.0
    %442 = vmatprep.subr.mxu0 0.0
    %443 = vmatpush1.msra.mxu0 0.0
    %444 = vmatprep.subr.mxu0 0.0
    %445 = vmatpush1.msra.mxu0 0.0
    %446 = vmatprep.subr.mxu0 0.0
    %447 = vmatpush1.msra.mxu0 0.0
    %448 = vmatprep.subr.mxu0 0.0
    %449 = vmatpush1.msra.mxu0 0.0
    %450 = vmatprep.subr.mxu0 0.0
    %451 = vmatpush1.msra.mxu0 0.0
    %452 = vmatprep.subr.mxu0 0.0
    %453 = vmatpush1.msra.mxu0 0.0
    %454 = vmatprep.subr.mxu0 0.0
    %455 = vmatpush1.msra.mxu0 0.0
    %456 = vmatprep.subr.mxu0 0.0
    %457 = vmatpush1.msra.mxu0 0.0
    %458 = vmatprep.subr.mxu0 0.0
    %459 = vmatpush1.msra.mxu0 0.0
    %460 = vmatprep.subr.mxu0 0.0
    %461 = vmatpush1.msra.mxu0 0.0
    %462 = vmatprep.subr.mxu0 0.0
    %463 = vmatpush1.msra.mxu0 0.0
    %464 = vmatprep.subr.mxu0 0.0
    %465 = vmatpush1.msra.mxu0 0.0
    %466 = vmatprep.subr.mxu0 0.0
    %467 = vmatpush1.msra.mxu0 0.0
    %468 = vmatprep.subr.mxu0 0.0
    %469 = vmatpush1.msra.mxu0 0.0
    %470 = vmatprep.subr.mxu0 0.0
    %471 = vmatpush1.msra.mxu0 0.0
    %472 = vmatprep.subr.mxu0 0.0
    %473 = vmatpush1.msra.mxu0 0.0
    %474 = vmatprep.mubr.f32.mxu0 0.0
    %475 = vmatmul.mubr.f32.gmra.mrb[0].mxu0 %v408
    %v476 = vpop.f32.mrb[0].mxu0
    %v477 = vadd.f32 0.0, %v476
    %v478 = vpop.f32.mrb[0].mxu0
    %v479 = vadd.f32 0.0, %v478
    %480 = vdwg.mxu0
    %v481 = vld [vmem:[#allocation2] sm:$0xc]
    %v482 = vld [vmem:[#allocation2 + $0x10] sm:$0x30]
    %v483 = vld [vmem:[#allocation2 + $0x18] sm:$0x30]
    %v485 = vrot.slane %v477, 6
    %v487 = vadd.f32 %v481, %v485
    %v488 = vxor.u32 %v487, 2147483648
    %v489 = vmul.f32 %v488, 1.442695
    %v490 = vpow.pop %v489
    %v491 = vadd.f32 %v490, 1.0
    %v492 = vrcp.pop %v491
    %v493 = vmul.f32 1.0, %v492
    %v494 = vadd.f32 %v477, %v314
    %v496 = vrot.slane %v494, 6
    %497 = vrot.lane.b32.xlu0 %v496, 64
    %v498 = vpop.permute.xlu0 %497
    %v500 = vmul.f32 %v493, %v498
    %502 = vrot.lane.b32.xlu0 %v500, 64
    %v503 = vpop.permute.xlu0 %502
    %v505 = vadd.f32 %v481, %v503
    %v506 = vtanh.pop %v505
    %vm507 = vcmp.gt.s32.totalorder %v94, 1
    %v508 = vsub.f32 1.0, %v493
    %510 = vrot.lane.b32.xlu0 %v506, 96
    %v511 = vpop.permute.xlu0 %510
    %v513 = vmul.f32 %v508, %v511
    %v514 = vrot.slane %v402, 6
    %515 = vrot.lane.b32.xlu0 %v514, 32
    %v516 = vpop.permute.xlu0 %515
    %v518 = vmul.f32 %v493, %v516
    %v519 = vadd.f32 %v513, %v518
    %v520 = vsel %vm507, 1, 0
    %521 = vset.pattern.permute.xlu0 0
    %522 = vperm.xlu0 %521, %v520
    %v523 = vpop.permute.xlu0 %522
    %vm524 = vcmp.eq.s32.totalorder %v523, 1
    %v526 = vrot.slane %v519, 2
    %527 = vrot.lane.b32.xlu0 %v526, 96
    %v528 = vpop.permute.xlu0 %527
    %v530 = vsel %vm524, %v528, %v402
    %v531 = vrot.slane %v477, 4
    %v533 = vadd.f32 %v482, %v531
    %v534 = vxor.u32 %v533, 2147483648
    %v535 = vmul.f32 %v534, 1.442695
    %v536 = vpow.pop %v535
    %v537 = vadd.f32 %v536, 1.0
    %v538 = vrcp.pop %v537
    %v539 = vmul.f32 1.0, %v538
    %v541 = vrot.slane %v479, 4
    %v543 = vadd.f32 %v483, %v541
    %v544 = vxor.u32 %v543, 2147483648
    %v545 = vmul.f32 %v544, 1.442695
    %v546 = vpow.pop %v545
    %v547 = vadd.f32 %v546, 1.0
    %v548 = vrcp.pop %v547
    %v549 = vmul.f32 1.0, %v548
    %v550 = vadd.f32 %v479, %v227
    %v552 = vrot.slane %v550, 4
    %553 = vrot.lane.b32.xlu0 %v552, 64
    %v554 = vpop.permute.xlu0 %553
    %v556 = vmul.f32 %v539, %v554
    %558 = vrot.lane.b32.xlu0 %v556, 64
    %v559 = vpop.permute.xlu0 %558
    %v561 = vadd.f32 %v483, %v559
    %v562 = vtanh.pop %v561
    %vm563 = vcmp.gt.s32.totalorder %v94, 6
    %v564 = vsub.f32 1.0, %v549
    %566 = vrot.lane.b32.xlu0 %v562, 96
    %v567 = vpop.permute.xlu0 %566
    %v569 = vmul.f32 %v564, %v567
    %v570 = vrot.slane %v402, 4
    %571 = vrot.lane.b32.xlu0 %v570, 96
    %v572 = vpop.permute.xlu0 %571
    %v574 = vmul.f32 %v549, %v572
    %v575 = vadd.f32 %v569, %v574
    %v576 = vsel %vm563, 1, 0
    %577 = vset.pattern.permute.xlu0 0
    %578 = vperm.xlu0 %577, %v576
    %v579 = vpop.permute.xlu0 %578
    %vm580 = vcmp.eq.s32.totalorder %v579, 1
    %v582 = vrot.slane %v575, 4
    %584 = vrot.lane.b32.xlu0 %v402, 96
    %v585 = vpop.permute.xlu0 %584
    %v587 = vsel %vm580, %v582, %v585
    %589 = vrot.lane.b32.xlu0 %v587, 32
    %v590 = vpop.permute.xlu0 %589
    %v592 = vsel %vm117, %v530, %v590
    %593 = vst.msk [vmem:[#allocation3 + $0x2] sm:$0x3] %vm403, %v530
    %594 = vst.msk [vmem:[#allocation3 + $0xc] sm:$0x3] %vm405, %v590
    %v596 = vsel %vm202, %v592, 0
    %598 = vmatprep.subr.mxu0 %v207
    %599 = vmatpush1.msra.mxu0 %v206
    %600 = vmatprep.subr.mxu0 %v209
    %601 = vmatpush1.msra.mxu0 %v208
    %602 = vmatprep.subr.mxu0 %v211
    %603 = vmatpush1.msra.mxu0 %v210
    %604 = vmatprep.subr.mxu0 %v213
    %605 = vmatpush1.msra.mxu0 %v212
    %606 = vmatprep.subr.mxu0 %v215
    %607 = vmatpush1.msra.mxu0 %v214
    %608 = vmatprep.subr.mxu0 %v217
    %609 = vmatpush1.msra.mxu0 %v216
    %610 = vmatprep.subr.mxu0 %v219
    %611 = vmatpush1.msra.mxu0 %v218
    %612 = vmatprep.subr.mxu0 %v221
    %613 = vmatpush1.msra.mxu0 %v220
    %614 = vmatprep.subr.mxu0 0.0
    %615 = vmatpush1.msra.mxu0 0.0
    %616 = vmatprep.subr.mxu0 0.0
    %617 = vmatpush1.msra.mxu0 0.0
    %618 = vmatprep.subr.mxu0 0.0
    %619 = vmatpush1.msra.mxu0 0.0
    %620 = vmatprep.subr.mxu0 0.0
    %621 = vmatpush1.msra.mxu0 0.0
    %622 = vmatprep.subr.mxu0 0.0
    %623 = vmatpush1.msra.mxu0 0.0
    %624 = vmatprep.subr.mxu0 0.0
    %625 = vmatpush1.msra.mxu0 0.0
    %626 = vmatprep.subr.mxu0 0.0
    %627 = vmatpush1.msra.mxu0 0.0
    %628 = vmatprep.subr.mxu0 0.0
    %629 = vmatpush1.msra.mxu0 0.0
    %630 = vmatprep.subr.mxu0 0.0
    %631 = vmatpush1.msra.mxu0 0.0
    %632 = vmatprep.subr.mxu0 0.0
    %633 = vmatpush1.msra.mxu0 0.0
    %634 = vmatprep.subr.mxu0 0.0
    %635 = vmatpush1.msra.mxu0 0.0
    %636 = vmatprep.subr.mxu0 0.0
    %637 = vmatpush1.msra.mxu0 0.0
    %638 = vmatprep.subr.mxu0 0.0
    %639 = vmatpush1.msra.mxu0 0.0
    %640 = vmatprep.subr.mxu0 0.0
    %641 = vmatpush1.msra.mxu0 0.0
    %642 = vmatprep.subr.mxu0 0.0
    %643 = vmatpush1.msra.mxu0 0.0
    %644 = vmatprep.subr.mxu0 0.0
    %645 = vmatpush1.msra.mxu0 0.0
    %646 = vmatprep.subr.mxu0 0.0
    %647 = vmatpush1.msra.mxu0 0.0
    %648 = vmatprep.subr.mxu0 0.0
    %649 = vmatpush1.msra.mxu0 0.0
    %650 = vmatprep.subr.mxu0 0.0
    %651 = vmatpush1.msra.mxu0 0.0
    %652 = vmatprep.subr.mxu0 0.0
    %653 = vmatpush1.msra.mxu0 0.0
    %654 = vmatprep.subr.mxu0 0.0
    %655 = vmatpush1.msra.mxu0 0.0
    %656 = vmatprep.subr.mxu0 0.0
    %657 = vmatpush1.msra.mxu0 0.0
    %658 = vmatprep.subr.mxu0 0.0
    %659 = vmatpush1.msra.mxu0 0.0
    %660 = vmatprep.subr.mxu0 0.0
    %661 = vmatpush1.msra.mxu0 0.0
    %662 = vmatprep.mubr.f32.mxu0 0.0
    %663 = vmatmul.mubr.f32.gmra.mrb[0].mxu0 %v596
    %v664 = vpop.f32.mrb[0].mxu0
    %v665 = vadd.f32 0.0, %v664
    %v666 = vpop.f32.mrb[0].mxu0
    %v667 = vadd.f32 0.0, %v666
    %668 = vdwg.mxu0
    %v669 = vld [vmem:[#allocation2] sm:$0x30]
    %v670 = vld [vmem:[#allocation2 + $0x10] sm:$0xc]
    %v671 = vld [vmem:[#allocation2 + $0x18] sm:$0xc]
    %v673 = vrot.slane %v665, 4
    %v675 = vadd.f32 %v669, %v673
    %v676 = vxor.u32 %v675, 2147483648
    %v677 = vmul.f32 %v676, 1.442695
    %v678 = vpow.pop %v677
    %v679 = vadd.f32 %v678, 1.0
    %v680 = vrcp.pop %v679
    %v681 = vmul.f32 1.0, %v680
    %v682 = vadd.f32 %v665, %v314
    %v684 = vrot.slane %v682, 4
    %685 = vrot.lane.b32.xlu0 %v684, 64
    %v686 = vpop.permute.xlu0 %685
    %v688 = vmul.f32 %v681, %v686
    %690 = vrot.lane.b32.xlu0 %v688, 64
    %v691 = vpop.permute.xlu0 %690
    %v693 = vadd.f32 %v669, %v691
    %v694 = vtanh.pop %v693
    %vm695 = vcmp.gt.s32.totalorder %v94, 2
    %v696 = vsub.f32 1.0, %v681
    %698 = vrot.lane.b32.xlu0 %v694, 96
    %v699 = vpop.permute.xlu0 %698
    %v701 = vmul.f32 %v696, %v699
    %v702 = vrot.slane %v592, 4
    %703 = vrot.lane.b32.xlu0 %v702, 32
    %v704 = vpop.permute.xlu0 %703
    %v706 = vmul.f32 %v681, %v704
    %v707 = vadd.f32 %v701, %v706
    %v708 = vsel %vm695, 1, 0
    %709 = vset.pattern.permute.xlu0 0
    %710 = vperm.xlu0 %709, %v708
    %v711 = vpop.permute.xlu0 %710
    %vm712 = vcmp.eq.s32.totalorder %v711, 1
    %v714 = vrot.slane %v707, 4
    %715 = vrot.lane.b32.xlu0 %v714, 96
    %v716 = vpop.permute.xlu0 %715
    %v718 = vsel %vm712, %v716, %v592
    %v719 = vrot.slane %v665, 6
    %v721 = vadd.f32 %v670, %v719
    %v722 = vxor.u32 %v721, 2147483648
    %v723 = vmul.f32 %v722, 1.442695
    %v724 = vpow.pop %v723
    %v725 = vadd.f32 %v724, 1.0
    %v726 = vrcp.pop %v725
    %v727 = vmul.f32 1.0, %v726
    %v729 = vrot.slane %v667, 6
    %v731 = vadd.f32 %v671, %v729
    %v732 = vxor.u32 %v731, 2147483648
    %v733 = vmul.f32 %v732, 1.442695
    %v734 = vpow.pop %v733
    %v735 = vadd.f32 %v734, 1.0
    %v736 = vrcp.pop %v735
    %v737 = vmul.f32 1.0, %v736
    %v738 = vadd.f32 %v667, %v227
    %v740 = vrot.slane %v738, 6
    %741 = vrot.lane.b32.xlu0 %v740, 64
    %v742 = vpop.permute.xlu0 %741
    %v744 = vmul.f32 %v727, %v742
    %746 = vrot.lane.b32.xlu0 %v744, 64
    %v747 = vpop.permute.xlu0 %746
    %v749 = vadd.f32 %v671, %v747
    %v750 = vtanh.pop %v749
    %vm751 = vcmp.gt.s32.totalorder %v94, 5
    %v752 = vsub.f32 1.0, %v737
    %754 = vrot.lane.b32.xlu0 %v750, 96
    %v755 = vpop.permute.xlu0 %754
    %v757 = vmul.f32 %v752, %v755
    %v758 = vrot.slane %v592, 6
    %759 = vrot.lane.b32.xlu0 %v758, 96
    %v760 = vpop.permute.xlu0 %759
    %v762 = vmul.f32 %v737, %v760
    %v763 = vadd.f32 %v757, %v762
    %v764 = vsel %vm751, 1, 0
    %765 = vset.pattern.permute.xlu0 0
    %766 = vperm.xlu0 %765, %v764
    %v767 = vpop.permute.xlu0 %766
    %vm768 = vcmp.eq.s32.totalorder %v767, 1
    %v770 = vrot.slane %v763, 2
    %772 = vrot.lane.b32.xlu0 %v592, 96
    %v773 = vpop.permute.xlu0 %772
    %v775 = vsel %vm768, %v770, %v773
    %777 = vrot.lane.b32.xlu0 %v775, 32
    %v778 = vpop.permute.xlu0 %777
    %v780 = vsel %vm117, %v718, %v778
    %781 = vst.msk [vmem:[#allocation3 + $0x4] sm:$0x3] %vm403, %v718
    %782 = vst.msk [vmem:[#allocation3 + $0xa] sm:$0x3] %vm405, %v778
    %v784 = vsel %vm202, %v780, 0
    %786 = vmatprep.subr.mxu0 %v207
    %787 = vmatpush1.msra.mxu0 %v206
    %788 = vmatprep.subr.mxu0 %v209
    %789 = vmatpush1.msra.mxu0 %v208
    %790 = vmatprep.subr.mxu0 %v211
    %791 = vmatpush1.msra.mxu0 %v210
    %792 = vmatprep.subr.mxu0 %v213
    %793 = vmatpush1.msra.mxu0 %v212
    %794 = vmatprep.subr.mxu0 %v215
    %795 = vmatpush1.msra.mxu0 %v214
    %796 = vmatprep.subr.mxu0 %v217
    %797 = vmatpush1.msra.mxu0 %v216
    %798 = vmatprep.subr.mxu0 %v219
    %799 = vmatpush1.msra.mxu0 %v218
    %800 = vmatprep.subr.mxu0 %v221
    %801 = vmatpush1.msra.mxu0 %v220
    %802 = vmatprep.subr.mxu0 0.0
    %803 = vmatpush1.msra.mxu0 0.0
    %804 = vmatprep.subr.mxu0 0.0
    %805 = vmatpush1.msra.mxu0 0.0
    %806 = vmatprep.subr.mxu0 0.0
    %807 = vmatpush1.msra.mxu0 0.0
    %808 = vmatprep.subr.mxu0 0.0
    %809 = vmatpush1.msra.mxu0 0.0
    %810 = vmatprep.subr.mxu0 0.0
    %811 = vmatpush1.msra.mxu0 0.0
    %812 = vmatprep.subr.mxu0 0.0
    %813 = vmatpush1.msra.mxu0 0.0
    %814 = vmatprep.subr.mxu0 0.0
    %815 = vmatpush1.msra.mxu0 0.0
    %816 = vmatprep.subr.mxu0 0.0
    %817 = vmatpush1.msra.mxu0 0.0
    %818 = vmatprep.subr.mxu0 0.0
    %819 = vmatpush1.msra.mxu0 0.0
    %820 = vmatprep.subr.mxu0 0.0
    %821 = vmatpush1.msra.mxu0 0.0
    %822 = vmatprep.subr.mxu0 0.0
    %823 = vmatpush1.msra.mxu0 0.0
    %824 = vmatprep.subr.mxu0 0.0
    %825 = vmatpush1.msra.mxu0 0.0
    %826 = vmatprep.subr.mxu0 0.0
    %827 = vmatpush1.msra.mxu0 0.0
    %828 = vmatprep.subr.mxu0 0.0
    %829 = vmatpush1.msra.mxu0 0.0
    %830 = vmatprep.subr.mxu0 0.0
    %831 = vmatpush1.msra.mxu0 0.0
    %832 = vmatprep.subr.mxu0 0.0
    %833 = vmatpush1.msra.mxu0 0.0
    %834 = vmatprep.subr.mxu0 0.0
    %835 = vmatpush1.msra.mxu0 0.0
    %836 = vmatprep.subr.mxu0 0.0
    %837 = vmatpush1.msra.mxu0 0.0
    %838 = vmatprep.subr.mxu0 0.0
    %839 = vmatpush1.msra.mxu0 0.0
    %840 = vmatprep.subr.mxu0 0.0
    %841 = vmatpush1.msra.mxu0 0.0
    %842 = vmatprep.subr.mxu0 0.0
    %843 = vmatpush1.msra.mxu0 0.0
    %844 = vmatprep.subr.mxu0 0.0
    %845 = vmatpush1.msra.mxu0 0.0
    %846 = vmatprep.subr.mxu0 0.0
    %847 = vmatpush1.msra.mxu0 0.0
    %848 = vmatprep.subr.mxu0 0.0
    %849 = vmatpush1.msra.mxu0 0.0
    %850 = vmatprep.mubr.f32.mxu0 0.0
    %851 = vmatmul.mubr.f32.gmra.mrb[0].mxu0 %v784
    %v852 = vpop.f32.mrb[0].mxu0
    %v853 = vadd.f32 0.0, %v852
    %v854 = vpop.f32.mrb[0].mxu0
    %v855 = vadd.f32 0.0, %v854
    %856 = vdwg.mxu0
    %v857 = vld [vmem:[#allocation2] sm:$0xc0]
    %v858 = vld [vmem:[#allocation2 + $0x10] sm:$0x3]
    %v859 = vld [vmem:[#allocation2 + $0x18] sm:$0x3]
    %v861 = vrot.slane %v853, 2
    %v863 = vadd.f32 %v857, %v861
    %v864 = vxor.u32 %v863, 2147483648
    %v865 = vmul.f32 %v864, 1.442695
    %v866 = vpow.pop %v865
    %v867 = vadd.f32 %v866, 1.0
    %v868 = vrcp.pop %v867
    %v869 = vmul.f32 1.0, %v868
    %v870 = vadd.f32 %v853, %v314
    %v872 = vrot.slane %v870, 2
    %873 = vrot.lane.b32.xlu0 %v872, 64
    %v874 = vpop.permute.xlu0 %873
    %v876 = vmul.f32 %v869, %v874
    %878 = vrot.lane.b32.xlu0 %v876, 64
    %v879 = vpop.permute.xlu0 %878
    %v881 = vadd.f32 %v857, %v879
    %v882 = vtanh.pop %v881
    %vm883 = vcmp.gt.s32.totalorder %v94, 3
    %v884 = vsub.f32 1.0, %v869
    %886 = vrot.lane.b32.xlu0 %v882, 96
    %v887 = vpop.permute.xlu0 %886
    %v889 = vmul.f32 %v884, %v887
    %v890 = vrot.slane %v780, 2
    %891 = vrot.lane.b32.xlu0 %v890, 32
    %v892 = vpop.permute.xlu0 %891
    %v894 = vmul.f32 %v869, %v892
    %v895 = vadd.f32 %v889, %v894
    %v896 = vsel %vm883, 1, 0
    %897 = vset.pattern.permute.xlu0 0
    %898 = vperm.xlu0 %897, %v896
    %v899 = vpop.permute.xlu0 %898
    %vm900 = vcmp.eq.s32.totalorder %v899, 1
    %v902 = vrot.slane %v895, 6
    %903 = vrot.lane.b32.xlu0 %v902, 96
    %v904 = vpop.permute.xlu0 %903
    %v906 = vsel %vm900, %v904, %v780
    %v907 = vadd.f32 %v858, %v853
    %v908 = vxor.u32 %v907, 2147483648
    %v909 = vmul.f32 %v908, 1.442695
    %v910 = vpow.pop %v909
    %v911 = vadd.f32 %v910, 1.0
    %v912 = vrcp.pop %v911
    %v913 = vmul.f32 1.0, %v912
    %v914 = vadd.f32 %v859, %v855
    %v915 = vxor.u32 %v914, 2147483648
    %v916 = vmul.f32 %v915, 1.442695
    %v917 = vpow.pop %v916
    %v918 = vadd.f32 %v917, 1.0
    %v919 = vrcp.pop %v918
    %v920 = vmul.f32 1.0, %v919
    %v921 = vadd.f32 %v855, %v227
    %923 = vrot.lane.b32.xlu0 %v921, 64
    %v924 = vpop.permute.xlu0 %923
    %v926 = vmul.f32 %v913, %v924
    %928 = vrot.lane.b32.xlu0 %v926, 64
    %v929 = vpop.permute.xlu0 %928
    %v931 = vadd.f32 %v859, %v929
    %v932 = vtanh.pop %v931
    %vm933 = vcmp.gt.s32.totalorder %v94, 4
    %v934 = vsub.f32 1.0, %v920
    %936 = vrot.lane.b32.xlu0 %v932, 96
    %v937 = vpop.permute.xlu0 %936
    %v939 = vmul.f32 %v934, %v937
    %940 = vrot.lane.b32.xlu0 %v780, 96
    %v941 = vpop.permute.xlu0 %940
    %v943 = vmul.f32 %v920, %v941
    %v944 = vadd.f32 %v939, %v943
    %v945 = vsel %vm933, 1, 0
    %946 = vset.pattern.permute.xlu0 0
    %947 = vperm.xlu0 %946, %v945
    %v948 = vpop.permute.xlu0 %947
    %vm949 = vcmp.eq.s32.totalorder %v948, 1
    %v950 = vsel %vm949, %v944, %v941
    %952 = vrot.lane.b32.xlu0 %v950, 32
    %v953 = vpop.permute.xlu0 %952
    %v955 = vsel %vm117, %v906, %v953
    %956 = vst.msk [vmem:[#allocation3 + $0x6] sm:$0x3] %vm403, %v906
    %957 = vst.msk [vmem:[#allocation3 + $0x8] sm:$0x3] %vm405, %v953
    %v959 = vsel %vm202, %v955, 0
    %961 = vmatprep.subr.mxu0 %v207
    %962 = vmatpush1.msra.mxu0 %v206
    %963 = vmatprep.subr.mxu0 %v209
    %964 = vmatpush1.msra.mxu0 %v208
    %965 = vmatprep.subr.mxu0 %v211
    %966 = vmatpush1.msra.mxu0 %v210
    %967 = vmatprep.subr.mxu0 %v213
    %968 = vmatpush1.msra.mxu0 %v212
    %969 = vmatprep.subr.mxu0 %v215
    %970 = vmatpush1.msra.mxu0 %v214
    %971 = vmatprep.subr.mxu0 %v217
    %972 = vmatpush1.msra.mxu0 %v216
    %973 = vmatprep.subr.mxu0 %v219
    %974 = vmatpush1.msra.mxu0 %v218
    %975 = vmatprep.subr.mxu0 %v221
    %976 = vmatpush1.msra.mxu0 %v220
    %977 = vmatprep.subr.mxu0 0.0
    %978 = vmatpush1.msra.mxu0 0.0
    %979 = vmatprep.subr.mxu0 0.0
    %980 = vmatpush1.msra.mxu0 0.0
    %981 = vmatprep.subr.mxu0 0.0
    %982 = vmatpush1.msra.mxu0 0.0
    %983 = vmatprep.subr.mxu0 0.0
    %984 = vmatpush1.msra.mxu0 0.0
    %985 = vmatprep.subr.mxu0 0.0
    %986 = vmatpush1.msra.mxu0 0.0
    %987 = vmatprep.subr.mxu0 0.0
    %988 = vmatpush1.msra.mxu0 0.0
    %989 = vmatprep.subr.mxu0 0.0
    %990 = vmatpush1.msra.mxu0 0.0
    %991 = vmatprep.subr.mxu0 0.0
    %992 = vmatpush1.msra.mxu0 0.0
    %993 = vmatprep.subr.mxu0 0.0
    %994 = vmatpush1.msra.mxu0 0.0
    %995 = vmatprep.subr.mxu0 0.0
    %996 = vmatpush1.msra.mxu0 0.0
    %997 = vmatprep.subr.mxu0 0.0
    %998 = vmatpush1.msra.mxu0 0.0
    %999 = vmatprep.subr.mxu0 0.0
    %1000 = vmatpush1.msra.mxu0 0.0
    %1001 = vmatprep.subr.mxu0 0.0
    %1002 = vmatpush1.msra.mxu0 0.0
    %1003 = vmatprep.subr.mxu0 0.0
    %1004 = vmatpush1.msra.mxu0 0.0
    %1005 = vmatprep.subr.mxu0 0.0
    %1006 = vmatpush1.msra.mxu0 0.0
    %1007 = vmatprep.subr.mxu0 0.0
    %1008 = vmatpush1.msra.mxu0 0.0
    %1009 = vmatprep.subr.mxu0 0.0
    %1010 = vmatpush1.msra.mxu0 0.0
    %1011 = vmatprep.subr.mxu0 0.0
    %1012 = vmatpush1.msra.mxu0 0.0
    %1013 = vmatprep.subr.mxu0 0.0
    %1014 = vmatpush1.msra.mxu0 0.0
    %1015 = vmatprep.subr.mxu0 0.0
    %1016 = vmatpush1.msra.mxu0 0.0
    %1017 = vmatprep.subr.mxu0 0.0
    %1018 = vmatpush1.msra.mxu0 0.0
    %1019 = vmatprep.subr.mxu0 0.0
    %1020 = vmatpush1.msra.mxu0 0.0
    %1021 = vmatprep.subr.mxu0 0.0
    %1022 = vmatpush1.msra.mxu0 0.0
    %1023 = vmatprep.subr.mxu0 0.0
    %1024 = vmatpush1.msra.mxu0 0.0
    %1025 = vmatprep.mubr.f32.mxu0 0.0
    %1026 = vmatmul.mubr.f32.gmra.mrb[0].mxu0 %v959
    %v1027 = vpop.f32.mrb[0].mxu0
    %v1028 = vadd.f32 0.0, %v1027
    %v1029 = vpop.f32.mrb[0].mxu0
    %v1030 = vadd.f32 0.0, %v1029
    %1031 = vdwg.mxu0
    %v1032 = vld [vmem:[#allocation2 + $0x10] sm:$0x3]
    %v1033 = vld [vmem:[#allocation2] sm:$0xc0]
    %v1034 = vld [vmem:[#allocation2 + $0x8] sm:$0xc0]
    %v1035 = vadd.f32 %v1032, %v1028
    %v1036 = vxor.u32 %v1035, 2147483648
    %v1037 = vmul.f32 %v1036, 1.442695
    %v1038 = vpow.pop %v1037
    %v1039 = vadd.f32 %v1038, 1.0
    %v1040 = vrcp.pop %v1039
    %v1041 = vmul.f32 1.0, %v1040
    %v1042 = vadd.f32 %v1028, %v314
    %1044 = vrot.lane.b32.xlu0 %v1042, 64
    %v1045 = vpop.permute.xlu0 %1044
    %v1047 = vmul.f32 %v1041, %v1045
    %1049 = vrot.lane.b32.xlu0 %v1047, 64
    %v1050 = vpop.permute.xlu0 %1049
    %v1052 = vadd.f32 %v1032, %v1050
    %v1053 = vtanh.pop %v1052
    %v1054 = vsub.f32 1.0, %v1041
    %1056 = vrot.lane.b32.xlu0 %v1053, 96
    %v1057 = vpop.permute.xlu0 %1056
    %v1059 = vmul.f32 %v1054, %v1057
    %1060 = vrot.lane.b32.xlu0 %v955, 32
    %v1061 = vpop.permute.xlu0 %1060
    %v1063 = vmul.f32 %v1041, %v1061
    %v1064 = vadd.f32 %v1059, %v1063
    %v1065 = vsel %vm949, %v1064, %v1061
    %v1067 = vrot.slane %v1028, 2
    %v1069 = vadd.f32 %v1033, %v1067
    %v1070 = vxor.u32 %v1069, 2147483648
    %v1071 = vmul.f32 %v1070, 1.442695
    %v1072 = vpow.pop %v1071
    %v1073 = vadd.f32 %v1072, 1.0
    %v1074 = vrcp.pop %v1073
    %v1075 = vmul.f32 1.0, %v1074
    %v1077 = vrot.slane %v1030, 2
    %v1079 = vadd.f32 %v1034, %v1077
    %v1080 = vxor.u32 %v1079, 2147483648
    %v1081 = vmul.f32 %v1080, 1.442695
    %v1082 = vpow.pop %v1081
    %v1083 = vadd.f32 %v1082, 1.0
    %v1084 = vrcp.pop %v1083
    %v1085 = vmul.f32 1.0, %v1084
    %v1086 = vadd.f32 %v1030, %v227
    %v1088 = vrot.slane %v1086, 2
    %1089 = vrot.lane.b32.xlu0 %v1088, 64
    %v1090 = vpop.permute.xlu0 %1089
    %v1092 = vmul.f32 %v1075, %v1090
    %1094 = vrot.lane.b32.xlu0 %v1092, 64
    %v1095 = vpop.permute.xlu0 %1094
    %v1097 = vadd.f32 %v1034, %v1095
    %v1098 = vtanh.pop %v1097
    %v1099 = vsub.f32 1.0, %v1085
    %1101 = vrot.lane.b32.xlu0 %v1098, 96
    %v1102 = vpop.permute.xlu0 %1101
    %v1104 = vmul.f32 %v1099, %v1102
    %v1105 = vrot.slane %v955, 2
    %1106 = vrot.lane.b32.xlu0 %v1105, 96
    %v1107 = vpop.permute.xlu0 %1106
    %v1109 = vmul.f32 %v1085, %v1107
    %v1110 = vadd.f32 %v1104, %v1109
    %v1112 = vrot.slane %v1110, 6
    %1114 = vrot.lane.b32.xlu0 %v955, 96
    %v1115 = vpop.permute.xlu0 %1114
    %v1117 = vsel %vm900, %v1112, %v1115
    %1119 = vrot.lane.b32.xlu0 %v1065, 96
    %v1120 = vpop.permute.xlu0 %1119
    %1123 = vrot.lane.b32.xlu0 %v1117, 32
    %v1124 = vpop.permute.xlu0 %1123
    %v1126 = vsel %vm117, %v1120, %v1124
    %1127 = vst.msk [vmem:[#allocation3 + $0x8] sm:$0x3] %vm403, %v1120
    %1128 = vst.msk [vmem:[#allocation3 + $0x6] sm:$0x3] %vm405, %v1124
    %v1130 = vsel %vm202, %v1126, 0
    %1132 = vmatprep.subr.mxu0 %v207
    %1133 = vmatpush1.msra.mxu0 %v206
    %1134 = vmatprep.subr.mxu0 %v209
    %1135 = vmatpush1.msra.mxu0 %v208
    %1136 = vmatprep.subr.mxu0 %v211
    %1137 = vmatpush1.msra.mxu0 %v210
    %1138 = vmatprep.subr.mxu0 %v213
    %1139 = vmatpush1.msra.mxu0 %v212
    %1140 = vmatprep.subr.mxu0 %v215
    %1141 = vmatpush1.msra.mxu0 %v214
    %1142 = vmatprep.subr.mxu0 %v217
    %1143 = vmatpush1.msra.mxu0 %v216
    %1144 = vmatprep.subr.mxu0 %v219
    %1145 = vmatpush1.msra.mxu0 %v218
    %1146 = vmatprep.subr.mxu0 %v221
    %1147 = vmatpush1.msra.mxu0 %v220
    %1148 = vmatprep.subr.mxu0 0.0
    %1149 = vmatpush1.msra.mxu0 0.0
    %1150 = vmatprep.subr.mxu0 0.0
    %1151 = vmatpush1.msra.mxu0 0.0
    %1152 = vmatprep.subr.mxu0 0.0
    %1153 = vmatpush1.msra.mxu0 0.0
    %1154 = vmatprep.subr.mxu0 0.0
    %1155 = vmatpush1.msra.mxu0 0.0
    %1156 = vmatprep.subr.mxu0 0.0
    %1157 = vmatpush1.msra.mxu0 0.0
    %1158 = vmatprep.subr.mxu0 0.0
    %1159 = vmatpush1.msra.mxu0 0.0
    %1160 = vmatprep.subr.mxu0 0.0
    %1161 = vmatpush1.msra.mxu0 0.0
    %1162 = vmatprep.subr.mxu0 0.0
    %1163 = vmatpush1.msra.mxu0 0.0
    %1164 = vmatprep.subr.mxu0 0.0
    %1165 = vmatpush1.msra.mxu0 0.0
    %1166 = vmatprep.subr.mxu0 0.0
    %1167 = vmatpush1.msra.mxu0 0.0
    %1168 = vmatprep.subr.mxu0 0.0
    %1169 = vmatpush1.msra.mxu0 0.0
    %1170 = vmatprep.subr.mxu0 0.0
    %1171 = vmatpush1.msra.mxu0 0.0
    %1172 = vmatprep.subr.mxu0 0.0
    %1173 = vmatpush1.msra.mxu0 0.0
    %1174 = vmatprep.subr.mxu0 0.0
    %1175 = vmatpush1.msra.mxu0 0.0
    %1176 = vmatprep.subr.mxu0 0.0
    %1177 = vmatpush1.msra.mxu0 0.0
    %1178 = vmatprep.subr.mxu0 0.0
    %1179 = vmatpush1.msra.mxu0 0.0
    %1180 = vmatprep.subr.mxu0 0.0
    %1181 = vmatpush1.msra.mxu0 0.0
    %1182 = vmatprep.subr.mxu0 0.0
    %1183 = vmatpush1.msra.mxu0 0.0
    %1184 = vmatprep.subr.mxu0 0.0
    %1185 = vmatpush1.msra.mxu0 0.0
    %1186 = vmatprep.subr.mxu0 0.0
    %1187 = vmatpush1.msra.mxu0 0.0
    %1188 = vmatprep.subr.mxu0 0.0
    %1189 = vmatpush1.msra.mxu0 0.0
    %1190 = vmatprep.subr.mxu0 0.0
    %1191 = vmatpush1.msra.mxu0 0.0
    %1192 = vmatprep.subr.mxu0 0.0
    %1193 = vmatpush1.msra.mxu0 0.0
    %1194 = vmatprep.subr.mxu0 0.0
    %1195 = vmatpush1.msra.mxu0 0.0
    %1196 = vmatprep.mubr.f32.mxu0 0.0
    %1197 = vmatmul.mubr.f32.gmra.mrb[0].mxu0 %v1130
    %v1198 = vpop.f32.mrb[0].mxu0
    %v1199 = vadd.f32 0.0, %v1198
    %v1200 = vpop.f32.mrb[0].mxu0
    %v1201 = vadd.f32 0.0, %v1200
    %1202 = vdwg.mxu0
    %v1203 = vld [vmem:[#allocation2 + $0x10] sm:$0xc]
    %v1204 = vld [vmem:[#allocation2] sm:$0x30]
    %v1205 = vld [vmem:[#allocation2 + $0x8] sm:$0x30]
    %v1207 = vrot.slane %v1199, 6
    %v1209 = vadd.f32 %v1203, %v1207
    %v1210 = vxor.u32 %v1209, 2147483648
    %v1211 = vmul.f32 %v1210, 1.442695
    %v1212 = vpow.pop %v1211
    %v1213 = vadd.f32 %v1212, 1.0
    %v1214 = vrcp.pop %v1213
    %v1215 = vmul.f32 1.0, %v1214
    %v1216 = vadd.f32 %v1199, %v314
    %v1218 = vrot.slane %v1216, 6
    %1219 = vrot.lane.b32.xlu0 %v1218, 64
    %v1220 = vpop.permute.xlu0 %1219
    %v1222 = vmul.f32 %v1215, %v1220
    %1224 = vrot.lane.b32.xlu0 %v1222, 64
    %v1225 = vpop.permute.xlu0 %1224
    %v1227 = vadd.f32 %v1203, %v1225
    %v1228 = vtanh.pop %v1227
    %v1229 = vsub.f32 1.0, %v1215
    %1231 = vrot.lane.b32.xlu0 %v1228, 96
    %v1232 = vpop.permute.xlu0 %1231
    %v1234 = vmul.f32 %v1229, %v1232
    %v1235 = vrot.slane %v1126, 6
    %1236 = vrot.lane.b32.xlu0 %v1235, 32
    %v1237 = vpop.permute.xlu0 %1236
    %v1239 = vmul.f32 %v1215, %v1237
    %v1240 = vadd.f32 %v1234, %v1239
    %v1242 = vrot.slane %v1240, 2
    %1243 = vrot.lane.b32.xlu0 %v1242, 96
    %v1244 = vpop.permute.xlu0 %1243
    %v1246 = vsel %vm768, %v1244, %v1126
    %v1247 = vrot.slane %v1199, 4
    %v1249 = vadd.f32 %v1204, %v1247
    %v1250 = vxor.u32 %v1249, 2147483648
    %v1251 = vmul.f32 %v1250, 1.442695
    %v1252 = vpow.pop %v1251
    %v1253 = vadd.f32 %v1252, 1.0
    %v1254 = vrcp.pop %v1253
    %v1255 = vmul.f32 1.0, %v1254
    %v1257 = vrot.slane %v1201, 4
    %v1259 = vadd.f32 %v1205, %v1257
    %v1260 = vxor.u32 %v1259, 2147483648
    %v1261 = vmul.f32 %v1260, 1.442695
    %v1262 = vpow.pop %v1261
    %v1263 = vadd.f32 %v1262, 1.0
    %v1264 = vrcp.pop %v1263
    %v1265 = vmul.f32 1.0, %v1264
    %v1266 = vadd.f32 %v1201, %v227
    %v1268 = vrot.slane %v1266, 4
    %1269 = vrot.lane.b32.xlu0 %v1268, 64
    %v1270 = vpop.permute.xlu0 %1269
    %v1272 = vmul.f32 %v1255, %v1270
    %1274 = vrot.lane.b32.xlu0 %v1272, 64
    %v1275 = vpop.permute.xlu0 %1274
    %v1277 = vadd.f32 %v1205, %v1275
    %v1278 = vtanh.pop %v1277
    %v1279 = vsub.f32 1.0, %v1265
    %1281 = vrot.lane.b32.xlu0 %v1278, 96
    %v1282 = vpop.permute.xlu0 %1281
    %v1284 = vmul.f32 %v1279, %v1282
    %v1285 = vrot.slane %v1126, 4
    %1286 = vrot.lane.b32.xlu0 %v1285, 96
    %v1287 = vpop.permute.xlu0 %1286
    %v1289 = vmul.f32 %v1265, %v1287
    %v1290 = vadd.f32 %v1284, %v1289
    %v1292 = vrot.slane %v1290, 4
    %1294 = vrot.lane.b32.xlu0 %v1126, 96
    %v1295 = vpop.permute.xlu0 %1294
    %v1297 = vsel %vm712, %v1292, %v1295
    %1299 = vrot.lane.b32.xlu0 %v1297, 32
    %v1300 = vpop.permute.xlu0 %1299
    %v1302 = vsel %vm117, %v1246, %v1300
    %1303 = vst.msk [vmem:[#allocation3 + $0xa] sm:$0x3] %vm403, %v1246
    %1304 = vst.msk [vmem:[#allocation3 + $0x4] sm:$0x3] %vm405, %v1300
    %v1306 = vsel %vm202, %v1302, 0
    %1308 = vmatprep.subr.mxu0 %v207
    %1309 = vmatpush1.msra.mxu0 %v206
    %1310 = vmatprep.subr.mxu0 %v209
    %1311 = vmatpush1.msra.mxu0 %v208
    %1312 = vmatprep.subr.mxu0 %v211
    %1313 = vmatpush1.msra.mxu0 %v210
    %1314 = vmatprep.subr.mxu0 %v213
    %1315 = vmatpush1.msra.mxu0 %v212
    %1316 = vmatprep.subr.mxu0 %v215
    %1317 = vmatpush1.msra.mxu0 %v214
    %1318 = vmatprep.subr.mxu0 %v217
    %1319 = vmatpush1.msra.mxu0 %v216
    %1320 = vmatprep.subr.mxu0 %v219
    %1321 = vmatpush1.msra.mxu0 %v218
    %1322 = vmatprep.subr.mxu0 %v221
    %1323 = vmatpush1.msra.mxu0 %v220
    %1324 = vmatprep.subr.mxu0 0.0
    %1325 = vmatpush1.msra.mxu0 0.0
    %1326 = vmatprep.subr.mxu0 0.0
    %1327 = vmatpush1.msra.mxu0 0.0
    %1328 = vmatprep.subr.mxu0 0.0
    %1329 = vmatpush1.msra.mxu0 0.0
    %1330 = vmatprep.subr.mxu0 0.0
    %1331 = vmatpush1.msra.mxu0 0.0
    %1332 = vmatprep.subr.mxu0 0.0
    %1333 = vmatpush1.msra.mxu0 0.0
    %1334 = vmatprep.subr.mxu0 0.0
    %1335 = vmatpush1.msra.mxu0 0.0
    %1336 = vmatprep.subr.mxu0 0.0
    %1337 = vmatpush1.msra.mxu0 0.0
    %1338 = vmatprep.subr.mxu0 0.0
    %1339 = vmatpush1.msra.mxu0 0.0
    %1340 = vmatprep.subr.mxu0 0.0
    %1341 = vmatpush1.msra.mxu0 0.0
    %1342 = vmatprep.subr.mxu0 0.0
    %1343 = vmatpush1.msra.mxu0 0.0
    %1344 = vmatprep.subr.mxu0 0.0
    %1345 = vmatpush1.msra.mxu0 0.0
    %1346 = vmatprep.subr.mxu0 0.0
    %1347 = vmatpush1.msra.mxu0 0.0
    %1348 = vmatprep.subr.mxu0 0.0
    %1349 = vmatpush1.msra.mxu0 0.0
    %1350 = vmatprep.subr.mxu0 0.0
    %1351 = vmatpush1.msra.mxu0 0.0
    %1352 = vmatprep.subr.mxu0 0.0
    %1353 = vmatpush1.msra.mxu0 0.0
    %1354 = vmatprep.subr.mxu0 0.0
    %1355 = vmatpush1.msra.mxu0 0.0
    %1356 = vmatprep.subr.mxu0 0.0
    %1357 = vmatpush1.msra.mxu0 0.0
    %1358 = vmatprep.subr.mxu0 0.0
    %1359 = vmatpush1.msra.mxu0 0.0
    %1360 = vmatprep.subr.mxu0 0.0
    %1361 = vmatpush1.msra.mxu0 0.0
    %1362 = vmatprep.subr.mxu0 0.0
    %1363 = vmatpush1.msra.mxu0 0.0
    %1364 = vmatprep.subr.mxu0 0.0
    %1365 = vmatpush1.msra.mxu0 0.0
    %1366 = vmatprep.subr.mxu0 0.0
    %1367 = vmatpush1.msra.mxu0 0.0
    %1368 = vmatprep.subr.mxu0 0.0
    %1369 = vmatpush1.msra.mxu0 0.0
    %1370 = vmatprep.subr.mxu0 0.0
    %1371 = vmatpush1.msra.mxu0 0.0
    %1372 = vmatprep.mubr.f32.mxu0 0.0
    %1373 = vmatmul.mubr.f32.gmra.mrb[0].mxu0 %v1306
    %v1374 = vpop.f32.mrb[0].mxu0
    %v1375 = vadd.f32 0.0, %v1374
    %v1376 = vpop.f32.mrb[0].mxu0
    %v1377 = vadd.f32 0.0, %v1376
    %1378 = vdwg.mxu0
    %v1379 = vld [vmem:[#allocation2 + $0x10] sm:$0x30]
    %v1380 = vld [vmem:[#allocation2] sm:$0xc]
    %v1381 = vld [vmem:[#allocation2 + $0x8] sm:$0xc]
    %v1383 = vrot.slane %v1375, 4
    %v1385 = vadd.f32 %v1379, %v1383
    %v1386 = vxor.u32 %v1385, 2147483648
    %v1387 = vmul.f32 %v1386, 1.442695
    %v1388 = vpow.pop %v1387
    %v1389 = vadd.f32 %v1388, 1.0
    %v1390 = vrcp.pop %v1389
    %v1391 = vmul.f32 1.0, %v1390
    %v1392 = vadd.f32 %v1375, %v314
    %v1394 = vrot.slane %v1392, 4
    %1395 = vrot.lane.b32.xlu0 %v1394, 64
    %v1396 = vpop.permute.xlu0 %1395
    %v1398 = vmul.f32 %v1391, %v1396
    %1400 = vrot.lane.b32.xlu0 %v1398, 64
    %v1401 = vpop.permute.xlu0 %1400
    %v1403 = vadd.f32 %v1379, %v1401
    %v1404 = vtanh.pop %v1403
    %v1405 = vsub.f32 1.0, %v1391
    %1407 = vrot.lane.b32.xlu0 %v1404, 96
    %v1408 = vpop.permute.xlu0 %1407
    %v1410 = vmul.f32 %v1405, %v1408
    %v1411 = vrot.slane %v1302, 4
    %1412 = vrot.lane.b32.xlu0 %v1411, 32
    %v1413 = vpop.permute.xlu0 %1412
    %v1415 = vmul.f32 %v1391, %v1413
    %v1416 = vadd.f32 %v1410, %v1415
    %v1418 = vrot.slane %v1416, 4
    %1419 = vrot.lane.b32.xlu0 %v1418, 96
    %v1420 = vpop.permute.xlu0 %1419
    %v1422 = vsel %vm580, %v1420, %v1302
    %v1423 = vrot.slane %v1375, 6
    %v1425 = vadd.f32 %v1380, %v1423
    %v1426 = vxor.u32 %v1425, 2147483648
    %v1427 = vmul.f32 %v1426, 1.442695
    %v1428 = vpow.pop %v1427
    %v1429 = vadd.f32 %v1428, 1.0
    %v1430 = vrcp.pop %v1429
    %v1431 = vmul.f32 1.0, %v1430
    %v1433 = vrot.slane %v1377, 6
    %v1435 = vadd.f32 %v1381, %v1433
    %v1436 = vxor.u32 %v1435, 2147483648
    %v1437 = vmul.f32 %v1436, 1.442695
    %v1438 = vpow.pop %v1437
    %v1439 = vadd.f32 %v1438, 1.0
    %v1440 = vrcp.pop %v1439
    %v1441 = vmul.f32 1.0, %v1440
    %v1442 = vadd.f32 %v1377, %v227
    %v1444 = vrot.slane %v1442, 6
    %1445 = vrot.lane.b32.xlu0 %v1444, 64
    %v1446 = vpop.permute.xlu0 %1445
    %v1448 = vmul.f32 %v1431, %v1446
    %1450 = vrot.lane.b32.xlu0 %v1448, 64
    %v1451 = vpop.permute.xlu0 %1450
    %v1453 = vadd.f32 %v1381, %v1451
    %v1454 = vtanh.pop %v1453
    %v1455 = vsub.f32 1.0, %v1441
    %1457 = vrot.lane.b32.xlu0 %v1454, 96
    %v1458 = vpop.permute.xlu0 %1457
    %v1460 = vmul.f32 %v1455, %v1458
    %v1461 = vrot.slane %v1302, 6
    %1462 = vrot.lane.b32.xlu0 %v1461, 96
    %v1463 = vpop.permute.xlu0 %1462
    %v1465 = vmul.f32 %v1441, %v1463
    %v1466 = vadd.f32 %v1460, %v1465
    %v1468 = vrot.slane %v1466, 2
    %1470 = vrot.lane.b32.xlu0 %v1302, 96
    %v1471 = vpop.permute.xlu0 %1470
    %v1473 = vsel %vm524, %v1468, %v1471
    %1475 = vrot.lane.b32.xlu0 %v1473, 32
    %v1476 = vpop.permute.xlu0 %1475
    %v1478 = vsel %vm117, %v1422, %v1476
    %1479 = vst.msk [vmem:[#allocation3 + $0xc] sm:$0x3] %vm403, %v1422
    %1480 = vst.msk [vmem:[#allocation3 + $0x2] sm:$0x3] %vm405, %v1476
    %v1482 = vsel %vm202, %v1478, 0
    %1484 = vmatprep.subr.mxu0 %v207
    %1485 = vmatpush1.msra.mxu0 %v206
    %1486 = vmatprep.subr.mxu0 %v209
    %1487 = vmatpush1.msra.mxu0 %v208
    %1488 = vmatprep.subr.mxu0 %v211
    %1489 = vmatpush1.msra.mxu0 %v210
    %1490 = vmatprep.subr.mxu0 %v213
    %1491 = vmatpush1.msra.mxu0 %v212
    %1492 = vmatprep.subr.mxu0 %v215
    %1493 = vmatpush1.msra.mxu0 %v214
    %1494 = vmatprep.subr.mxu0 %v217
    %1495 = vmatpush1.msra.mxu0 %v216
    %1496 = vmatprep.subr.mxu0 %v219
    %1497 = vmatpush1.msra.mxu0 %v218
    %1498 = vmatprep.subr.mxu0 %v221
    %1499 = vmatpush1.msra.mxu0 %v220
    %1500 = vmatprep.subr.mxu0 0.0
    %1501 = vmatpush1.msra.mxu0 0.0
    %1502 = vmatprep.subr.mxu0 0.0
    %1503 = vmatpush1.msra.mxu0 0.0
    %1504 = vmatprep.subr.mxu0 0.0
    %1505 = vmatpush1.msra.mxu0 0.0
    %1506 = vmatprep.subr.mxu0 0.0
    %1507 = vmatpush1.msra.mxu0 0.0
    %1508 = vmatprep.subr.mxu0 0.0
    %1509 = vmatpush1.msra.mxu0 0.0
    %1510 = vmatprep.subr.mxu0 0.0
    %1511 = vmatpush1.msra.mxu0 0.0
    %1512 = vmatprep.subr.mxu0 0.0
    %1513 = vmatpush1.msra.mxu0 0.0
    %1514 = vmatprep.subr.mxu0 0.0
    %1515 = vmatpush1.msra.mxu0 0.0
    %1516 = vmatprep.subr.mxu0 0.0
    %1517 = vmatpush1.msra.mxu0 0.0
    %1518 = vmatprep.subr.mxu0 0.0
    %1519 = vmatpush1.msra.mxu0 0.0
    %1520 = vmatprep.subr.mxu0 0.0
    %1521 = vmatpush1.msra.mxu0 0.0
    %1522 = vmatprep.subr.mxu0 0.0
    %1523 = vmatpush1.msra.mxu0 0.0
    %1524 = vmatprep.subr.mxu0 0.0
    %1525 = vmatpush1.msra.mxu0 0.0
    %1526 = vmatprep.subr.mxu0 0.0
    %1527 = vmatpush1.msra.mxu0 0.0
    %1528 = vmatprep.subr.mxu0 0.0
    %1529 = vmatpush1.msra.mxu0 0.0
    %1530 = vmatprep.subr.mxu0 0.0
    %1531 = vmatpush1.msra.mxu0 0.0
    %1532 = vmatprep.subr.mxu0 0.0
    %1533 = vmatpush1.msra.mxu0 0.0
    %1534 = vmatprep.subr.mxu0 0.0
    %1535 = vmatpush1.msra.mxu0 0.0
    %1536 = vmatprep.subr.mxu0 0.0
    %1537 = vmatpush1.msra.mxu0 0.0
    %1538 = vmatprep.subr.mxu0 0.0
    %1539 = vmatpush1.msra.mxu0 0.0
    %1540 = vmatprep.subr.mxu0 0.0
    %1541 = vmatpush1.msra.mxu0 0.0
    %1542 = vmatprep.subr.mxu0 0.0
    %1543 = vmatpush1.msra.mxu0 0.0
    %1544 = vmatprep.subr.mxu0 0.0
    %1545 = vmatpush1.msra.mxu0 0.0
    %1546 = vmatprep.subr.mxu0 0.0
    %1547 = vmatpush1.msra.mxu0 0.0
    %1548 = vmatprep.mubr.f32.mxu0 0.0
    %1549 = vmatmul.mubr.f32.gmra.mrb[0].mxu0 %v1482
    %v1550 = vpop.f32.mrb[0].mxu0
    %v1551 = vadd.f32 0.0, %v1550
    %v1552 = vpop.f32.mrb[0].mxu0
    %v1553 = vadd.f32 0.0, %v1552
    %1554 = vdwg.mxu0
    %v1555 = vld [vmem:[#allocation2 + $0x10] sm:$0xc0]
    %v1556 = vld [vmem:[#allocation2] sm:$0x3]
    %v1557 = vld [vmem:[#allocation2 + $0x8] sm:$0x3]
    %v1559 = vrot.slane %v1551, 2
    %v1561 = vadd.f32 %v1555, %v1559
    %v1562 = vxor.u32 %v1561, 2147483648
    %v1563 = vmul.f32 %v1562, 1.442695
    %v1564 = vpow.pop %v1563
    %v1565 = vadd.f32 %v1564, 1.0
    %v1566 = vrcp.pop %v1565
    %v1567 = vmul.f32 1.0, %v1566
    %v1568 = vadd.f32 %v1551, %v314
    %v1570 = vrot.slane %v1568, 2
    %1571 = vrot.lane.b32.xlu0 %v1570, 64
    %v1572 = vpop.permute.xlu0 %1571
    %v1574 = vmul.f32 %v1567, %v1572
    %1576 = vrot.lane.b32.xlu0 %v1574, 64
    %v1577 = vpop.permute.xlu0 %1576
    %v1579 = vadd.f32 %v1555, %v1577
    %v1580 = vtanh.pop %v1579
    %v1581 = vsub.f32 1.0, %v1567
    %1583 = vrot.lane.b32.xlu0 %v1580, 96
    %v1584 = vpop.permute.xlu0 %1583
    %v1586 = vmul.f32 %v1581, %v1584
    %v1587 = vrot.slane %v1478, 2
    %1588 = vrot.lane.b32.xlu0 %v1587, 32
    %v1589 = vpop.permute.xlu0 %1588
    %v1591 = vmul.f32 %v1567, %v1589
    %v1592 = vadd.f32 %v1586, %v1591
    %v1594 = vrot.slane %v1592, 6
    %1595 = vrot.lane.b32.xlu0 %v1594, 96
    %v1596 = vpop.permute.xlu0 %1595
    %v1598 = vsel %vm389, %v1596, %v1478
    %v1599 = vadd.f32 %v1556, %v1551
    %v1600 = vxor.u32 %v1599, 2147483648
    %v1601 = vmul.f32 %v1600, 1.442695
    %v1602 = vpow.pop %v1601
    %v1603 = vadd.f32 %v1602, 1.0
    %v1604 = vrcp.pop %v1603
    %v1605 = vmul.f32 1.0, %v1604
    %v1606 = vadd.f32 %v1557, %v1553
    %v1607 = vxor.u32 %v1606, 2147483648
    %v1608 = vmul.f32 %v1607, 1.442695
    %v1609 = vpow.pop %v1608
    %v1610 = vadd.f32 %v1609, 1.0
    %v1611 = vrcp.pop %v1610
    %v1612 = vmul.f32 1.0, %v1611
    %v1613 = vadd.f32 %v1553, %v227
    %1615 = vrot.lane.b32.xlu0 %v1613, 64
    %v1616 = vpop.permute.xlu0 %1615
    %v1618 = vmul.f32 %v1605, %v1616
    %1620 = vrot.lane.b32.xlu0 %v1618, 64
    %v1621 = vpop.permute.xlu0 %1620
    %v1623 = vadd.f32 %v1557, %v1621
    %v1624 = vtanh.pop %v1623
    %v1625 = vsub.f32 1.0, %v1612
    %1627 = vrot.lane.b32.xlu0 %v1624, 96
    %v1628 = vpop.permute.xlu0 %1627
    %v1630 = vmul.f32 %v1625, %v1628
    %1631 = vrot.lane.b32.xlu0 %v1478, 96
    %v1632 = vpop.permute.xlu0 %1631
    %v1634 = vmul.f32 %v1612, %v1632
    %v1635 = vadd.f32 %v1630, %v1634
    %v1636 = vsel %vm341, %v1635, %v1632
    %1638 = vrot.lane.b32.xlu0 %v1636, 32
    %v1639 = vpop.permute.xlu0 %1638
    %v1641 = vsel %vm117, %v1598, %v1639
    %1642 = vst.msk [vmem:[#allocation3 + $0xe] sm:$0x3] %vm403, %v1598
    %1643 = vst.msk [vmem:[#allocation3] sm:$0x3] %vm405, %v1639
    %v1644 = vld [vmem:[#allocation3] sm:$0xff]
    %v1645 = vld [vmem:[#allocation3 + $0x8] sm:$0xff]
    %v1646 = vld [vmem:[%s6] sm:$0xff]
    %v1647 = vld [vmem:[%s6 + $0x8] sm:$0xff]
    %v1648 = vld [vmem:[%s6 + $0x10] sm:$0xff]
    %v1649 = vld [vmem:[%s6 + $0x18] sm:$0xff]
    %v1650 = vld [vmem:[%s6 + $0x20] sm:$0xff]
    %v1651 = vld [vmem:[%s6 + $0x28] sm:$0xff]
    %v1652 = vld [vmem:[%s6 + $0x30] sm:$0xff]
    %v1653 = vld [vmem:[%s6 + $0x38] sm:$0xff]
    %v1654 = vld [vmem:[%s6 + $0x40] sm:$0xff]
    %v1655 = vld [vmem:[%s6 + $0x48] sm:$0xff]
    %v1656 = vld [vmem:[%s6 + $0x50] sm:$0xff]
    %v1657 = vld [vmem:[%s6 + $0x58] sm:$0xff]
    %v1658 = vld [vmem:[%s6 + $0x60] sm:$0xff]
    %v1659 = vld [vmem:[%s6 + $0x68] sm:$0xff]
    %v1660 = vld [vmem:[%s6 + $0x70] sm:$0xff]
    %v1661 = vld [vmem:[%s6 + $0x78] sm:$0xff]
    %v1662 = vld [vmem:[%s7] sm:$0x3]
    %v1664 = vlaneseq
    %v1665 = vshrl.u32 %v1664, 7
    %v1666 = vsub.s32 0, %v1665
    %v1667 = vrot.slane %v1662, %v1666
    %v1668 = vlaneseq
    %v1669 = vshrl.u32 %v1668, 7
    %v1670 = vsub.s32 1, %v1669
    %v1671 = vrot.slane %v1662, %v1670
    %v1675 = vsel %vm202, %v1644, 0
    %v1678 = vsel %vm202, %v1645, 0
    %1680 = vmatprep.subr.mxu0 %v1647
    %1681 = vmatpush1.msra.mxu0 %v1646
    %1682 = vmatprep.subr.mxu0 %v1649
    %1683 = vmatpush1.msra.mxu0 %v1648
    %1684 = vmatprep.subr.mxu0 %v1651
    %1685 = vmatpush1.msra.mxu0 %v1650
    %1686 = vmatprep.subr.mxu0 %v1653
    %1687 = vmatpush1.msra.mxu0 %v1652
    %1688 = vmatprep.subr.mxu0 %v1655
    %1689 = vmatpush1.msra.mxu0 %v1654
    %1690 = vmatprep.subr.mxu0 %v1657
    %1691 = vmatpush1.msra.mxu0 %v1656
    %1692 = vmatprep.subr.mxu0 %v1659
    %1693 = vmatpush1.msra.mxu0 %v1658
    %1694 = vmatprep.subr.mxu0 %v1661
    %1695 = vmatpush1.msra.mxu0 %v1660
    %1696 = vmatprep.subr.mxu0 0.0
    %1697 = vmatpush1.msra.mxu0 0.0
    %1698 = vmatprep.subr.mxu0 0.0
    %1699 = vmatpush1.msra.mxu0 0.0
    %1700 = vmatprep.subr.mxu0 0.0
    %1701 = vmatpush1.msra.mxu0 0.0
    %1702 = vmatprep.subr.mxu0 0.0
    %1703 = vmatpush1.msra.mxu0 0.0
    %1704 = vmatprep.subr.mxu0 0.0
    %1705 = vmatpush1.msra.mxu0 0.0
    %1706 = vmatprep.subr.mxu0 0.0
    %1707 = vmatpush1.msra.mxu0 0.0
    %1708 = vmatprep.subr.mxu0 0.0
    %1709 = vmatpush1.msra.mxu0 0.0
    %1710 = vmatprep.subr.mxu0 0.0
    %1711 = vmatpush1.msra.mxu0 0.0
    %1712 = vmatprep.subr.mxu0 0.0
    %1713 = vmatpush1.msra.mxu0 0.0
    %1714 = vmatprep.subr.mxu0 0.0
    %1715 = vmatpush1.msra.mxu0 0.0
    %1716 = vmatprep.subr.mxu0 0.0
    %1717 = vmatpush1.msra.mxu0 0.0
    %1718 = vmatprep.subr.mxu0 0.0
    %1719 = vmatpush1.msra.mxu0 0.0
    %1720 = vmatprep.subr.mxu0 0.0
    %1721 = vmatpush1.msra.mxu0 0.0
    %1722 = vmatprep.subr.mxu0 0.0
    %1723 = vmatpush1.msra.mxu0 0.0
    %1724 = vmatprep.subr.mxu0 0.0
    %1725 = vmatpush1.msra.mxu0 0.0
    %1726 = vmatprep.subr.mxu0 0.0
    %1727 = vmatpush1.msra.mxu0 0.0
    %1728 = vmatprep.subr.mxu0 0.0
    %1729 = vmatpush1.msra.mxu0 0.0
    %1730 = vmatprep.subr.mxu0 0.0
    %1731 = vmatpush1.msra.mxu0 0.0
    %1732 = vmatprep.subr.mxu0 0.0
    %1733 = vmatpush1.msra.mxu0 0.0
    %1734 = vmatprep.subr.mxu0 0.0
    %1735 = vmatpush1.msra.mxu0 0.0
    %1736 = vmatprep.subr.mxu0 0.0
    %1737 = vmatpush1.msra.mxu0 0.0
    %1738 = vmatprep.subr.mxu0 0.0
    %1739 = vmatpush1.msra.mxu0 0.0
    %1740 = vmatprep.subr.mxu0 0.0
    %1741 = vmatpush1.msra.mxu0 0.0
    %1742 = vmatprep.subr.mxu0 0.0
    %1743 = vmatpush1.msra.mxu0 0.0
    %1744 = vmatprep.mubr.f32.mxu0 0.0
    %1745 = vmatmul.mubr.f32.gmra.mrb[0].mxu0 %v1675
    %v1746 = vpop.f32.mrb[0].mxu0
    %v1747 = vadd.f32 %v1667, %v1746
    %v1748 = vpop.f32.mrb[0].mxu0
    %v1749 = vadd.f32 %v1671, %v1748
    %1750 = vmatprep.mubr.f32.mxu0 0.0
    %1751 = vmatmul.mubr.f32.gmra.mrb[0].mxu0 %v1678
    %v1752 = vpop.f32.mrb[0].mxu0
    %v1753 = vadd.f32 %v1667, %v1752
    %v1754 = vpop.f32.mrb[0].mxu0
    %v1755 = vadd.f32 %v1671, %v1754
    %1756 = vdwg.mxu0
    %1757 = vst [vmem:[#allocation2] sm:$0xff] %v1747
    %1758 = vst.msk [vmem:[#allocation2 + $0x8] sm:$0xff] %vm202, %v1749
    %1759 = vst [vmem:[#allocation2 + $0x10] sm:$0xff] %v1753
    %1760 = vst.msk [vmem:[#allocation2 + $0x18] sm:$0xff] %vm202, %v1755
    %v1761 = vld [vmem:[%s8] sm:$0xff]
    %v1762 = vld [vmem:[%s8 + $0x8] sm:$0xff]
    %v1763 = vld [vmem:[%s8 + $0x10] sm:$0xff]
    %v1764 = vld [vmem:[%s8 + $0x18] sm:$0xff]
    %v1765 = vld [vmem:[%s8 + $0x20] sm:$0xff]
    %v1766 = vld [vmem:[%s8 + $0x28] sm:$0xff]
    %v1767 = vld [vmem:[%s8 + $0x30] sm:$0xff]
    %v1768 = vld [vmem:[%s8 + $0x38] sm:$0xff]
    %v1769 = vld [vmem:[%s8 + $0x40] sm:$0xff]
    %v1770 = vld [vmem:[%s8 + $0x48] sm:$0xff]
    %v1771 = vld [vmem:[%s8 + $0x50] sm:$0xff]
    %v1772 = vld [vmem:[%s8 + $0x58] sm:$0xff]
    %v1773 = vld [vmem:[%s8 + $0x60] sm:$0xff]
    %v1774 = vld [vmem:[%s8 + $0x68] sm:$0xff]
    %v1775 = vld [vmem:[%s8 + $0x70] sm:$0xff]
    %v1776 = vld [vmem:[%s8 + $0x78] sm:$0xff]
    %v1777 = vld [vmem:[%s9] sm:$0x1]
    %v1779 = vlaneseq
    %v1780 = vshrl.u32 %v1779, 7
    %v1781 = vsub.s32 0, %v1780
    %v1782 = vrot.slane %v1777, %v1781
    %1784 = vmatprep.subr.mxu0 %v1762
    %1785 = vmatpush1.msra.mxu0 %v1761
    %1786 = vmatprep.subr.mxu0 %v1764
    %1787 = vmatpush1.msra.mxu0 %v1763
    %1788 = vmatprep.subr.mxu0 %v1766
    %1789 = vmatpush1.msra.mxu0 %v1765
    %1790 = vmatprep.subr.mxu0 %v1768
    %1791 = vmatpush1.msra.mxu0 %v1767
    %1792 = vmatprep.subr.mxu0 %v1770
    %1793 = vmatpush1.msra.mxu0 %v1769
    %1794 = vmatprep.subr.mxu0 %v1772
    %1795 = vmatpush1.msra.mxu0 %v1771
    %1796 = vmatprep.subr.mxu0 %v1774
    %1797 = vmatpush1.msra.mxu0 %v1773
    %1798 = vmatprep.subr.mxu0 %v1776
    %1799 = vmatpush1.msra.mxu0 %v1775
    %1800 = vmatprep.subr.mxu0 0.0
    %1801 = vmatpush1.msra.mxu0 0.0
    %1802 = vmatprep.subr.mxu0 0.0
    %1803 = vmatpush1.msra.mxu0 0.0
    %1804 = vmatprep.subr.mxu0 0.0
    %1805 = vmatpush1.msra.mxu0 0.0
    %1806 = vmatprep.subr.mxu0 0.0
    %1807 = vmatpush1.msra.mxu0 0.0
    %1808 = vmatprep.subr.mxu0 0.0
    %1809 = vmatpush1.msra.mxu0 0.0
    %1810 = vmatprep.subr.mxu0 0.0
    %1811 = vmatpush1.msra.mxu0 0.0
    %1812 = vmatprep.subr.mxu0 0.0
    %1813 = vmatpush1.msra.mxu0 0.0
    %1814 = vmatprep.subr.mxu0 0.0
    %1815 = vmatpush1.msra.mxu0 0.0
    %1816 = vmatprep.subr.mxu0 0.0
    %1817 = vmatpush1.msra.mxu0 0.0
    %1818 = vmatprep.subr.mxu0 0.0
    %1819 = vmatpush1.msra.mxu0 0.0
    %1820 = vmatprep.subr.mxu0 0.0
    %1821 = vmatpush1.msra.mxu0 0.0
    %1822 = vmatprep.subr.mxu0 0.0
    %1823 = vmatpush1.msra.mxu0 0.0
    %1824 = vmatprep.subr.mxu0 0.0
    %1825 = vmatpush1.msra.mxu0 0.0
    %1826 = vmatprep.subr.mxu0 0.0
    %1827 = vmatpush1.msra.mxu0 0.0
    %1828 = vmatprep.subr.mxu0 0.0
    %1829 = vmatpush1.msra.mxu0 0.0
    %1830 = vmatprep.subr.mxu0 0.0
    %1831 = vmatpush1.msra.mxu0 0.0
    %1832 = vmatprep.subr.mxu0 0.0
    %1833 = vmatpush1.msra.mxu0 0.0
    %1834 = vmatprep.subr.mxu0 0.0
    %1835 = vmatpush1.msra.mxu0 0.0
    %1836 = vmatprep.subr.mxu0 0.0
    %1837 = vmatpush1.msra.mxu0 0.0
    %1838 = vmatprep.subr.mxu0 0.0
    %1839 = vmatpush1.msra.mxu0 0.0
    %1840 = vmatprep.subr.mxu0 0.0
    %1841 = vmatpush1.msra.mxu0 0.0
    %1842 = vmatprep.subr.mxu0 0.0
    %1843 = vmatpush1.msra.mxu0 0.0
    %1844 = vmatprep.subr.mxu0 0.0
    %1845 = vmatpush1.msra.mxu0 0.0
    %1846 = vmatprep.subr.mxu0 0.0
    %1847 = vmatpush1.msra.mxu0 0.0
    %1848 = vmatprep.mubr.f32.mxu0 0.0
    %1849 = vmatmul.mubr.f32.gmra.mrb[0].mxu0 %v230
    %v1850 = vpop.f32.mrb[0].mxu0
    %v1851 = vadd.f32 0.0, %v1850
    %v1852 = vpop.f32.mrb[0].mxu0
    %v1853 = vadd.f32 0.0, %v1852
    %1854 = vdwg.mxu0
    %v1855 = vld [vmem:[#allocation2] sm:$0x3]
    %v1856 = vld [vmem:[#allocation2 + $0x10] sm:$0xc0]
    %v1857 = vld [vmem:[#allocation2 + $0x18] sm:$0xc0]
    %v1858 = vadd.f32 %v1855, %v1851
    %v1859 = vxor.u32 %v1858, 2147483648
    %v1860 = vmul.f32 %v1859, 1.442695
    %v1861 = vpow.pop %v1860
    %v1862 = vadd.f32 %v1861, 1.0
    %v1863 = vrcp.pop %v1862
    %v1864 = vmul.f32 1.0, %v1863
    %1865 = vrot.lane.b32.xlu0 %v1782, 64
    %v1866 = vpop.permute.xlu0 %1865
    %v1868 = vadd.f32 %v1851, %v1866
    %1870 = vrot.lane.b32.xlu0 %v1868, 64
    %v1871 = vpop.permute.xlu0 %1870
    %v1873 = vmul.f32 %v1864, %v1871
    %1875 = vrot.lane.b32.xlu0 %v1873, 64
    %v1876 = vpop.permute.xlu0 %1875
    %v1878 = vadd.f32 %v1855, %v1876
    %v1879 = vtanh.pop %v1878
    %v1880 = vsub.f32 1.0, %v1864
    %1882 = vrot.lane.b32.xlu0 %v1879, 96
    %v1883 = vpop.permute.xlu0 %1882
    %v1885 = vmul.f32 %v1880, %v1883
    %v1886 = vmul.f32 %v1864, 0.0
    %v1887 = vadd.f32 %v1885, %v1886
    %v1888 = vsel %vm341, %v1887, 0.0
    %v1890 = vrot.slane %v1851, 2
    %v1892 = vadd.f32 %v1856, %v1890
    %v1893 = vxor.u32 %v1892, 2147483648
    %v1894 = vmul.f32 %v1893, 1.442695
    %v1895 = vpow.pop %v1894
    %v1896 = vadd.f32 %v1895, 1.0
    %v1897 = vrcp.pop %v1896
    %v1898 = vmul.f32 1.0, %v1897
    %v1900 = vrot.slane %v1853, 2
    %v1902 = vadd.f32 %v1857, %v1900
    %v1903 = vxor.u32 %v1902, 2147483648
    %v1904 = vmul.f32 %v1903, 1.442695
    %v1905 = vpow.pop %v1904
    %v1906 = vadd.f32 %v1905, 1.0
    %v1907 = vrcp.pop %v1906
    %v1908 = vmul.f32 1.0, %v1907
    %v1909 = vadd.f32 %v1853, %v1782
    %v1911 = vrot.slane %v1909, 2
    %1912 = vrot.lane.b32.xlu0 %v1911, 64
    %v1913 = vpop.permute.xlu0 %1912
    %v1915 = vmul.f32 %v1898, %v1913
    %1917 = vrot.lane.b32.xlu0 %v1915, 64
    %v1918 = vpop.permute.xlu0 %1917
    %v1920 = vadd.f32 %v1857, %v1918
    %v1921 = vtanh.pop %v1920
    %v1922 = vsub.f32 1.0, %v1908
    %1924 = vrot.lane.b32.xlu0 %v1921, 96
    %v1925 = vpop.permute.xlu0 %1924
    %v1927 = vmul.f32 %v1922, %v1925
    %v1928 = vmul.f32 %v1908, 0.0
    %v1929 = vadd.f32 %v1927, %v1928
    %v1931 = vrot.slane %v1929, 6
    %v1933 = vsel %vm389, %v1931, 0.0
    %1935 = vrot.lane.b32.xlu0 %v1888, 96
    %v1936 = vpop.permute.xlu0 %1935
    %1939 = vrot.lane.b32.xlu0 %v1933, 32
    %v1940 = vpop.permute.xlu0 %1939
    %v1942 = vsel %vm117, %v1936, %v1940
    %v1944 = vsel %vm202, %v1942, 0
    %1946 = vmatprep.subr.mxu0 %v1762
    %1947 = vmatpush1.msra.mxu0 %v1761
    %1948 = vmatprep.subr.mxu0 %v1764
    %1949 = vmatpush1.msra.mxu0 %v1763
    %1950 = vmatprep.subr.mxu0 %v1766
    %1951 = vmatpush1.msra.mxu0 %v1765
    %1952 = vmatprep.subr.mxu0 %v1768
    %1953 = vmatpush1.msra.mxu0 %v1767
    %1954 = vmatprep.subr.mxu0 %v1770
    %1955 = vmatpush1.msra.mxu0 %v1769
    %1956 = vmatprep.subr.mxu0 %v1772
    %1957 = vmatpush1.msra.mxu0 %v1771
    %1958 = vmatprep.subr.mxu0 %v1774
    %1959 = vmatpush1.msra.mxu0 %v1773
    %1960 = vmatprep.subr.mxu0 %v1776
    %1961 = vmatpush1.msra.mxu0 %v1775
    %1962 = vmatprep.subr.mxu0 0.0
    %1963 = vmatpush1.msra.mxu0 0.0
    %1964 = vmatprep.subr.mxu0 0.0
    %1965 = vmatpush1.msra.mxu0 0.0
    %1966 = vmatprep.subr.mxu0 0.0
    %1967 = vmatpush1.msra.mxu0 0.0
    %1968 = vmatprep.subr.mxu0 0.0
    %1969 = vmatpush1.msra.mxu0 0.0
    %1970 = vmatprep.subr.mxu0 0.0
    %1971 = vmatpush1.msra.mxu0 0.0
    %1972 = vmatprep.subr.mxu0 0.0
    %1973 = vmatpush1.msra.mxu0 0.0
    %1974 = vmatprep.subr.mxu0 0.0
    %1975 = vmatpush1.msra.mxu0 0.0
    %1976 = vmatprep.subr.mxu0 0.0
    %1977 = vmatpush1.msra.mxu0 0.0
    %1978 = vmatprep.subr.mxu0 0.0
    %1979 = vmatpush1.msra.mxu0 0.0
    %1980 = vmatprep.subr.mxu0 0.0
    %1981 = vmatpush1.msra.mxu0 0.0
    %1982 = vmatprep.subr.mxu0 0.0
    %1983 = vmatpush1.msra.mxu0 0.0
    %1984 = vmatprep.subr.mxu0 0.0
    %1985 = vmatpush1.msra.mxu0 0.0
    %1986 = vmatprep.subr.mxu0 0.0
    %1987 = vmatpush1.msra.mxu0 0.0
    %1988 = vmatprep.subr.mxu0 0.0
    %1989 = vmatpush1.msra.mxu0 0.0
    %1990 = vmatprep.subr.mxu0 0.0
    %1991 = vmatpush1.msra.mxu0 0.0
    %1992 = vmatprep.subr.mxu0 0.0
    %1993 = vmatpush1.msra.mxu0 0.0
    %1994 = vmatprep.subr.mxu0 0.0
    %1995 = vmatpush1.msra.mxu0 0.0
    %1996 = vmatprep.subr.mxu0 0.0
    %1997 = vmatpush1.msra.mxu0 0.0
    %1998 = vmatprep.subr.mxu0 0.0
    %1999 = vmatpush1.msra.mxu0 0.0
    %2000 = vmatprep.subr.mxu0 0.0
    %2001 = vmatpush1.msra.mxu0 0.0
    %2002 = vmatprep.subr.mxu0 0.0
    %2003 = vmatpush1.msra.mxu0 0.0
    %2004 = vmatprep.subr.mxu0 0.0
    %2005 = vmatpush1.msra.mxu0 0.0
    %2006 = vmatprep.subr.mxu0 0.0
    %2007 = vmatpush1.msra.mxu0 0.0
    %2008 = vmatprep.subr.mxu0 0.0
    %2009 = vmatpush1.msra.mxu0 0.0
    %2010 = vmatprep.mubr.f32.mxu0 0.0
    %2011 = vmatmul.mubr.f32.gmra.mrb[0].mxu0 %v1944
    %v2012 = vpop.f32.mrb[0].mxu0
    %v2013 = vadd.f32 0.0, %v2012
    %v2014 = vpop.f32.mrb[0].mxu0
    %v2015 = vadd.f32 0.0, %v2014
    %2016 = vdwg.mxu0
    %v2017 = vld [vmem:[#allocation2] sm:$0xc]
    %v2018 = vld [vmem:[#allocation2 + $0x10] sm:$0x30]
    %v2019 = vld [vmem:[#allocation2 + $0x18] sm:$0x30]
    %v2021 = vrot.slane %v2013, 6
    %v2023 = vadd.f32 %v2017, %v2021
    %v2024 = vxor.u32 %v2023, 2147483648
    %v2025 = vmul.f32 %v2024, 1.442695
    %v2026 = vpow.pop %v2025
    %v2027 = vadd.f32 %v2026, 1.0
    %v2028 = vrcp.pop %v2027
    %v2029 = vmul.f32 1.0, %v2028
    %v2030 = vadd.f32 %v2013, %v1866
    %v2032 = vrot.slane %v2030, 6
    %2033 = vrot.lane.b32.xlu0 %v2032, 64
    %v2034 = vpop.permute.xlu0 %2033
    %v2036 = vmul.f32 %v2029, %v2034
    %2038 = vrot.lane.b32.xlu0 %v2036, 64
    %v2039 = vpop.permute.xlu0 %2038
    %v2041 = vadd.f32 %v2017, %v2039
    %v2042 = vtanh.pop %v2041
    %v2043 = vsub.f32 1.0, %v2029
    %2045 = vrot.lane.b32.xlu0 %v2042, 96
    %v2046 = vpop.permute.xlu0 %2045
    %v2048 = vmul.f32 %v2043, %v2046
    %v2049 = vrot.slane %v1942, 6
    %2050 = vrot.lane.b32.xlu0 %v2049, 32
    %v2051 = vpop.permute.xlu0 %2050
    %v2053 = vmul.f32 %v2029, %v2051
    %v2054 = vadd.f32 %v2048, %v2053
    %v2056 = vrot.slane %v2054, 2
    %2057 = vrot.lane.b32.xlu0 %v2056, 96
    %v2058 = vpop.permute.xlu0 %2057
    %v2060 = vsel %vm524, %v2058, %v1942
    %v2061 = vrot.slane %v2013, 4
    %v2063 = vadd.f32 %v2018, %v2061
    %v2064 = vxor.u32 %v2063, 2147483648
    %v2065 = vmul.f32 %v2064, 1.442695
    %v2066 = vpow.pop %v2065
    %v2067 = vadd.f32 %v2066, 1.0
    %v2068 = vrcp.pop %v2067
    %v2069 = vmul.f32 1.0, %v2068
    %v2071 = vrot.slane %v2015, 4
    %v2073 = vadd.f32 %v2019, %v2071
    %v2074 = vxor.u32 %v2073, 2147483648
    %v2075 = vmul.f32 %v2074, 1.442695
    %v2076 = vpow.pop %v2075
    %v2077 = vadd.f32 %v2076, 1.0
    %v2078 = vrcp.pop %v2077
    %v2079 = vmul.f32 1.0, %v2078
    %v2080 = vadd.f32 %v2015, %v1782
    %v2082 = vrot.slane %v2080, 4
    %2083 = vrot.lane.b32.xlu0 %v2082, 64
    %v2084 = vpop.permute.xlu0 %2083
    %v2086 = vmul.f32 %v2069, %v2084
    %2088 = vrot.lane.b32.xlu0 %v2086, 64
    %v2089 = vpop.permute.xlu0 %2088
    %v2091 = vadd.f32 %v2019, %v2089
    %v2092 = vtanh.pop %v2091
    %v2093 = vsub.f32 1.0, %v2079
    %2095 = vrot.lane.b32.xlu0 %v2092, 96
    %v2096 = vpop.permute.xlu0 %2095
    %v2098 = vmul.f32 %v2093, %v2096
    %v2099 = vrot.slane %v1942, 4
    %2100 = vrot.lane.b32.xlu0 %v2099, 96
    %v2101 = vpop.permute.xlu0 %2100
    %v2103 = vmul.f32 %v2079, %v2101
    %v2104 = vadd.f32 %v2098, %v2103
    %v2106 = vrot.slane %v2104, 4
    %2108 = vrot.lane.b32.xlu0 %v1942, 96
    %v2109 = vpop.permute.xlu0 %2108
    %v2111 = vsel %vm580, %v2106, %v2109
    %2113 = vrot.lane.b32.xlu0 %v2111, 32
    %v2114 = vpop.permute.xlu0 %2113
    %v2116 = vsel %vm117, %v2060, %v2114
    %v2118 = vsel %vm202, %v2116, 0
    %2120 = vmatprep.subr.mxu0 %v1762
    %2121 = vmatpush1.msra.mxu0 %v1761
    %2122 = vmatprep.subr.mxu0 %v1764
    %2123 = vmatpush1.msra.mxu0 %v1763
    %2124 = vmatprep.subr.mxu0 %v1766
    %2125 = vmatpush1.msra.mxu0 %v1765
    %2126 = vmatprep.subr.mxu0 %v1768
    %2127 = vmatpush1.msra.mxu0 %v1767
    %2128 = vmatprep.subr.mxu0 %v1770
    %2129 = vmatpush1.msra.mxu0 %v1769
    %2130 = vmatprep.subr.mxu0 %v1772
    %2131 = vmatpush1.msra.mxu0 %v1771
    %2132 = vmatprep.subr.mxu0 %v1774
    %2133 = vmatpush1.msra.mxu0 %v1773
    %2134 = vmatprep.subr.mxu0 %v1776
    %2135 = vmatpush1.msra.mxu0 %v1775
    %2136 = vmatprep.subr.mxu0 0.0
    %2137 = vmatpush1.msra.mxu0 0.0
    %2138 = vmatprep.subr.mxu0 0.0
    %2139 = vmatpush1.msra.mxu0 0.0
    %2140 = vmatprep.subr.mxu0 0.0
    %2141 = vmatpush1.msra.mxu0 0.0
    %2142 = vmatprep.subr.mxu0 0.0
    %2143 = vmatpush1.msra.mxu0 0.0
    %2144 = vmatprep.subr.mxu0 0.0
    %2145 = vmatpush1.msra.mxu0 0.0
    %2146 = vmatprep.subr.mxu0 0.0
    %2147 = vmatpush1.msra.mxu0 0.0
    %2148 = vmatprep.subr.mxu0 0.0
    %2149 = vmatpush1.msra.mxu0 0.0
    %2150 = vmatprep.subr.mxu0 0.0
    %2151 = vmatpush1.msra.mxu0 0.0
    %2152 = vmatprep.subr.mxu0 0.0
    %2153 = vmatpush1.msra.mxu0 0.0
    %2154 = vmatprep.subr.mxu0 0.0
    %2155 = vmatpush1.msra.mxu0 0.0
    %2156 = vmatprep.subr.mxu0 0.0
    %2157 = vmatpush1.msra.mxu0 0.0
    %2158 = vmatprep.subr.mxu0 0.0
    %2159 = vmatpush1.msra.mxu0 0.0
    %2160 = vmatprep.subr.mxu0 0.0
    %2161 = vmatpush1.msra.mxu0 0.0
    %2162 = vmatprep.subr.mxu0 0.0
    %2163 = vmatpush1.msra.mxu0 0.0
    %2164 = vmatprep.subr.mxu0 0.0
    %2165 = vmatpush1.msra.mxu0 0.0
    %2166 = vmatprep.subr.mxu0 0.0
    %2167 = vmatpush1.msra.mxu0 0.0
    %2168 = vmatprep.subr.mxu0 0.0
    %2169 = vmatpush1.msra.mxu0 0.0
    %2170 = vmatprep.subr.mxu0 0.0
    %2171 = vmatpush1.msra.mxu0 0.0
    %2172 = vmatprep.subr.mxu0 0.0
    %2173 = vmatpush1.msra.mxu0 0.0
    %2174 = vmatprep.subr.mxu0 0.0
    %2175 = vmatpush1.msra.mxu0 0.0
    %2176 = vmatprep.subr.mxu0 0.0
    %2177 = vmatpush1.msra.mxu0 0.0
    %2178 = vmatprep.subr.mxu0 0.0
    %2179 = vmatpush1.msra.mxu0 0.0
    %2180 = vmatprep.subr.mxu0 0.0
    %2181 = vmatpush1.msra.mxu0 0.0
    %2182 = vmatprep.subr.mxu0 0.0
    %2183 = vmatpush1.msra.mxu0 0.0
    %2184 = vmatprep.mubr.f32.mxu0 0.0
    %2185 = vmatmul.mubr.f32.gmra.mrb[0].mxu0 %v2118
    %v2186 = vpop.f32.mrb[0].mxu0
    %v2187 = vadd.f32 0.0, %v2186
    %v2188 = vpop.f32.mrb[0].mxu0
    %v2189 = vadd.f32 0.0, %v2188
    %2190 = vdwg.mxu0
    %v2191 = vld [vmem:[#allocation2] sm:$0x30]
    %v2192 = vld [vmem:[#allocation2 + $0x10] sm:$0xc]
    %v2193 = vld [vmem:[#allocation2 + $0x18] sm:$0xc]
    %v2195 = vrot.slane %v2187, 4
    %v2197 = vadd.f32 %v2191, %v2195
    %v2198 = vxor.u32 %v2197, 2147483648
    %v2199 = vmul.f32 %v2198, 1.442695
    %v2200 = vpow.pop %v2199
    %v2201 = vadd.f32 %v2200, 1.0
    %v2202 = vrcp.pop %v2201
    %v2203 = vmul.f32 1.0, %v2202
    %v2204 = vadd.f32 %v2187, %v1866
    %v2206 = vrot.slane %v2204, 4
    %2207 = vrot.lane.b32.xlu0 %v2206, 64
    %v2208 = vpop.permute.xlu0 %2207
    %v2210 = vmul.f32 %v2203, %v2208
    %2212 = vrot.lane.b32.xlu0 %v2210, 64
    %v2213 = vpop.permute.xlu0 %2212
    %v2215 = vadd.f32 %v2191, %v2213
    %v2216 = vtanh.pop %v2215
    %v2217 = vsub.f32 1.0, %v2203
    %2219 = vrot.lane.b32.xlu0 %v2216, 96
    %v2220 = vpop.permute.xlu0 %2219
    %v2222 = vmul.f32 %v2217, %v2220
    %v2223 = vrot.slane %v2116, 4
    %2224 = vrot.lane.b32.xlu0 %v2223, 32
    %v2225 = vpop.permute.xlu0 %2224
    %v2227 = vmul.f32 %v2203, %v2225
    %v2228 = vadd.f32 %v2222, %v2227
    %v2230 = vrot.slane %v2228, 4
    %2231 = vrot.lane.b32.xlu0 %v2230, 96
    %v2232 = vpop.permute.xlu0 %2231
    %v2234 = vsel %vm712, %v2232, %v2116
    %v2235 = vrot.slane %v2187, 6
    %v2237 = vadd.f32 %v2192, %v2235
    %v2238 = vxor.u32 %v2237, 2147483648
    %v2239 = vmul.f32 %v2238, 1.442695
    %v2240 = vpow.pop %v2239
    %v2241 = vadd.f32 %v2240, 1.0
    %v2242 = vrcp.pop %v2241
    %v2243 = vmul.f32 1.0, %v2242
    %v2245 = vrot.slane %v2189, 6
    %v2247 = vadd.f32 %v2193, %v2245
    %v2248 = vxor.u32 %v2247, 2147483648
    %v2249 = vmul.f32 %v2248, 1.442695
    %v2250 = vpow.pop %v2249
    %v2251 = vadd.f32 %v2250, 1.0
    %v2252 = vrcp.pop %v2251
    %v2253 = vmul.f32 1.0, %v2252
    %v2254 = vadd.f32 %v2189, %v1782
    %v2256 = vrot.slane %v2254, 6
    %2257 = vrot.lane.b32.xlu0 %v2256, 64
    %v2258 = vpop.permute.xlu0 %2257
    %v2260 = vmul.f32 %v2243, %v2258
    %2262 = vrot.lane.b32.xlu0 %v2260, 64
    %v2263 = vpop.permute.xlu0 %2262
    %v2265 = vadd.f32 %v2193, %v2263
    %v2266 = vtanh.pop %v2265
    %v2267 = vsub.f32 1.0, %v2253
    %2269 = vrot.lane.b32.xlu0 %v2266, 96
    %v2270 = vpop.permute.xlu0 %2269
    %v2272 = vmul.f32 %v2267, %v2270
    %v2273 = vrot.slane %v2116, 6
    %2274 = vrot.lane.b32.xlu0 %v2273, 96
    %v2275 = vpop.permute.xlu0 %2274
    %v2277 = vmul.f32 %v2253, %v2275
    %v2278 = vadd.f32 %v2272, %v2277
    %v2280 = vrot.slane %v2278, 2
    %2282 = vrot.lane.b32.xlu0 %v2116, 96
    %v2283 = vpop.permute.xlu0 %2282
    %v2285 = vsel %vm768, %v2280, %v2283
    %2287 = vrot.lane.b32.xlu0 %v2285, 32
    %v2288 = vpop.permute.xlu0 %2287
    %v2290 = vsel %vm117, %v2234, %v2288
    %v2292 = vsel %vm202, %v2290, 0
    %2294 = vmatprep.subr.mxu0 %v1762
    %2295 = vmatpush1.msra.mxu0 %v1761
    %2296 = vmatprep.subr.mxu0 %v1764
    %2297 = vmatpush1.msra.mxu0 %v1763
    %2298 = vmatprep.subr.mxu0 %v1766
    %2299 = vmatpush1.msra.mxu0 %v1765
    %2300 = vmatprep.subr.mxu0 %v1768
    %2301 = vmatpush1.msra.mxu0 %v1767
    %2302 = vmatprep.subr.mxu0 %v1770
    %2303 = vmatpush1.msra.mxu0 %v1769
    %2304 = vmatprep.subr.mxu0 %v1772
    %2305 = vmatpush1.msra.mxu0 %v1771
    %2306 = vmatprep.subr.mxu0 %v1774
    %2307 = vmatpush1.msra.mxu0 %v1773
    %2308 = vmatprep.subr.mxu0 %v1776
    %2309 = vmatpush1.msra.mxu0 %v1775
    %2310 = vmatprep.subr.mxu0 0.0
    %2311 = vmatpush1.msra.mxu0 0.0
    %2312 = vmatprep.subr.mxu0 0.0
    %2313 = vmatpush1.msra.mxu0 0.0
    %2314 = vmatprep.subr.mxu0 0.0
    %2315 = vmatpush1.msra.mxu0 0.0
    %2316 = vmatprep.subr.mxu0 0.0
    %2317 = vmatpush1.msra.mxu0 0.0
    %2318 = vmatprep.subr.mxu0 0.0
    %2319 = vmatpush1.msra.mxu0 0.0
    %2320 = vmatprep.subr.mxu0 0.0
    %2321 = vmatpush1.msra.mxu0 0.0
    %2322 = vmatprep.subr.mxu0 0.0
    %2323 = vmatpush1.msra.mxu0 0.0
    %2324 = vmatprep.subr.mxu0 0.0
    %2325 = vmatpush1.msra.mxu0 0.0
    %2326 = vmatprep.subr.mxu0 0.0
    %2327 = vmatpush1.msra.mxu0 0.0
    %2328 = vmatprep.subr.mxu0 0.0
    %2329 = vmatpush1.msra.mxu0 0.0
    %2330 = vmatprep.subr.mxu0 0.0
    %2331 = vmatpush1.msra.mxu0 0.0
    %2332 = vmatprep.subr.mxu0 0.0
    %2333 = vmatpush1.msra.mxu0 0.0
    %2334 = vmatprep.subr.mxu0 0.0
    %2335 = vmatpush1.msra.mxu0 0.0
    %2336 = vmatprep.subr.mxu0 0.0
    %2337 = vmatpush1.msra.mxu0 0.0
    %2338 = vmatprep.subr.mxu0 0.0
    %2339 = vmatpush1.msra.mxu0 0.0
    %2340 = vmatprep.subr.mxu0 0.0
    %2341 = vmatpush1.msra.mxu0 0.0
    %2342 = vmatprep.subr.mxu0 0.0
    %2343 = vmatpush1.msra.mxu0 0.0
    %2344 = vmatprep.subr.mxu0 0.0
    %2345 = vmatpush1.msra.mxu0 0.0
    %2346 = vmatprep.subr.mxu0 0.0
    %2347 = vmatpush1.msra.mxu0 0.0
    %2348 = vmatprep.subr.mxu0 0.0
    %2349 = vmatpush1.msra.mxu0 0.0
    %2350 = vmatprep.subr.mxu0 0.0
    %2351 = vmatpush1.msra.mxu0 0.0
    %2352 = vmatprep.subr.mxu0 0.0
    %2353 = vmatpush1.msra.mxu0 0.0
    %2354 = vmatprep.subr.mxu0 0.0
    %2355 = vmatpush1.msra.mxu0 0.0
    %2356 = vmatprep.subr.mxu0 0.0
    %2357 = vmatpush1.msra.mxu0 0.0
    %2358 = vmatprep.mubr.f32.mxu0 0.0
    %2359 = vmatmul.mubr.f32.gmra.mrb[0].mxu0 %v2292
    %v2360 = vpop.f32.mrb[0].mxu0
    %v2361 = vadd.f32 0.0, %v2360
    %v2362 = vpop.f32.mrb[0].mxu0
    %v2363 = vadd.f32 0.0, %v2362
    %2364 = vdwg.mxu0
    %v2365 = vld [vmem:[#allocation2] sm:$0xc0]
    %v2366 = vld [vmem:[#allocation2 + $0x10] sm:$0x3]
    %v2367 = vld [vmem:[#allocation2 + $0x18] sm:$0x3]
    %v2369 = vrot.slane %v2361, 2
    %v2371 = vadd.f32 %v2365, %v2369
    %v2372 = vxor.u32 %v2371, 2147483648
    %v2373 = vmul.f32 %v2372, 1.442695
    %v2374 = vpow.pop %v2373
    %v2375 = vadd.f32 %v2374, 1.0
    %v2376 = vrcp.pop %v2375
    %v2377 = vmul.f32 1.0, %v2376
    %v2378 = vadd.f32 %v2361, %v1866
    %v2380 = vrot.slane %v2378, 2
    %2381 = vrot.lane.b32.xlu0 %v2380, 64
    %v2382 = vpop.permute.xlu0 %2381
    %v2384 = vmul.f32 %v2377, %v2382
    %2386 = vrot.lane.b32.xlu0 %v2384, 64
    %v2387 = vpop.permute.xlu0 %2386
    %v2389 = vadd.f32 %v2365, %v2387
    %v2390 = vtanh.pop %v2389
    %v2391 = vsub.f32 1.0, %v2377
    %2393 = vrot.lane.b32.xlu0 %v2390, 96
    %v2394 = vpop.permute.xlu0 %2393
    %v2396 = vmul.f32 %v2391, %v2394
    %v2397 = vrot.slane %v2290, 2
    %2398 = vrot.lane.b32.xlu0 %v2397, 32
    %v2399 = vpop.permute.xlu0 %2398
    %v2401 = vmul.f32 %v2377, %v2399
    %v2402 = vadd.f32 %v2396, %v2401
    %v2404 = vrot.slane %v2402, 6
    %2405 = vrot.lane.b32.xlu0 %v2404, 96
    %v2406 = vpop.permute.xlu0 %2405
    %v2408 = vsel %vm900, %v2406, %v2290
    %v2409 = vadd.f32 %v2366, %v2361
    %v2410 = vxor.u32 %v2409, 2147483648
    %v2411 = vmul.f32 %v2410, 1.442695
    %v2412 = vpow.pop %v2411
    %v2413 = vadd.f32 %v2412, 1.0
    %v2414 = vrcp.pop %v2413
    %v2415 = vmul.f32 1.0, %v2414
    %v2416 = vadd.f32 %v2367, %v2363
    %v2417 = vxor.u32 %v2416, 2147483648
    %v2418 = vmul.f32 %v2417, 1.442695
    %v2419 = vpow.pop %v2418
    %v2420 = vadd.f32 %v2419, 1.0
    %v2421 = vrcp.pop %v2420
    %v2422 = vmul.f32 1.0, %v2421
    %v2423 = vadd.f32 %v2363, %v1782
    %2425 = vrot.lane.b32.xlu0 %v2423, 64
    %v2426 = vpop.permute.xlu0 %2425
    %v2428 = vmul.f32 %v2415, %v2426
    %2430 = vrot.lane.b32.xlu0 %v2428, 64
    %v2431 = vpop.permute.xlu0 %2430
    %v2433 = vadd.f32 %v2367, %v2431
    %v2434 = vtanh.pop %v2433
    %v2435 = vsub.f32 1.0, %v2422
    %2437 = vrot.lane.b32.xlu0 %v2434, 96
    %v2438 = vpop.permute.xlu0 %2437
    %v2440 = vmul.f32 %v2435, %v2438
    %2441 = vrot.lane.b32.xlu0 %v2290, 96
    %v2442 = vpop.permute.xlu0 %2441
    %v2444 = vmul.f32 %v2422, %v2442
    %v2445 = vadd.f32 %v2440, %v2444
    %v2446 = vsel %vm949, %v2445, %v2442
    %2448 = vrot.lane.b32.xlu0 %v2446, 32
    %v2449 = vpop.permute.xlu0 %2448
    %v2451 = vsel %vm117, %v2408, %v2449
    %v2453 = vsel %vm202, %v2451, 0
    %2455 = vmatprep.subr.mxu0 %v1762
    %2456 = vmatpush1.msra.mxu0 %v1761
    %2457 = vmatprep.subr.mxu0 %v1764
    %2458 = vmatpush1.msra.mxu0 %v1763
    %2459 = vmatprep.subr.mxu0 %v1766
    %2460 = vmatpush1.msra.mxu0 %v1765
    %2461 = vmatprep.subr.mxu0 %v1768
    %2462 = vmatpush1.msra.mxu0 %v1767
    %2463 = vmatprep.subr.mxu0 %v1770
    %2464 = vmatpush1.msra.mxu0 %v1769
    %2465 = vmatprep.subr.mxu0 %v1772
    %2466 = vmatpush1.msra.mxu0 %v1771
    %2467 = vmatprep.subr.mxu0 %v1774
    %2468 = vmatpush1.msra.mxu0 %v1773
    %2469 = vmatprep.subr.mxu0 %v1776
    %2470 = vmatpush1.msra.mxu0 %v1775
    %2471 = vmatprep.subr.mxu0 0.0
    %2472 = vmatpush1.msra.mxu0 0.0
    %2473 = vmatprep.subr.mxu0 0.0
    %2474 = vmatpush1.msra.mxu0 0.0
    %2475 = vmatprep.subr.mxu0 0.0
    %2476 = vmatpush1.msra.mxu0 0.0
    %2477 = vmatprep.subr.mxu0 0.0
    %2478 = vmatpush1.msra.mxu0 0.0
    %2479 = vmatprep.subr.mxu0 0.0
    %2480 = vmatpush1.msra.mxu0 0.0
    %2481 = vmatprep.subr.mxu0 0.0
    %2482 = vmatpush1.msra.mxu0 0.0
    %2483 = vmatprep.subr.mxu0 0.0
    %2484 = vmatpush1.msra.mxu0 0.0
    %2485 = vmatprep.subr.mxu0 0.0
    %2486 = vmatpush1.msra.mxu0 0.0
    %2487 = vmatprep.subr.mxu0 0.0
    %2488 = vmatpush1.msra.mxu0 0.0
    %2489 = vmatprep.subr.mxu0 0.0
    %2490 = vmatpush1.msra.mxu0 0.0
    %2491 = vmatprep.subr.mxu0 0.0
    %2492 = vmatpush1.msra.mxu0 0.0
    %2493 = vmatprep.subr.mxu0 0.0
    %2494 = vmatpush1.msra.mxu0 0.0
    %2495 = vmatprep.subr.mxu0 0.0
    %2496 = vmatpush1.msra.mxu0 0.0
    %2497 = vmatprep.subr.mxu0 0.0
    %2498 = vmatpush1.msra.mxu0 0.0
    %2499 = vmatprep.subr.mxu0 0.0
    %2500 = vmatpush1.msra.mxu0 0.0
    %2501 = vmatprep.subr.mxu0 0.0
    %2502 = vmatpush1.msra.mxu0 0.0
    %2503 = vmatprep.subr.mxu0 0.0
    %2504 = vmatpush1.msra.mxu0 0.0
    %2505 = vmatprep.subr.mxu0 0.0
    %2506 = vmatpush1.msra.mxu0 0.0
    %2507 = vmatprep.subr.mxu0 0.0
    %2508 = vmatpush1.msra.mxu0 0.0
    %2509 = vmatprep.subr.mxu0 0.0
    %2510 = vmatpush1.msra.mxu0 0.0
    %2511 = vmatprep.subr.mxu0 0.0
    %2512 = vmatpush1.msra.mxu0 0.0
    %2513 = vmatprep.subr.mxu0 0.0
    %2514 = vmatpush1.msra.mxu0 0.0
    %2515 = vmatprep.subr.mxu0 0.0
    %2516 = vmatpush1.msra.mxu0 0.0
    %2517 = vmatprep.subr.mxu0 0.0
    %2518 = vmatpush1.msra.mxu0 0.0
    %2519 = vmatprep.mubr.f32.mxu0 0.0
    %2520 = vmatmul.mubr.f32.gmra.mrb[0].mxu0 %v2453
    %v2521 = vpop.f32.mrb[0].mxu0
    %v2522 = vadd.f32 0.0, %v2521
    %v2523 = vpop.f32.mrb[0].mxu0
    %v2524 = vadd.f32 0.0, %v2523
    %2525 = vdwg.mxu0
    %v2526 = vld [vmem:[#allocation2 + $0x10] sm:$0x3]
    %v2527 = vld [vmem:[#allocation2] sm:$0xc0]
    %v2528 = vld [vmem:[#allocation2 + $0x8] sm:$0xc0]
    %v2529 = vadd.f32 %v2526, %v2522
    %v2530 = vxor.u32 %v2529, 2147483648
    %v2531 = vmul.f32 %v2530, 1.442695
    %v2532 = vpow.pop %v2531
    %v2533 = vadd.f32 %v2532, 1.0
    %v2534 = vrcp.pop %v2533
    %v2535 = vmul.f32 1.0, %v2534
    %v2536 = vadd.f32 %v2522, %v1866
    %2538 = vrot.lane.b32.xlu0 %v2536, 64
    %v2539 = vpop.permute.xlu0 %2538
    %v2541 = vmul.f32 %v2535, %v2539
    %2543 = vrot.lane.b32.xlu0 %v2541, 64
    %v2544 = vpop.permute.xlu0 %2543
    %v2546 = vadd.f32 %v2526, %v2544
    %v2547 = vtanh.pop %v2546
    %v2548 = vsub.f32 1.0, %v2535
    %2550 = vrot.lane.b32.xlu0 %v2547, 96
    %v2551 = vpop.permute.xlu0 %2550
    %v2553 = vmul.f32 %v2548, %v2551
    %2554 = vrot.lane.b32.xlu0 %v2451, 32
    %v2555 = vpop.permute.xlu0 %2554
    %v2557 = vmul.f32 %v2535, %v2555
    %v2558 = vadd.f32 %v2553, %v2557
    %v2559 = vsel %vm949, %v2558, %v2555
    %v2561 = vrot.slane %v2522, 2
    %v2563 = vadd.f32 %v2527, %v2561
    %v2564 = vxor.u32 %v2563, 2147483648
    %v2565 = vmul.f32 %v2564, 1.442695
    %v2566 = vpow.pop %v2565
    %v2567 = vadd.f32 %v2566, 1.0
    %v2568 = vrcp.pop %v2567
    %v2569 = vmul.f32 1.0, %v2568
    %v2571 = vrot.slane %v2524, 2
    %v2573 = vadd.f32 %v2528, %v2571
    %v2574 = vxor.u32 %v2573, 2147483648
    %v2575 = vmul.f32 %v2574, 1.442695
    %v2576 = vpow.pop %v2575
    %v2577 = vadd.f32 %v2576, 1.0
    %v2578 = vrcp.pop %v2577
    %v2579 = vmul.f32 1.0, %v2578
    %v2580 = vadd.f32 %v2524, %v1782
    %v2582 = vrot.slane %v2580, 2
    %2583 = vrot.lane.b32.xlu0 %v2582, 64
    %v2584 = vpop.permute.xlu0 %2583
    %v2586 = vmul.f32 %v2569, %v2584
    %2588 = vrot.lane.b32.xlu0 %v2586, 64
    %v2589 = vpop.permute.xlu0 %2588
    %v2591 = vadd.f32 %v2528, %v2589
    %v2592 = vtanh.pop %v2591
    %v2593 = vsub.f32 1.0, %v2579
    %2595 = vrot.lane.b32.xlu0 %v2592, 96
    %v2596 = vpop.permute.xlu0 %2595
    %v2598 = vmul.f32 %v2593, %v2596
    %v2599 = vrot.slane %v2451, 2
    %2600 = vrot.lane.b32.xlu0 %v2599, 96
    %v2601 = vpop.permute.xlu0 %2600
    %v2603 = vmul.f32 %v2579, %v2601
    %v2604 = vadd.f32 %v2598, %v2603
    %v2606 = vrot.slane %v2604, 6
    %2608 = vrot.lane.b32.xlu0 %v2451, 96
    %v2609 = vpop.permute.xlu0 %2608
    %v2611 = vsel %vm900, %v2606, %v2609
    %2613 = vrot.lane.b32.xlu0 %v2559, 96
    %v2614 = vpop.permute.xlu0 %2613
    %2617 = vrot.lane.b32.xlu0 %v2611, 32
    %v2618 = vpop.permute.xlu0 %2617
    %v2620 = vsel %vm117, %v2614, %v2618
    %v2622 = vsel %vm202, %v2620, 0
    %2624 = vmatprep.subr.mxu0 %v1762
    %2625 = vmatpush1.msra.mxu0 %v1761
    %2626 = vmatprep.subr.mxu0 %v1764
    %2627 = vmatpush1.msra.mxu0 %v1763
    %2628 = vmatprep.subr.mxu0 %v1766
    %2629 = vmatpush1.msra.mxu0 %v1765
    %2630 = vmatprep.subr.mxu0 %v1768
    %2631 = vmatpush1.msra.mxu0 %v1767
    %2632 = vmatprep.subr.mxu0 %v1770
    %2633 = vmatpush1.msra.mxu0 %v1769
    %2634 = vmatprep.subr.mxu0 %v1772
    %2635 = vmatpush1.msra.mxu0 %v1771
    %2636 = vmatprep.subr.mxu0 %v1774
    %2637 = vmatpush1.msra.mxu0 %v1773
    %2638 = vmatprep.subr.mxu0 %v1776
    %2639 = vmatpush1.msra.mxu0 %v1775
    %2640 = vmatprep.subr.mxu0 0.0
    %2641 = vmatpush1.msra.mxu0 0.0
    %2642 = vmatprep.subr.mxu0 0.0
    %2643 = vmatpush1.msra.mxu0 0.0
    %2644 = vmatprep.subr.mxu0 0.0
    %2645 = vmatpush1.msra.mxu0 0.0
    %2646 = vmatprep.subr.mxu0 0.0
    %2647 = vmatpush1.msra.mxu0 0.0
    %2648 = vmatprep.subr.mxu0 0.0
    %2649 = vmatpush1.msra.mxu0 0.0
    %2650 = vmatprep.subr.mxu0 0.0
    %2651 = vmatpush1.msra.mxu0 0.0
    %2652 = vmatprep.subr.mxu0 0.0
    %2653 = vmatpush1.msra.mxu0 0.0
    %2654 = vmatprep.subr.mxu0 0.0
    %2655 = vmatpush1.msra.mxu0 0.0
    %2656 = vmatprep.subr.mxu0 0.0
    %2657 = vmatpush1.msra.mxu0 0.0
    %2658 = vmatprep.subr.mxu0 0.0
    %2659 = vmatpush1.msra.mxu0 0.0
    %2660 = vmatprep.subr.mxu0 0.0
    %2661 = vmatpush1.msra.mxu0 0.0
    %2662 = vmatprep.subr.mxu0 0.0
    %2663 = vmatpush1.msra.mxu0 0.0
    %2664 = vmatprep.subr.mxu0 0.0
    %2665 = vmatpush1.msra.mxu0 0.0
    %2666 = vmatprep.subr.mxu0 0.0
    %2667 = vmatpush1.msra.mxu0 0.0
    %2668 = vmatprep.subr.mxu0 0.0
    %2669 = vmatpush1.msra.mxu0 0.0
    %2670 = vmatprep.subr.mxu0 0.0
    %2671 = vmatpush1.msra.mxu0 0.0
    %2672 = vmatprep.subr.mxu0 0.0
    %2673 = vmatpush1.msra.mxu0 0.0
    %2674 = vmatprep.subr.mxu0 0.0
    %2675 = vmatpush1.msra.mxu0 0.0
    %2676 = vmatprep.subr.mxu0 0.0
    %2677 = vmatpush1.msra.mxu0 0.0
    %2678 = vmatprep.subr.mxu0 0.0
    %2679 = vmatpush1.msra.mxu0 0.0
    %2680 = vmatprep.subr.mxu0 0.0
    %2681 = vmatpush1.msra.mxu0 0.0
    %2682 = vmatprep.subr.mxu0 0.0
    %2683 = vmatpush1.msra.mxu0 0.0
    %2684 = vmatprep.subr.mxu0 0.0
    %2685 = vmatpush1.msra.mxu0 0.0
    %2686 = vmatprep.subr.mxu0 0.0
    %2687 = vmatpush1.msra.mxu0 0.0
    %2688 = vmatprep.mubr.f32.mxu0 0.0
    %2689 = vmatmul.mubr.f32.gmra.mrb[0].mxu0 %v2622
    %v2690 = vpop.f32.mrb[0].mxu0
    %v2691 = vadd.f32 0.0, %v2690
    %v2692 = vpop.f32.mrb[0].mxu0
    %v2693 = vadd.f32 0.0, %v2692
    %2694 = vdwg.mxu0
    %v2695 = vld [vmem:[#allocation2 + $0x10] sm:$0xc]
    %v2696 = vld [vmem:[#allocation2] sm:$0x30]
    %v2697 = vld [vmem:[#allocation2 + $0x8] sm:$0x30]
    %v2699 = vrot.slane %v2691, 6
    %v2701 = vadd.f32 %v2695, %v2699
    %v2702 = vxor.u32 %v2701, 2147483648
    %v2703 = vmul.f32 %v2702, 1.442695
    %v2704 = vpow.pop %v2703
    %v2705 = vadd.f32 %v2704, 1.0
    %v2706 = vrcp.pop %v2705
    %v2707 = vmul.f32 1.0, %v2706
    %v2708 = vadd.f32 %v2691, %v1866
    %v2710 = vrot.slane %v2708, 6
    %2711 = vrot.lane.b32.xlu0 %v2710, 64
    %v2712 = vpop.permute.xlu0 %2711
    %v2714 = vmul.f32 %v2707, %v2712
    %2716 = vrot.lane.b32.xlu0 %v2714, 64
    %v2717 = vpop.permute.xlu0 %2716
    %v2719 = vadd.f32 %v2695, %v2717
    %v2720 = vtanh.pop %v2719
    %v2721 = vsub.f32 1.0, %v2707
    %2723 = vrot.lane.b32.xlu0 %v2720, 96
    %v2724 = vpop.permute.xlu0 %2723
    %v2726 = vmul.f32 %v2721, %v2724
    %v2727 = vrot.slane %v2620, 6
    %2728 = vrot.lane.b32.xlu0 %v2727, 32
    %v2729 = vpop.permute.xlu0 %2728
    %v2731 = vmul.f32 %v2707, %v2729
    %v2732 = vadd.f32 %v2726, %v2731
    %v2734 = vrot.slane %v2732, 2
    %2735 = vrot.lane.b32.xlu0 %v2734, 96
    %v2736 = vpop.permute.xlu0 %2735
    %v2738 = vsel %vm768, %v2736, %v2620
    %v2739 = vrot.slane %v2691, 4
    %v2741 = vadd.f32 %v2696, %v2739
    %v2742 = vxor.u32 %v2741, 2147483648
    %v2743 = vmul.f32 %v2742, 1.442695
    %v2744 = vpow.pop %v2743
    %v2745 = vadd.f32 %v2744, 1.0
    %v2746 = vrcp.pop %v2745
    %v2747 = vmul.f32 1.0, %v2746
    %v2749 = vrot.slane %v2693, 4
    %v2751 = vadd.f32 %v2697, %v2749
    %v2752 = vxor.u32 %v2751, 2147483648
    %v2753 = vmul.f32 %v2752, 1.442695
    %v2754 = vpow.pop %v2753
    %v2755 = vadd.f32 %v2754, 1.0
    %v2756 = vrcp.pop %v2755
    %v2757 = vmul.f32 1.0, %v2756
    %v2758 = vadd.f32 %v2693, %v1782
    %v2760 = vrot.slane %v2758, 4
    %2761 = vrot.lane.b32.xlu0 %v2760, 64
    %v2762 = vpop.permute.xlu0 %2761
    %v2764 = vmul.f32 %v2747, %v2762
    %2766 = vrot.lane.b32.xlu0 %v2764, 64
    %v2767 = vpop.permute.xlu0 %2766
    %v2769 = vadd.f32 %v2697, %v2767
    %v2770 = vtanh.pop %v2769
    %v2771 = vsub.f32 1.0, %v2757
    %2773 = vrot.lane.b32.xlu0 %v2770, 96
    %v2774 = vpop.permute.xlu0 %2773
    %v2776 = vmul.f32 %v2771, %v2774
    %v2777 = vrot.slane %v2620, 4
    %2778 = vrot.lane.b32.xlu0 %v2777, 96
    %v2779 = vpop.permute.xlu0 %2778
    %v2781 = vmul.f32 %v2757, %v2779
    %v2782 = vadd.f32 %v2776, %v2781
    %v2784 = vrot.slane %v2782, 4
    %2786 = vrot.lane.b32.xlu0 %v2620, 96
    %v2787 = vpop.permute.xlu0 %2786
    %v2789 = vsel %vm712, %v2784, %v2787
    %2791 = vrot.lane.b32.xlu0 %v2789, 32
    %v2792 = vpop.permute.xlu0 %2791
    %v2794 = vsel %vm117, %v2738, %v2792
    %v2796 = vsel %vm202, %v2794, 0
    %2798 = vmatprep.subr.mxu0 %v1762
    %2799 = vmatpush1.msra.mxu0 %v1761
    %2800 = vmatprep.subr.mxu0 %v1764
    %2801 = vmatpush1.msra.mxu0 %v1763
    %2802 = vmatprep.subr.mxu0 %v1766
    %2803 = vmatpush1.msra.mxu0 %v1765
    %2804 = vmatprep.subr.mxu0 %v1768
    %2805 = vmatpush1.msra.mxu0 %v1767
    %2806 = vmatprep.subr.mxu0 %v1770
    %2807 = vmatpush1.msra.mxu0 %v1769
    %2808 = vmatprep.subr.mxu0 %v1772
    %2809 = vmatpush1.msra.mxu0 %v1771
    %2810 = vmatprep.subr.mxu0 %v1774
    %2811 = vmatpush1.msra.mxu0 %v1773
    %2812 = vmatprep.subr.mxu0 %v1776
    %2813 = vmatpush1.msra.mxu0 %v1775
    %2814 = vmatprep.subr.mxu0 0.0
    %2815 = vmatpush1.msra.mxu0 0.0
    %2816 = vmatprep.subr.mxu0 0.0
    %2817 = vmatpush1.msra.mxu0 0.0
    %2818 = vmatprep.subr.mxu0 0.0
    %2819 = vmatpush1.msra.mxu0 0.0
    %2820 = vmatprep.subr.mxu0 0.0
    %2821 = vmatpush1.msra.mxu0 0.0
    %2822 = vmatprep.subr.mxu0 0.0
    %2823 = vmatpush1.msra.mxu0 0.0
    %2824 = vmatprep.subr.mxu0 0.0
    %2825 = vmatpush1.msra.mxu0 0.0
    %2826 = vmatprep.subr.mxu0 0.0
    %2827 = vmatpush1.msra.mxu0 0.0
    %2828 = vmatprep.subr.mxu0 0.0
    %2829 = vmatpush1.msra.mxu0 0.0
    %2830 = vmatprep.subr.mxu0 0.0
    %2831 = vmatpush1.msra.mxu0 0.0
    %2832 = vmatprep.subr.mxu0 0.0
    %2833 = vmatpush1.msra.mxu0 0.0
    %2834 = vmatprep.subr.mxu0 0.0
    %2835 = vmatpush1.msra.mxu0 0.0
    %2836 = vmatprep.subr.mxu0 0.0
    %2837 = vmatpush1.msra.mxu0 0.0
    %2838 = vmatprep.subr.mxu0 0.0
    %2839 = vmatpush1.msra.mxu0 0.0
    %2840 = vmatprep.subr.mxu0 0.0
    %2841 = vmatpush1.msra.mxu0 0.0
    %2842 = vmatprep.subr.mxu0 0.0
    %2843 = vmatpush1.msra.mxu0 0.0
    %2844 = vmatprep.subr.mxu0 0.0
    %2845 = vmatpush1.msra.mxu0 0.0
    %2846 = vmatprep.subr.mxu0 0.0
    %2847 = vmatpush1.msra.mxu0 0.0
    %2848 = vmatprep.subr.mxu0 0.0
    %2849 = vmatpush1.msra.mxu0 0.0
    %2850 = vmatprep.subr.mxu0 0.0
    %2851 = vmatpush1.msra.mxu0 0.0
    %2852 = vmatprep.subr.mxu0 0.0
    %2853 = vmatpush1.msra.mxu0 0.0
    %2854 = vmatprep.subr.mxu0 0.0
    %2855 = vmatpush1.msra.mxu0 0.0
    %2856 = vmatprep.subr.mxu0 0.0
    %2857 = vmatpush1.msra.mxu0 0.0
    %2858 = vmatprep.subr.mxu0 0.0
    %2859 = vmatpush1.msra.mxu0 0.0
    %2860 = vmatprep.subr.mxu0 0.0
    %2861 = vmatpush1.msra.mxu0 0.0
    %2862 = vmatprep.mubr.f32.mxu0 0.0
    %2863 = vmatmul.mubr.f32.gmra.mrb[0].mxu0 %v2796
    %v2864 = vpop.f32.mrb[0].mxu0
    %v2865 = vadd.f32 0.0, %v2864
    %v2866 = vpop.f32.mrb[0].mxu0
    %v2867 = vadd.f32 0.0, %v2866
    %2868 = vdwg.mxu0
    %v2869 = vld [vmem:[#allocation2 + $0x10] sm:$0x30]
    %v2870 = vld [vmem:[#allocation2] sm:$0xc]
    %v2871 = vld [vmem:[#allocation2 + $0x8] sm:$0xc]
    %v2873 = vrot.slane %v2865, 4
    %v2875 = vadd.f32 %v2869, %v2873
    %v2876 = vxor.u32 %v2875, 2147483648
    %v2877 = vmul.f32 %v2876, 1.442695
    %v2878 = vpow.pop %v2877
    %v2879 = vadd.f32 %v2878, 1.0
    %v2880 = vrcp.pop %v2879
    %v2881 = vmul.f32 1.0, %v2880
    %v2882 = vadd.f32 %v2865, %v1866
    %v2884 = vrot.slane %v2882, 4
    %2885 = vrot.lane.b32.xlu0 %v2884, 64
    %v2886 = vpop.permute.xlu0 %2885
    %v2888 = vmul.f32 %v2881, %v2886
    %2890 = vrot.lane.b32.xlu0 %v2888, 64
    %v2891 = vpop.permute.xlu0 %2890
    %v2893 = vadd.f32 %v2869, %v2891
    %v2894 = vtanh.pop %v2893
    %v2895 = vsub.f32 1.0, %v2881
    %2897 = vrot.lane.b32.xlu0 %v2894, 96
    %v2898 = vpop.permute.xlu0 %2897
    %v2900 = vmul.f32 %v2895, %v2898
    %v2901 = vrot.slane %v2794, 4
    %2902 = vrot.lane.b32.xlu0 %v2901, 32
    %v2903 = vpop.permute.xlu0 %2902
    %v2905 = vmul.f32 %v2881, %v2903
    %v2906 = vadd.f32 %v2900, %v2905
    %v2908 = vrot.slane %v2906, 4
    %2909 = vrot.lane.b32.xlu0 %v2908, 96
    %v2910 = vpop.permute.xlu0 %2909
    %v2912 = vsel %vm580, %v2910, %v2794
    %v2913 = vrot.slane %v2865, 6
    %v2915 = vadd.f32 %v2870, %v2913
    %v2916 = vxor.u32 %v2915, 2147483648
    %v2917 = vmul.f32 %v2916, 1.442695
    %v2918 = vpow.pop %v2917
    %v2919 = vadd.f32 %v2918, 1.0
    %v2920 = vrcp.pop %v2919
    %v2921 = vmul.f32 1.0, %v2920
    %v2923 = vrot.slane %v2867, 6
    %v2925 = vadd.f32 %v2871, %v2923
    %v2926 = vxor.u32 %v2925, 2147483648
    %v2927 = vmul.f32 %v2926, 1.442695
    %v2928 = vpow.pop %v2927
    %v2929 = vadd.f32 %v2928, 1.0
    %v2930 = vrcp.pop %v2929
    %v2931 = vmul.f32 1.0, %v2930
    %v2932 = vadd.f32 %v2867, %v1782
    %v2934 = vrot.slane %v2932, 6
    %2935 = vrot.lane.b32.xlu0 %v2934, 64
    %v2936 = vpop.permute.xlu0 %2935
    %v2938 = vmul.f32 %v2921, %v2936
    %2940 = vrot.lane.b32.xlu0 %v2938, 64
    %v2941 = vpop.permute.xlu0 %2940
    %v2943 = vadd.f32 %v2871, %v2941
    %v2944 = vtanh.pop %v2943
    %v2945 = vsub.f32 1.0, %v2931
    %2947 = vrot.lane.b32.xlu0 %v2944, 96
    %v2948 = vpop.permute.xlu0 %2947
    %v2950 = vmul.f32 %v2945, %v2948
    %v2951 = vrot.slane %v2794, 6
    %2952 = vrot.lane.b32.xlu0 %v2951, 96
    %v2953 = vpop.permute.xlu0 %2952
    %v2955 = vmul.f32 %v2931, %v2953
    %v2956 = vadd.f32 %v2950, %v2955
    %v2958 = vrot.slane %v2956, 2
    %2960 = vrot.lane.b32.xlu0 %v2794, 96
    %v2961 = vpop.permute.xlu0 %2960
    %v2963 = vsel %vm524, %v2958, %v2961
    %2965 = vrot.lane.b32.xlu0 %v2963, 32
    %v2966 = vpop.permute.xlu0 %2965
    %v2968 = vsel %vm117, %v2912, %v2966
    %v2970 = vsel %vm202, %v2968, 0
    %2972 = vmatprep.subr.mxu0 %v1762
    %2973 = vmatpush1.msra.mxu0 %v1761
    %2974 = vmatprep.subr.mxu0 %v1764
    %2975 = vmatpush1.msra.mxu0 %v1763
    %2976 = vmatprep.subr.mxu0 %v1766
    %2977 = vmatpush1.msra.mxu0 %v1765
    %2978 = vmatprep.subr.mxu0 %v1768
    %2979 = vmatpush1.msra.mxu0 %v1767
    %2980 = vmatprep.subr.mxu0 %v1770
    %2981 = vmatpush1.msra.mxu0 %v1769
    %2982 = vmatprep.subr.mxu0 %v1772
    %2983 = vmatpush1.msra.mxu0 %v1771
    %2984 = vmatprep.subr.mxu0 %v1774
    %2985 = vmatpush1.msra.mxu0 %v1773
    %2986 = vmatprep.subr.mxu0 %v1776
    %2987 = vmatpush1.msra.mxu0 %v1775
    %2988 = vmatprep.subr.mxu0 0.0
    %2989 = vmatpush1.msra.mxu0 0.0
    %2990 = vmatprep.subr.mxu0 0.0
    %2991 = vmatpush1.msra.mxu0 0.0
    %2992 = vmatprep.subr.mxu0 0.0
    %2993 = vmatpush1.msra.mxu0 0.0
    %2994 = vmatprep.subr.mxu0 0.0
    %2995 = vmatpush1.msra.mxu0 0.0
    %2996 = vmatprep.subr.mxu0 0.0
    %2997 = vmatpush1.msra.mxu0 0.0
    %2998 = vmatprep.subr.mxu0 0.0
    %2999 = vmatpush1.msra.mxu0 0.0
    %3000 = vmatprep.subr.mxu0 0.0
    %3001 = vmatpush1.msra.mxu0 0.0
    %3002 = vmatprep.subr.mxu0 0.0
    %3003 = vmatpush1.msra.mxu0 0.0
    %3004 = vmatprep.subr.mxu0 0.0
    %3005 = vmatpush1.msra.mxu0 0.0
    %3006 = vmatprep.subr.mxu0 0.0
    %3007 = vmatpush1.msra.mxu0 0.0
    %3008 = vmatprep.subr.mxu0 0.0
    %3009 = vmatpush1.msra.mxu0 0.0
    %3010 = vmatprep.subr.mxu0 0.0
    %3011 = vmatpush1.msra.mxu0 0.0
    %3012 = vmatprep.subr.mxu0 0.0
    %3013 = vmatpush1.msra.mxu0 0.0
    %3014 = vmatprep.subr.mxu0 0.0
    %3015 = vmatpush1.msra.mxu0 0.0
    %3016 = vmatprep.subr.mxu0 0.0
    %3017 = vmatpush1.msra.mxu0 0.0
    %3018 = vmatprep.subr.mxu0 0.0
    %3019 = vmatpush1.msra.mxu0 0.0
    %3020 = vmatprep.subr.mxu0 0.0
    %3021 = vmatpush1.msra.mxu0 0.0
    %3022 = vmatprep.subr.mxu0 0.0
    %3023 = vmatpush1.msra.mxu0 0.0
    %3024 = vmatprep.subr.mxu0 0.0
    %3025 = vmatpush1.msra.mxu0 0.0
    %3026 = vmatprep.subr.mxu0 0.0
    %3027 = vmatpush1.msra.mxu0 0.0
    %3028 = vmatprep.subr.mxu0 0.0
    %3029 = vmatpush1.msra.mxu0 0.0
    %3030 = vmatprep.subr.mxu0 0.0
    %3031 = vmatpush1.msra.mxu0 0.0
    %3032 = vmatprep.subr.mxu0 0.0
    %3033 = vmatpush1.msra.mxu0 0.0
    %3034 = vmatprep.subr.mxu0 0.0
    %3035 = vmatpush1.msra.mxu0 0.0
    %3036 = vmatprep.mubr.f32.mxu0 0.0
    %3037 = vmatmul.mubr.f32.gmra.mrb[0].mxu0 %v2970
    %v3038 = vpop.f32.mrb[0].mxu0
    %v3039 = vadd.f32 0.0, %v3038
    %v3040 = vpop.f32.mrb[0].mxu0
    %v3041 = vadd.f32 0.0, %v3040
    %3042 = vdwg.mxu0
    %v3043 = vld [vmem:[#allocation2 + $0x10] sm:$0xc0]
    %v3044 = vld [vmem:[#allocation2] sm:$0x3]
    %v3045 = vld [vmem:[#allocation2 + $0x8] sm:$0x3]
    %v3047 = vrot.slane %v3039, 2
    %v3049 = vadd.f32 %v3043, %v3047
    %v3050 = vxor.u32 %v3049, 2147483648
    %v3051 = vmul.f32 %v3050, 1.442695
    %v3052 = vpow.pop %v3051
    %v3053 = vadd.f32 %v3052, 1.0
    %v3054 = vrcp.pop %v3053
    %v3055 = vmul.f32 1.0, %v3054
    %v3056 = vadd.f32 %v3039, %v1866
    %v3058 = vrot.slane %v3056, 2
    %3059 = vrot.lane.b32.xlu0 %v3058, 64
    %v3060 = vpop.permute.xlu0 %3059
    %v3062 = vmul.f32 %v3055, %v3060
    %3064 = vrot.lane.b32.xlu0 %v3062, 64
    %v3065 = vpop.permute.xlu0 %3064
    %v3067 = vadd.f32 %v3043, %v3065
    %v3068 = vtanh.pop %v3067
    %v3069 = vsub.f32 1.0, %v3055
    %3071 = vrot.lane.b32.xlu0 %v3068, 96
    %v3072 = vpop.permute.xlu0 %3071
    %v3074 = vmul.f32 %v3069, %v3072
    %v3075 = vrot.slane %v2968, 2
    %3076 = vrot.lane.b32.xlu0 %v3075, 32
    %v3077 = vpop.permute.xlu0 %3076
    %v3079 = vmul.f32 %v3055, %v3077
    %v3080 = vadd.f32 %v3074, %v3079
    %v3082 = vrot.slane %v3080, 6
    %3083 = vrot.lane.b32.xlu0 %v3082, 96
    %v3084 = vpop.permute.xlu0 %3083
    %v3086 = vsel %vm389, %v3084, %v2968
    %v3087 = vadd.f32 %v3044, %v3039
    %v3088 = vxor.u32 %v3087, 2147483648
    %v3089 = vmul.f32 %v3088, 1.442695
    %v3090 = vpow.pop %v3089
    %v3091 = vadd.f32 %v3090, 1.0
    %v3092 = vrcp.pop %v3091
    %v3093 = vmul.f32 1.0, %v3092
    %v3094 = vadd.f32 %v3045, %v3041
    %v3095 = vxor.u32 %v3094, 2147483648
    %v3096 = vmul.f32 %v3095, 1.442695
    %v3097 = vpow.pop %v3096
    %v3098 = vadd.f32 %v3097, 1.0
    %v3099 = vrcp.pop %v3098
    %v3100 = vmul.f32 1.0, %v3099
    %v3101 = vadd.f32 %v3041, %v1782
    %3103 = vrot.lane.b32.xlu0 %v3101, 64
    %v3104 = vpop.permute.xlu0 %3103
    %v3106 = vmul.f32 %v3093, %v3104
    %3108 = vrot.lane.b32.xlu0 %v3106, 64
    %v3109 = vpop.permute.xlu0 %3108
    %v3111 = vadd.f32 %v3045, %v3109
    %v3112 = vtanh.pop %v3111
    %v3113 = vsub.f32 1.0, %v3100
    %3115 = vrot.lane.b32.xlu0 %v3112, 96
    %v3116 = vpop.permute.xlu0 %3115
    %v3118 = vmul.f32 %v3113, %v3116
    %3119 = vrot.lane.b32.xlu0 %v2968, 96
    %v3120 = vpop.permute.xlu0 %3119
    %v3122 = vmul.f32 %v3100, %v3120
    %v3123 = vadd.f32 %v3118, %v3122
    %v3124 = vsel %vm341, %v3123, %v3120
    %3126 = vrot.lane.b32.xlu0 %v3124, 32
    %v3127 = vpop.permute.xlu0 %3126
    %v3129 = vsel %vm117, %v3086, %v3127
    %3131 = vrot.lane.b32.xlu0 %v3129, 64
    %v3132 = vpop.permute.xlu0 %3131
    %v3134 = vsel %vm202, %v1641, %v3132
    %v3135 = vld [vmem:[%s10] sm:$0xff]
    %v3136 = vld [vmem:[%s10 + $0x8] sm:$0xff]
    %v3137 = vld [vmem:[%s10 + $0x10] sm:$0xff]
    %v3138 = vld [vmem:[%s10 + $0x18] sm:$0xff]
    %v3139 = vld [vmem:[%s10 + $0x20] sm:$0xff]
    %v3140 = vld [vmem:[%s10 + $0x28] sm:$0xff]
    %v3141 = vld [vmem:[%s10 + $0x30] sm:$0xff]
    %v3142 = vld [vmem:[%s10 + $0x38] sm:$0xff]
    %v3143 = vld [vmem:[%s10 + $0x40] sm:$0xff]
    %v3144 = vld [vmem:[%s10 + $0x48] sm:$0xff]
    %v3145 = vld [vmem:[%s10 + $0x50] sm:$0xff]
    %v3146 = vld [vmem:[%s10 + $0x58] sm:$0xff]
    %v3147 = vld [vmem:[%s10 + $0x60] sm:$0xff]
    %v3148 = vld [vmem:[%s10 + $0x68] sm:$0xff]
    %v3149 = vld [vmem:[%s10 + $0x70] sm:$0xff]
    %v3150 = vld [vmem:[%s10 + $0x78] sm:$0xff]
    %v3151 = vld [vmem:[#allocation10] sm:$0x1]
    %v3153 = vlaneseq
    %v3154 = vshrl.u32 %v3153, 7
    %v3155 = vsub.s32 0, %v3154
    %v3156 = vrot.slane %v3151, %v3155
    %3158 = vmatprep.subr.mxu0 0.0
    %3159 = vmatpush1.msra.mxu0 %v3135
    %3160 = vmatprep.subr.mxu0 0.0
    %3161 = vmatpush1.msra.mxu0 %v3136
    %3162 = vmatprep.subr.mxu0 0.0
    %3163 = vmatpush1.msra.mxu0 %v3137
    %3164 = vmatprep.subr.mxu0 0.0
    %3165 = vmatpush1.msra.mxu0 %v3138
    %3166 = vmatprep.subr.mxu0 0.0
    %3167 = vmatpush1.msra.mxu0 %v3139
    %3168 = vmatprep.subr.mxu0 0.0
    %3169 = vmatpush1.msra.mxu0 %v3140
    %3170 = vmatprep.subr.mxu0 0.0
    %3171 = vmatpush1.msra.mxu0 %v3141
    %3172 = vmatprep.subr.mxu0 0.0
    %3173 = vmatpush1.msra.mxu0 %v3142
    %3174 = vmatprep.subr.mxu0 0.0
    %3175 = vmatpush1.msra.mxu0 %v3143
    %3176 = vmatprep.subr.mxu0 0.0
    %3177 = vmatpush1.msra.mxu0 %v3144
    %3178 = vmatprep.subr.mxu0 0.0
    %3179 = vmatpush1.msra.mxu0 %v3145
    %3180 = vmatprep.subr.mxu0 0.0
    %3181 = vmatpush1.msra.mxu0 %v3146
    %3182 = vmatprep.subr.mxu0 0.0
    %3183 = vmatpush1.msra.mxu0 %v3147
    %3184 = vmatprep.subr.mxu0 0.0
    %3185 = vmatpush1.msra.mxu0 %v3148
    %3186 = vmatprep.subr.mxu0 0.0
    %3187 = vmatpush1.msra.mxu0 %v3149
    %3188 = vmatprep.subr.mxu0 0.0
    %3189 = vmatpush1.msra.mxu0 %v3150
    %3190 = vmatprep.subr.mxu0 0.0
    %3191 = vmatpush1.msra.mxu0 0.0
    %3192 = vmatprep.subr.mxu0 0.0
    %3193 = vmatpush1.msra.mxu0 0.0
    %3194 = vmatprep.subr.mxu0 0.0
    %3195 = vmatpush1.msra.mxu0 0.0
    %3196 = vmatprep.subr.mxu0 0.0
    %3197 = vmatpush1.msra.mxu0 0.0
    %3198 = vmatprep.subr.mxu0 0.0
    %3199 = vmatpush1.msra.mxu0 0.0
    %3200 = vmatprep.subr.mxu0 0.0
    %3201 = vmatpush1.msra.mxu0 0.0
    %3202 = vmatprep.subr.mxu0 0.0
    %3203 = vmatpush1.msra.mxu0 0.0
    %3204 = vmatprep.subr.mxu0 0.0
    %3205 = vmatpush1.msra.mxu0 0.0
    %3206 = vmatprep.subr.mxu0 0.0
    %3207 = vmatpush1.msra.mxu0 0.0
    %3208 = vmatprep.subr.mxu0 0.0
    %3209 = vmatpush1.msra.mxu0 0.0
    %3210 = vmatprep.subr.mxu0 0.0
    %3211 = vmatpush1.msra.mxu0 0.0
    %3212 = vmatprep.subr.mxu0 0.0
    %3213 = vmatpush1.msra.mxu0 0.0
    %3214 = vmatprep.subr.mxu0 0.0
    %3215 = vmatpush1.msra.mxu0 0.0
    %3216 = vmatprep.subr.mxu0 0.0
    %3217 = vmatpush1.msra.mxu0 0.0
    %3218 = vmatprep.subr.mxu0 0.0
    %3219 = vmatpush1.msra.mxu0 0.0
    %3220 = vmatprep.subr.mxu0 0.0
    %3221 = vmatpush1.msra.mxu0 0.0
    %3222 = vmatprep.mubr.f32.mxu0 0.0
    %3223 = vmatmul.mubr.f32.gmra.mrb[0].mxu0 %v3134
    %v3224 = vpop.f32.mrb[0].mxu0
    %v3225 = vadd.f32 %v3156, %v3224
    %v3226 = vpop.f32.mrb[0].mxu0
    %3227 = vdwg.mxu0
    %vm3228 = vcmask 123904
    %3229 = vst.msk [vmem:[#allocation12] sm:$0x3] %vm3228, %v3225
    %3231 = vrot.lane.b32.xlu0 %v3225, 112
    %v3232 = vpop.permute.xlu0 %3231
    %3234 = vst.msk [vmem:[#allocation13] sm:$0x3] %vm3228, %v3232
    // Predicated region
    $region66: #{smiles_encoder_forward.1} parent=1 // pred_check
      _
    $region67: #{smiles_encoder_forward.1} parent=1 // pred_check_branch
      %3236 = sbr.rel (0) target = $region69
    $region68: #{smiles_encoder_forward.1} parent=1 // pred_region
      %s3238 = ssub.s32 32, 32
      %3239 = vsyncadd [#allocation6], %s3238
      %s3241 = sshll.u32 [#allocation12], 4
      %s3242 = int_to_ptr.vmem [resolvable:$true] %s3241
      %3244 = dma.vmem_to_hbm [thread:$0]  %s3242, 32, %s12, [#allocation6]
    $region69: #{smiles_encoder_forward.1} parent=1 // pred_fallthru
      _
    // Predicated region
    $region70: #{smiles_encoder_forward.1} parent=1 // pred_check
      _
    $region71: #{smiles_encoder_forward.1} parent=1 // pred_check_branch
      %3246 = sbr.rel (0) target = $region73
    $region72: #{smiles_encoder_forward.1} parent=1 // pred_region
      %s3248 = ssub.s32 32, 32
      %3249 = vsyncadd [#allocation14], %s3248
      %s3251 = sshll.u32 [#allocation13], 4
      %s3252 = int_to_ptr.vmem [resolvable:$true] %s3251
      %3254 = dma.vmem_to_hbm [thread:$0]  %s3252, 32, %s13, [#allocation14]
    $region73: #{smiles_encoder_forward.1} parent=1 // pred_fallthru
      _
    // Predicated region
    $region74: #{smiles_encoder_forward.1} parent=1 // pred_check
      _
    $region75: #{smiles_encoder_forward.1} parent=1 // pred_check_branch
      %3256 = sbr.rel (0) target = $region77
    $region76: #{smiles_encoder_forward.1} parent=1 // pred_region
      %3257 = dma.done [#allocation6], 32
    $region77: #{smiles_encoder_forward.1} parent=1 // pred_fallthru
      _
    // Predicated region
    $region78: #{smiles_encoder_forward.1} parent=1 // pred_check
      _
    $region79: #{smiles_encoder_forward.1} parent=1 // pred_check_branch
      %3259 = sbr.rel (0) target = $region81
    $region80: #{smiles_encoder_forward.1} parent=1 // pred_region
      %3260 = dma.done [#allocation14], 32
    $region81: #{smiles_encoder_forward.1} parent=1 // pred_fallthru
      _
    %3261 = vsyncpa [#allocation5], 1
    %3262 = vsyncpa [#allocation8], 1
    %3263 = vsyncpa [#allocation11], 1
    %3264 = vsyncpa [#allocation6], 1
    %3265 = vsyncpa [#allocation14], 1

</llo_original>
